<compile_context>
chip_gen: v7x
topology: tpu7x:2x2x1
jax: 0.10.0
libtpu: 0.0.40
codegen_flags: <defaults>
</compile_context>

<pallas_src>
import functools

import jax
import jax.numpy as jnp
from jax.experimental import pallas as pl
from jax.experimental.pallas import tpu as pltpu


def _upsample_kernel(x_ref, w_ref, s_ref, b_ref, o_ref, *, cout, th, width):
    # x_ref: (Cin, th*W)      -- th input rows of one image, NCHW-native
    # w_ref: (4*Cout, Cin)    -- rows r = kj*(2*Cout) + ki*Cout + o
    # s_ref: (2, W, 2W)       -- spread matrices: S[0,w,2w]=1, S[1,w,2w+1]=1
    # b_ref: (4*Cout, 1)      -- bias per row of w_ref
    # o_ref: (Cout, th*4W)    -- th output row-pairs, already 2x2 interleaved
    w1 = width
    w2 = 2 * width
    w4 = 4 * width
    c2 = 2 * cout

    # Main matmul: channels on sublanes, spatial (th*W) on lanes.
    r_all = jnp.dot(w_ref[...], x_ref[...],
                    preferred_element_type=jnp.float32)        # (4*Cout, th*W)
    r_all = r_all + b_ref[...]                                  # bias broadcast

    s_even = s_ref[0]                                           # (W, 2W) kj=0
    s_odd = s_ref[1]                                            # (W, 2W) kj=1

    # Static unrolled loop over the th input rows of this block (2-D ops only).
    # Rows [0:2Cout] of r_all hold kj=0 (ki=0 then ki=1), rows [2Cout:4Cout]
    # hold kj=1, so one even-spread + one odd-spread matmul per input row
    # yields BOTH output rows (2h, 2h+1) of the row-pair at once.
    for dh in range(th):
        blk = r_all[:, dh * w1:(dh + 1) * w1]                   # (4*Cout, W)
        c = (jnp.dot(blk[:c2, :], s_even, preferred_element_type=jnp.float32)
             + jnp.dot(blk[c2:, :], s_odd, preferred_element_type=jnp.float32))
        # c: (2*Cout, 2W), rows = ki*Cout + o, lanes = 2w + kj
        off = dh * w4
        o_ref[:, off:off + w2] = c[:cout, :]                    # output row 2h
        o_ref[:, off + w2:off + w4] = c[cout:, :]               # output row 2h+1


def _pick_rows_per_step(H, W, Cin, Cout, budget_bytes=4 << 20, max_unroll=32):
    """Rows of x handled per grid step: divides H, fits the VMEM block budget."""
    per_row = 4 * W * (Cin + 4 * Cout)  # f32 bytes: one input row + one out row-pair
    cap = max(1, min(H, max_unroll, budget_bytes // max(per_row, 1)))
    fallback = 0
    for t in range(cap, 0, -1):
        if H % t:
            continue
        if fallback == 0:
            fallback = t
        if t == H or (t * W) % 128 == 0:   # prefer lane-aligned block minor dim
            return t
    return fallback if fallback else 1


def upsample_conv_transpose2x2(x, weight, bias, *, block_budget_bytes=4 << 20):
    """ConvTranspose2d(kernel_size=2, stride=2) forward.

    x:      (N, Cin, H, W)  float32 (NCHW)
    weight: (Cin, Cout, 2, 2) float32 (PyTorch ConvTranspose2d layout)
    bias:   (Cout,) float32
    returns (N, Cout, 2H, 2W) float32
    """
    N, Cin, H, W = x.shape
    assert weight.shape[0] == Cin and weight.shape[2:] == (2, 2), weight.shape
    Cout = weight.shape[1]
    W2, W4 = 2 * W, 4 * W

    th = _pick_rows_per_step(H, W, Cin, Cout, block_budget_bytes)

    # Weight -> (4*Cout, Cin) with row index r = kj*(2*Cout) + ki*Cout + o.
    wmat = jnp.transpose(weight, (3, 2, 1, 0)).reshape(4 * Cout, Cin)
    # Bias per row of wmat (row r corresponds to output channel r % Cout).
    bcol = jnp.tile(bias, 4).reshape(4 * Cout, 1)
    # Constant spread matrices for the even/odd lane interleave.
    wi = jnp.arange(W, dtype=jnp.int32)[:, None]
    ci = jnp.arange(W2, dtype=jnp.int32)[None, :]
    spread = jnp.stack(
        [(ci == 2 * wi).astype(jnp.float32),
         (ci == 2 * wi + 1).astype(jnp.float32)], axis=0)       # (2, W, 2W)

    x_flat = x.reshape(N, Cin, H * W)  # free reshape, no data movement

    # VMEM estimate: double-buffered x/out blocks + (conservatively 2x) constants.
    xb = Cin * th * W * 4
    ob = Cout * th * W4 * 4
    cb = (4 * Cout * Cin + 2 * W * W2 + 4 * Cout) * 4
    vmem_limit = int(min(48 << 20, max(32 << 20, 2 * (xb + ob) + 2 * cb + (16 << 20))))

    kernel = functools.partial(_upsample_kernel, cout=Cout, th=th, width=W)

    out_flat = pl.pallas_call(
        kernel,
        out_shape=jax.ShapeDtypeStruct((N, Cout, H * W4), jnp.float32),
        grid=(N, H // th),
        in_specs=[
            pl.BlockSpec((None, Cin, th * W), lambda n, t: (n, 0, t)),
            pl.BlockSpec((4 * Cout, Cin), lambda n, t: (0, 0)),
            pl.BlockSpec((2, W, W2), lambda n, t: (0, 0, 0)),
            pl.BlockSpec((4 * Cout, 1), lambda n, t: (0, 0)),
        ],
        out_specs=pl.BlockSpec((None, Cout, th * W4), lambda n, t: (n, 0, t)),
        compiler_params=pltpu.CompilerParams(
            dimension_semantics=("parallel", "parallel"),
            vmem_limit_bytes=vmem_limit,
        ),
    )(x_flat, wmat, spread, bcol)

    # Free reshape back to NCHW: flat index h*4W + ki*2W + (2w+kj)
    # is exactly (2h+ki)*2W + (2w+kj).
    return out_flat.reshape(N, Cout, 2 * H, 2 * W)


def ref_conv_transpose2x2(x, w, b):
    """Pure-JAX reference with exact PyTorch ConvTranspose2d(k=2, s=2) semantics."""
    N, Cin, H, W = x.shape
    Cout = w.shape[1]
    y = jnp.zeros((N, Cout, 2 * H, 2 * W), jnp.float32)
    for ki in range(2):
        for kj in range(2):
            contrib = jnp.einsum("nchw,co->nohw", x, w[:, :, ki, kj],
                                 precision=jax.lax.Precision.HIGHEST)
            y = y.at[:, :, ki::2, kj::2].set(contrib)
    return y + b[None, :, None, None]


if __name__ == "__main__":
    key = jax.random.PRNGKey(0)
    kx, kw, kb = jax.random.split(key, 3)

    N, Cin, Cout, H, W = 2, 4, 8, 16, 16

    x = jax.random.normal(kx, (N, Cin, H, W), dtype=jnp.float32)
    # Deterministic synthetic parameters (PyTorch shapes: (Cin, Cout, 2, 2), (Cout,))
    weight = jax.random.normal(kw, (Cin, Cout, 2, 2), dtype=jnp.float32) * 0.1
    bias = jax.random.normal(kb, (Cout,), dtype=jnp.float32) * 0.1

    out = upsample_conv_transpose2x2(x, weight, bias)
    out = jax.block_until_ready(out)

    ref = ref_conv_transpose2x2(x, weight, bias)
    assert out.shape == (N, Cout, 2 * H, 2 * W), out.shape
    assert jnp.allclose(out, ref, atol=1e-4, rtol=1e-4), "mismatch vs reference"

    print("KERNEL_OK")
</pallas_src>

<mosaic_0001>
module attributes {stable_mosaic.version = 11 : i64} {
  func.func @_upsample_kernel(%arg0: i32, %arg1: i32, %arg2: memref<1x4x256xf32, #tpu.memory_space<vmem>>, %arg3: memref<32x4xf32, #tpu.memory_space<vmem>>, %arg4: memref<2x16x32xf32, #tpu.memory_space<vmem>>, %arg5: memref<32x1xf32, #tpu.memory_space<vmem>>, %arg6: memref<1x8x1024xf32, #tpu.memory_space<vmem>>) attributes {dimension_semantics = [#tpu.dimension_semantics<parallel>, #tpu.dimension_semantics<parallel>], iteration_bounds = array<i64: 2, 1>, scalar_prefetch = 0 : i64, scratch_operands = 0 : i64, tpu.core_type = #tpu.core_type<tc>, window_params = [{transform_indices = @transform_0, window_bounds = array<i64: 1, 4, 256>}, {pipeline_mode = #tpu.pipeline_mode<synchronous>, transform_indices = @transform_1, window_bounds = array<i64: 32, 4>}, {pipeline_mode = #tpu.pipeline_mode<synchronous>, transform_indices = @transform_2, window_bounds = array<i64: 2, 16, 32>}, {pipeline_mode = #tpu.pipeline_mode<synchronous>, transform_indices = @transform_3, window_bounds = array<i64: 32, 1>}, {transform_indices = @transform_4, window_bounds = array<i64: 1, 8, 1024>}]} {
    %c0 = arith.constant 0 : index
    %c0_0 = arith.constant 0 : index
    %0 = vector.load %arg3[%c0, %c0_0] : memref<32x4xf32, #tpu.memory_space<vmem>>, vector<32x4xf32>
    %c0_1 = arith.constant 0 : index
    %c0_2 = arith.constant 0 : index
    %c0_3 = arith.constant 0 : index
    %1 = vector.load %arg2[%c0_1, %c0_2, %c0_3] : memref<1x4x256xf32, #tpu.memory_space<vmem>>, vector<1x4x256xf32>
    %2 = vector.shape_cast %1 : vector<1x4x256xf32> to vector<4x256xf32>
    %cst = arith.constant dense<0.000000e+00> : vector<32x256xf32>
    %3 = tpu.matmul %0, %2, %cst {dimension_numbers = #tpu.dot_dimension_numbers<[1], [0], [0], [1], [0, 0, 1, 1], [], []>} : vector<32x4xf32>, vector<4x256xf32>, vector<32x256xf32> -> vector<32x256xf32>
    %c0_4 = arith.constant 0 : index
    %c0_5 = arith.constant 0 : index
    %4 = vector.load %arg5[%c0_4, %c0_5] : memref<32x1xf32, #tpu.memory_space<vmem>>, vector<32x1xf32>
    %5 = vector.broadcast %4 : vector<32x1xf32> to vector<32x256xf32>
    %6 = arith.addf %3, %5 : vector<32x256xf32>
    %c0_6 = arith.constant 0 : index
    %c0_7 = arith.constant 0 : index
    %c0_8 = arith.constant 0 : index
    %7 = vector.load %arg4[%c0_6, %c0_7, %c0_8] : memref<2x16x32xf32, #tpu.memory_space<vmem>>, vector<1x16x32xf32>
    %8 = vector.shape_cast %7 : vector<1x16x32xf32> to vector<16x32xf32>
    %c1 = arith.constant 1 : index
    %c0_9 = arith.constant 0 : index
    %c0_10 = arith.constant 0 : index
    %9 = vector.load %arg4[%c1, %c0_9, %c0_10] : memref<2x16x32xf32, #tpu.memory_space<vmem>>, vector<1x16x32xf32>
    %10 = vector.shape_cast %9 : vector<1x16x32xf32> to vector<16x32xf32>
    %11 = vector.extract_strided_slice %6 {offsets = [0, 0], sizes = [32, 16], strides = [1, 1]} : vector<32x256xf32> to vector<32x16xf32>
    %12 = vector.extract_strided_slice %11 {offsets = [0, 0], sizes = [16, 16], strides = [1, 1]} : vector<32x16xf32> to vector<16x16xf32>
    %cst_11 = arith.constant dense<0.000000e+00> : vector<16x32xf32>
    %13 = tpu.matmul %12, %8, %cst_11 {dimension_numbers = #tpu.dot_dimension_numbers<[1], [0], [0], [1], [0, 0, 1, 1], [], []>} : vector<16x16xf32>, vector<16x32xf32>, vector<16x32xf32> -> vector<16x32xf32>
    %14 = vector.extract_strided_slice %11 {offsets = [16, 0], sizes = [16, 16], strides = [1, 1]} : vector<32x16xf32> to vector<16x16xf32>
    %cst_12 = arith.constant dense<0.000000e+00> : vector<16x32xf32>
    %15 = tpu.matmul %14, %10, %cst_12 {dimension_numbers = #tpu.dot_dimension_numbers<[1], [0], [0], [1], [0, 0, 1, 1], [], []>} : vector<16x16xf32>, vector<16x32xf32>, vector<16x32xf32> -> vector<16x32xf32>
    %16 = arith.addf %13, %15 : vector<16x32xf32>
    %17 = vector.extract_strided_slice %16 {offsets = [0, 0], sizes = [8, 32], strides = [1, 1]} : vector<16x32xf32> to vector<8x32xf32>
    %c0_13 = arith.constant 0 : index
    %c0_14 = arith.constant 0 : index
    %c0_15 = arith.constant 0 : index
    %18 = vector.load %arg6[%c0_13, %c0_14, %c0_15] : memref<1x8x1024xf32, #tpu.memory_space<vmem>>, vector<1x8x32xf32>
    %19 = vector.shape_cast %18 : vector<1x8x32xf32> to vector<8x32xf32>
    %20 = vector.shape_cast %17 : vector<8x32xf32> to vector<1x8x32xf32>
    tpu.vector_store %arg6[%c0_13, %c0_14, %c0_15], %20 {strides = array<i32>} : memref<1x8x1024xf32, #tpu.memory_space<vmem>>, vector<1x8x32xf32>,
    %21 = vector.extract_strided_slice %16 {offsets = [8, 0], sizes = [8, 32], strides = [1, 1]} : vector<16x32xf32> to vector<8x32xf32>
    %c0_16 = arith.constant 0 : index
    %c0_17 = arith.constant 0 : index
    %c32 = arith.constant 32 : index
    %22 = vector.load %arg6[%c0_16, %c0_17, %c32] : memref<1x8x1024xf32, #tpu.memory_space<vmem>>, vector<1x8x32xf32>
    %23 = vector.shape_cast %22 : vector<1x8x32xf32> to vector<8x32xf32>
    %24 = vector.shape_cast %21 : vector<8x32xf32> to vector<1x8x32xf32>
    tpu.vector_store %arg6[%c0_16, %c0_17, %c32], %24 {strides = array<i32>} : memref<1x8x1024xf32, #tpu.memory_space<vmem>>, vector<1x8x32xf32>,
    %25 = vector.extract_strided_slice %6 {offsets = [0, 16], sizes = [32, 16], strides = [1, 1]} : vector<32x256xf32> to vector<32x16xf32>
    %26 = vector.extract_strided_slice %25 {offsets = [0, 0], sizes = [16, 16], strides = [1, 1]} : vector<32x16xf32> to vector<16x16xf32>
    %cst_18 = arith.constant dense<0.000000e+00> : vector<16x32xf32>
    %27 = tpu.matmul %26, %8, %cst_18 {dimension_numbers = #tpu.dot_dimension_numbers<[1], [0], [0], [1], [0, 0, 1, 1], [], []>} : vector<16x16xf32>, vector<16x32xf32>, vector<16x32xf32> -> vector<16x32xf32>
    %28 = vector.extract_strided_slice %25 {offsets = [16, 0], sizes = [16, 16], strides = [1, 1]} : vector<32x16xf32> to vector<16x16xf32>
    %cst_19 = arith.constant dense<0.000000e+00> : vector<16x32xf32>
    %29 = tpu.matmul %28, %10, %cst_19 {dimension_numbers = #tpu.dot_dimension_numbers<[1], [0], [0], [1], [0, 0, 1, 1], [], []>} : vector<16x16xf32>, vector<16x32xf32>, vector<16x32xf32> -> vector<16x32xf32>
    %30 = arith.addf %27, %29 : vector<16x32xf32>
    %31 = vector.extract_strided_slice %30 {offsets = [0, 0], sizes = [8, 32], strides = [1, 1]} : vector<16x32xf32> to vector<8x32xf32>
    %c0_20 = arith.constant 0 : index
    %c0_21 = arith.constant 0 : index
    %c64 = arith.constant 64 : index
    %32 = vector.load %arg6[%c0_20, %c0_21, %c64] : memref<1x8x1024xf32, #tpu.memory_space<vmem>>, vector<1x8x32xf32>
    %33 = vector.shape_cast %32 : vector<1x8x32xf32> to vector<8x32xf32>
    %34 = vector.shape_cast %31 : vector<8x32xf32> to vector<1x8x32xf32>
    tpu.vector_store %arg6[%c0_20, %c0_21, %c64], %34 {strides = array<i32>} : memref<1x8x1024xf32, #tpu.memory_space<vmem>>, vector<1x8x32xf32>,
    %35 = vector.extract_strided_slice %30 {offsets = [8, 0], sizes = [8, 32], strides = [1, 1]} : vector<16x32xf32> to vector<8x32xf32>
    %c0_22 = arith.constant 0 : index
    %c0_23 = arith.constant 0 : index
    %c96 = arith.constant 96 : index
    %36 = vector.load %arg6[%c0_22, %c0_23, %c96] : memref<1x8x1024xf32, #tpu.memory_space<vmem>>, vector<1x8x32xf32>
    %37 = vector.shape_cast %36 : vector<1x8x32xf32> to vector<8x32xf32>
    %38 = vector.shape_cast %35 : vector<8x32xf32> to vector<1x8x32xf32>
    tpu.vector_store %arg6[%c0_22, %c0_23, %c96], %38 {strides = array<i32>} : memref<1x8x1024xf32, #tpu.memory_space<vmem>>, vector<1x8x32xf32>,
    %39 = vector.extract_strided_slice %6 {offsets = [0, 32], sizes = [32, 16], strides = [1, 1]} : vector<32x256xf32> to vector<32x16xf32>
    %40 = vector.extract_strided_slice %39 {offsets = [0, 0], sizes = [16, 16], strides = [1, 1]} : vector<32x16xf32> to vector<16x16xf32>
    %cst_24 = arith.constant dense<0.000000e+00> : vector<16x32xf32>
    %41 = tpu.matmul %40, %8, %cst_24 {dimension_numbers = #tpu.dot_dimension_numbers<[1], [0], [0], [1], [0, 0, 1, 1], [], []>} : vector<16x16xf32>, vector<16x32xf32>, vector<16x32xf32> -> vector<16x32xf32>
    %42 = vector.extract_strided_slice %39 {offsets = [16, 0], sizes = [16, 16], strides = [1, 1]} : vector<32x16xf32> to vector<16x16xf32>
    %cst_25 = arith.constant dense<0.000000e+00> : vector<16x32xf32>
    %43 = tpu.matmul %42, %10, %cst_25 {dimension_numbers = #tpu.dot_dimension_numbers<[1], [0], [0], [1], [0, 0, 1, 1], [], []>} : vector<16x16xf32>, vector<16x32xf32>, vector<16x32xf32> -> vector<16x32xf32>
    %44 = arith.addf %41, %43 : vector<16x32xf32>
    %45 = vector.extract_strided_slice %44 {offsets = [0, 0], sizes = [8, 32], strides = [1, 1]} : vector<16x32xf32> to vector<8x32xf32>
    %c0_26 = arith.constant 0 : index
    %c0_27 = arith.constant 0 : index
    %c128 = arith.constant 128 : index
    %46 = vector.load %arg6[%c0_26, %c0_27, %c128] : memref<1x8x1024xf32, #tpu.memory_space<vmem>>, vector<1x8x32xf32>
    %47 = vector.shape_cast %46 : vector<1x8x32xf32> to vector<8x32xf32>
    %48 = vector.shape_cast %45 : vector<8x32xf32> to vector<1x8x32xf32>
    tpu.vector_store %arg6[%c0_26, %c0_27, %c128], %48 {strides = array<i32>} : memref<1x8x1024xf32, #tpu.memory_space<vmem>>, vector<1x8x32xf32>,
    %49 = vector.extract_strided_slice %44 {offsets = [8, 0], sizes = [8, 32], strides = [1, 1]} : vector<16x32xf32> to vector<8x32xf32>
    %c0_28 = arith.constant 0 : index
    %c0_29 = arith.constant 0 : index
    %c160 = arith.constant 160 : index
    %50 = vector.load %arg6[%c0_28, %c0_29, %c160] : memref<1x8x1024xf32, #tpu.memory_space<vmem>>, vector<1x8x32xf32>
    %51 = vector.shape_cast %50 : vector<1x8x32xf32> to vector<8x32xf32>
    %52 = vector.shape_cast %49 : vector<8x32xf32> to vector<1x8x32xf32>
    tpu.vector_store %arg6[%c0_28, %c0_29, %c160], %52 {strides = array<i32>} : memref<1x8x1024xf32, #tpu.memory_space<vmem>>, vector<1x8x32xf32>,
    %53 = vector.extract_strided_slice %6 {offsets = [0, 48], sizes = [32, 16], strides = [1, 1]} : vector<32x256xf32> to vector<32x16xf32>
    %54 = vector.extract_strided_slice %53 {offsets = [0, 0], sizes = [16, 16], strides = [1, 1]} : vector<32x16xf32> to vector<16x16xf32>
    %cst_30 = arith.constant dense<0.000000e+00> : vector<16x32xf32>
    %55 = tpu.matmul %54, %8, %cst_30 {dimension_numbers = #tpu.dot_dimension_numbers<[1], [0], [0], [1], [0, 0, 1, 1], [], []>} : vector<16x16xf32>, vector<16x32xf32>, vector<16x32xf32> -> vector<16x32xf32>
    %56 = vector.extract_strided_slice %53 {offsets = [16, 0], sizes = [16, 16], strides = [1, 1]} : vector<32x16xf32> to vector<16x16xf32>
    %cst_31 = arith.constant dense<0.000000e+00> : vector<16x32xf32>
    %57 = tpu.matmul %56, %10, %cst_31 {dimension_numbers = #tpu.dot_dimension_numbers<[1], [0], [0], [1], [0, 0, 1, 1], [], []>} : vector<16x16xf32>, vector<16x32xf32>, vector<16x32xf32> -> vector<16x32xf32>
    %58 = arith.addf %55, %57 : vector<16x32xf32>
    %59 = vector.extract_strided_slice %58 {offsets = [0, 0], sizes = [8, 32], strides = [1, 1]} : vector<16x32xf32> to vector<8x32xf32>
    %c0_32 = arith.constant 0 : index
    %c0_33 = arith.constant 0 : index
    %c192 = arith.constant 192 : index
    %60 = vector.load %arg6[%c0_32, %c0_33, %c192] : memref<1x8x1024xf32, #tpu.memory_space<vmem>>, vector<1x8x32xf32>
    %61 = vector.shape_cast %60 : vector<1x8x32xf32> to vector<8x32xf32>
    %62 = vector.shape_cast %59 : vector<8x32xf32> to vector<1x8x32xf32>
    tpu.vector_store %arg6[%c0_32, %c0_33, %c192], %62 {strides = array<i32>} : memref<1x8x1024xf32, #tpu.memory_space<vmem>>, vector<1x8x32xf32>,
    %63 = vector.extract_strided_slice %58 {offsets = [8, 0], sizes = [8, 32], strides = [1, 1]} : vector<16x32xf32> to vector<8x32xf32>
    %c0_34 = arith.constant 0 : index
    %c0_35 = arith.constant 0 : index
    %c224 = arith.constant 224 : index
    %64 = vector.load %arg6[%c0_34, %c0_35, %c224] : memref<1x8x1024xf32, #tpu.memory_space<vmem>>, vector<1x8x32xf32>
    %65 = vector.shape_cast %64 : vector<1x8x32xf32> to vector<8x32xf32>
    %66 = vector.shape_cast %63 : vector<8x32xf32> to vector<1x8x32xf32>
    tpu.vector_store %arg6[%c0_34, %c0_35, %c224], %66 {strides = array<i32>} : memref<1x8x1024xf32, #tpu.memory_space<vmem>>, vector<1x8x32xf32>,
    %67 = vector.extract_strided_slice %6 {offsets = [0, 64], sizes = [32, 16], strides = [1, 1]} : vector<32x256xf32> to vector<32x16xf32>
    %68 = vector.extract_strided_slice %67 {offsets = [0, 0], sizes = [16, 16], strides = [1, 1]} : vector<32x16xf32> to vector<16x16xf32>
    %cst_36 = arith.constant dense<0.000000e+00> : vector<16x32xf32>
    %69 = tpu.matmul %68, %8, %cst_36 {dimension_numbers = #tpu.dot_dimension_numbers<[1], [0], [0], [1], [0, 0, 1, 1], [], []>} : vector<16x16xf32>, vector<16x32xf32>, vector<16x32xf32> -> vector<16x32xf32>
    %70 = vector.extract_strided_slice %67 {offsets = [16, 0], sizes = [16, 16], strides = [1, 1]} : vector<32x16xf32> to vector<16x16xf32>
    %cst_37 = arith.constant dense<0.000000e+00> : vector<16x32xf32>
    %71 = tpu.matmul %70, %10, %cst_37 {dimension_numbers = #tpu.dot_dimension_numbers<[1], [0], [0], [1], [0, 0, 1, 1], [], []>} : vector<16x16xf32>, vector<16x32xf32>, vector<16x32xf32> -> vector<16x32xf32>
    %72 = arith.addf %69, %71 : vector<16x32xf32>
    %73 = vector.extract_strided_slice %72 {offsets = [0, 0], sizes = [8, 32], strides = [1, 1]} : vector<16x32xf32> to vector<8x32xf32>
    %c0_38 = arith.constant 0 : index
    %c0_39 = arith.constant 0 : index
    %c256 = arith.constant 256 : index
    %74 = vector.load %arg6[%c0_38, %c0_39, %c256] : memref<1x8x1024xf32, #tpu.memory_space<vmem>>, vector<1x8x32xf32>
    %75 = vector.shape_cast %74 : vector<1x8x32xf32> to vector<8x32xf32>
    %76 = vector.shape_cast %73 : vector<8x32xf32> to vector<1x8x32xf32>
    tpu.vector_store %arg6[%c0_38, %c0_39, %c256], %76 {strides = array<i32>} : memref<1x8x1024xf32, #tpu.memory_space<vmem>>, vector<1x8x32xf32>,
    %77 = vector.extract_strided_slice %72 {offsets = [8, 0], sizes = [8, 32], strides = [1, 1]} : vector<16x32xf32> to vector<8x32xf32>
    %c0_40 = arith.constant 0 : index
    %c0_41 = arith.constant 0 : index
    %c288 = arith.constant 288 : index
    %78 = vector.load %arg6[%c0_40, %c0_41, %c288] : memref<1x8x1024xf32, #tpu.memory_space<vmem>>, vector<1x8x32xf32>
    %79 = vector.shape_cast %78 : vector<1x8x32xf32> to vector<8x32xf32>
    %80 = vector.shape_cast %77 : vector<8x32xf32> to vector<1x8x32xf32>
    tpu.vector_store %arg6[%c0_40, %c0_41, %c288], %80 {strides = array<i32>} : memref<1x8x1024xf32, #tpu.memory_space<vmem>>, vector<1x8x32xf32>,
    %81 = vector.extract_strided_slice %6 {offsets = [0, 80], sizes = [32, 16], strides = [1, 1]} : vector<32x256xf32> to vector<32x16xf32>
    %82 = vector.extract_strided_slice %81 {offsets = [0, 0], sizes = [16, 16], strides = [1, 1]} : vector<32x16xf32> to vector<16x16xf32>
    %cst_42 = arith.constant dense<0.000000e+00> : vector<16x32xf32>
    %83 = tpu.matmul %82, %8, %cst_42 {dimension_numbers = #tpu.dot_dimension_numbers<[1], [0], [0], [1], [0, 0, 1, 1], [], []>} : vector<16x16xf32>, vector<16x32xf32>, vector<16x32xf32> -> vector<16x32xf32>
    %84 = vector.extract_strided_slice %81 {offsets = [16, 0], sizes = [16, 16], strides = [1, 1]} : vector<32x16xf32> to vector<16x16xf32>
    %cst_43 = arith.constant dense<0.000000e+00> : vector<16x32xf32>
    %85 = tpu.matmul %84, %10, %cst_43 {dimension_numbers = #tpu.dot_dimension_numbers<[1], [0], [0], [1], [0, 0, 1, 1], [], []>} : vector<16x16xf32>, vector<16x32xf32>, vector<16x32xf32> -> vector<16x32xf32>
    %86 = arith.addf %83, %85 : vector<16x32xf32>
    %87 = vector.extract_strided_slice %86 {offsets = [0, 0], sizes = [8, 32], strides = [1, 1]} : vector<16x32xf32> to vector<8x32xf32>
    %c0_44 = arith.constant 0 : index
    %c0_45 = arith.constant 0 : index
    %c320 = arith.constant 320 : index
    %88 = vector.load %arg6[%c0_44, %c0_45, %c320] : memref<1x8x1024xf32, #tpu.memory_space<vmem>>, vector<1x8x32xf32>
    %89 = vector.shape_cast %88 : vector<1x8x32xf32> to vector<8x32xf32>
    %90 = vector.shape_cast %87 : vector<8x32xf32> to vector<1x8x32xf32>
    tpu.vector_store %arg6[%c0_44, %c0_45, %c320], %90 {strides = array<i32>} : memref<1x8x1024xf32, #tpu.memory_space<vmem>>, vector<1x8x32xf32>,
    %91 = vector.extract_strided_slice %86 {offsets = [8, 0], sizes = [8, 32], strides = [1, 1]} : vector<16x32xf32> to vector<8x32xf32>
    %c0_46 = arith.constant 0 : index
    %c0_47 = arith.constant 0 : index
    %c352 = arith.constant 352 : index
    %92 = vector.load %arg6[%c0_46, %c0_47, %c352] : memref<1x8x1024xf32, #tpu.memory_space<vmem>>, vector<1x8x32xf32>
    %93 = vector.shape_cast %92 : vector<1x8x32xf32> to vector<8x32xf32>
    %94 = vector.shape_cast %91 : vector<8x32xf32> to vector<1x8x32xf32>
    tpu.vector_store %arg6[%c0_46, %c0_47, %c352], %94 {strides = array<i32>} : memref<1x8x1024xf32, #tpu.memory_space<vmem>>, vector<1x8x32xf32>,
    %95 = vector.extract_strided_slice %6 {offsets = [0, 96], sizes = [32, 16], strides = [1, 1]} : vector<32x256xf32> to vector<32x16xf32>
    %96 = vector.extract_strided_slice %95 {offsets = [0, 0], sizes = [16, 16], strides = [1, 1]} : vector<32x16xf32> to vector<16x16xf32>
    %cst_48 = arith.constant dense<0.000000e+00> : vector<16x32xf32>
    %97 = tpu.matmul %96, %8, %cst_48 {dimension_numbers = #tpu.dot_dimension_numbers<[1], [0], [0], [1], [0, 0, 1, 1], [], []>} : vector<16x16xf32>, vector<16x32xf32>, vector<16x32xf32> -> vector<16x32xf32>
    %98 = vector.extract_strided_slice %95 {offsets = [16, 0], sizes = [16, 16], strides = [1, 1]} : vector<32x16xf32> to vector<16x16xf32>
    %cst_49 = arith.constant dense<0.000000e+00> : vector<16x32xf32>
    %99 = tpu.matmul %98, %10, %cst_49 {dimension_numbers = #tpu.dot_dimension_numbers<[1], [0], [0], [1], [0, 0, 1, 1], [], []>} : vector<16x16xf32>, vector<16x32xf32>, vector<16x32xf32> -> vector<16x32xf32>
    %100 = arith.addf %97, %99 : vector<16x32xf32>
    %101 = vector.extract_strided_slice %100 {offsets = [0, 0], sizes = [8, 32], strides = [1, 1]} : vector<16x32xf32> to vector<8x32xf32>
    %c0_50 = arith.constant 0 : index
    %c0_51 = arith.constant 0 : index
    %c384 = arith.constant 384 : index
    %102 = vector.load %arg6[%c0_50, %c0_51, %c384] : memref<1x8x1024xf32, #tpu.memory_space<vmem>>, vector<1x8x32xf32>
    %103 = vector.shape_cast %102 : vector<1x8x32xf32> to vector<8x32xf32>
    %104 = vector.shape_cast %101 : vector<8x32xf32> to vector<1x8x32xf32>
    tpu.vector_store %arg6[%c0_50, %c0_51, %c384], %104 {strides = array<i32>} : memref<1x8x1024xf32, #tpu.memory_space<vmem>>, vector<1x8x32xf32>,
    %105 = vector.extract_strided_slice %100 {offsets = [8, 0], sizes = [8, 32], strides = [1, 1]} : vector<16x32xf32> to vector<8x32xf32>
    %c0_52 = arith.constant 0 : index
    %c0_53 = arith.constant 0 : index
    %c416 = arith.constant 416 : index
    %106 = vector.load %arg6[%c0_52, %c0_53, %c416] : memref<1x8x1024xf32, #tpu.memory_space<vmem>>, vector<1x8x32xf32>
    %107 = vector.shape_cast %106 : vector<1x8x32xf32> to vector<8x32xf32>
    %108 = vector.shape_cast %105 : vector<8x32xf32> to vector<1x8x32xf32>
    tpu.vector_store %arg6[%c0_52, %c0_53, %c416], %108 {strides = array<i32>} : memref<1x8x1024xf32, #tpu.memory_space<vmem>>, vector<1x8x32xf32>,
    %109 = vector.extract_strided_slice %6 {offsets = [0, 112], sizes = [32, 16], strides = [1, 1]} : vector<32x256xf32> to vector<32x16xf32>
    %110 = vector.extract_strided_slice %109 {offsets = [0, 0], sizes = [16, 16], strides = [1, 1]} : vector<32x16xf32> to vector<16x16xf32>
    %cst_54 = arith.constant dense<0.000000e+00> : vector<16x32xf32>
    %111 = tpu.matmul %110, %8, %cst_54 {dimension_numbers = #tpu.dot_dimension_numbers<[1], [0], [0], [1], [0, 0, 1, 1], [], []>} : vector<16x16xf32>, vector<16x32xf32>, vector<16x32xf32> -> vector<16x32xf32>
    %112 = vector.extract_strided_slice %109 {offsets = [16, 0], sizes = [16, 16], strides = [1, 1]} : vector<32x16xf32> to vector<16x16xf32>
    %cst_55 = arith.constant dense<0.000000e+00> : vector<16x32xf32>
    %113 = tpu.matmul %112, %10, %cst_55 {dimension_numbers = #tpu.dot_dimension_numbers<[1], [0], [0], [1], [0, 0, 1, 1], [], []>} : vector<16x16xf32>, vector<16x32xf32>, vector<16x32xf32> -> vector<16x32xf32>
    %114 = arith.addf %111, %113 : vector<16x32xf32>
    %115 = vector.extract_strided_slice %114 {offsets = [0, 0], sizes = [8, 32], strides = [1, 1]} : vector<16x32xf32> to vector<8x32xf32>
    %c0_56 = arith.constant 0 : index
    %c0_57 = arith.constant 0 : index
    %c448 = arith.constant 448 : index
    %116 = vector.load %arg6[%c0_56, %c0_57, %c448] : memref<1x8x1024xf32, #tpu.memory_space<vmem>>, vector<1x8x32xf32>
    %117 = vector.shape_cast %116 : vector<1x8x32xf32> to vector<8x32xf32>
    %118 = vector.shape_cast %115 : vector<8x32xf32> to vector<1x8x32xf32>
    tpu.vector_store %arg6[%c0_56, %c0_57, %c448], %118 {strides = array<i32>} : memref<1x8x1024xf32, #tpu.memory_space<vmem>>, vector<1x8x32xf32>,
    %119 = vector.extract_strided_slice %114 {offsets = [8, 0], sizes = [8, 32], strides = [1, 1]} : vector<16x32xf32> to vector<8x32xf32>
    %c0_58 = arith.constant 0 : index
    %c0_59 = arith.constant 0 : index
    %c480 = arith.constant 480 : index
    %120 = vector.load %arg6[%c0_58, %c0_59, %c480] : memref<1x8x1024xf32, #tpu.memory_space<vmem>>, vector<1x8x32xf32>
    %121 = vector.shape_cast %120 : vector<1x8x32xf32> to vector<8x32xf32>
    %122 = vector.shape_cast %119 : vector<8x32xf32> to vector<1x8x32xf32>
    tpu.vector_store %arg6[%c0_58, %c0_59, %c480], %122 {strides = array<i32>} : memref<1x8x1024xf32, #tpu.memory_space<vmem>>, vector<1x8x32xf32>,
    %123 = vector.extract_strided_slice %6 {offsets = [0, 128], sizes = [32, 16], strides = [1, 1]} : vector<32x256xf32> to vector<32x16xf32>
    %124 = vector.extract_strided_slice %123 {offsets = [0, 0], sizes = [16, 16], strides = [1, 1]} : vector<32x16xf32> to vector<16x16xf32>
    %cst_60 = arith.constant dense<0.000000e+00> : vector<16x32xf32>
    %125 = tpu.matmul %124, %8, %cst_60 {dimension_numbers = #tpu.dot_dimension_numbers<[1], [0], [0], [1], [0, 0, 1, 1], [], []>} : vector<16x16xf32>, vector<16x32xf32>, vector<16x32xf32> -> vector<16x32xf32>
    %126 = vector.extract_strided_slice %123 {offsets = [16, 0], sizes = [16, 16], strides = [1, 1]} : vector<32x16xf32> to vector<16x16xf32>
    %cst_61 = arith.constant dense<0.000000e+00> : vector<16x32xf32>
    %127 = tpu.matmul %126, %10, %cst_61 {dimension_numbers = #tpu.dot_dimension_numbers<[1], [0], [0], [1], [0, 0, 1, 1], [], []>} : vector<16x16xf32>, vector<16x32xf32>, vector<16x32xf32> -> vector<16x32xf32>
    %128 = arith.addf %125, %127 : vector<16x32xf32>
    %129 = vector.extract_strided_slice %128 {offsets = [0, 0], sizes = [8, 32], strides = [1, 1]} : vector<16x32xf32> to vector<8x32xf32>
    %c0_62 = arith.constant 0 : index
    %c0_63 = arith.constant 0 : index
    %c512 = arith.constant 512 : index
    %130 = vector.load %arg6[%c0_62, %c0_63, %c512] : memref<1x8x1024xf32, #tpu.memory_space<vmem>>, vector<1x8x32xf32>
    %131 = vector.shape_cast %130 : vector<1x8x32xf32> to vector<8x32xf32>
    %132 = vector.shape_cast %129 : vector<8x32xf32> to vector<1x8x32xf32>
    tpu.vector_store %arg6[%c0_62, %c0_63, %c512], %132 {strides = array<i32>} : memref<1x8x1024xf32, #tpu.memory_space<vmem>>, vector<1x8x32xf32>,
    %133 = vector.extract_strided_slice %128 {offsets = [8, 0], sizes = [8, 32], strides = [1, 1]} : vector<16x32xf32> to vector<8x32xf32>
    %c0_64 = arith.constant 0 : index
    %c0_65 = arith.constant 0 : index
    %c544 = arith.constant 544 : index
    %134 = vector.load %arg6[%c0_64, %c0_65, %c544] : memref<1x8x1024xf32, #tpu.memory_space<vmem>>, vector<1x8x32xf32>
    %135 = vector.shape_cast %134 : vector<1x8x32xf32> to vector<8x32xf32>
    %136 = vector.shape_cast %133 : vector<8x32xf32> to vector<1x8x32xf32>
    tpu.vector_store %arg6[%c0_64, %c0_65, %c544], %136 {strides = array<i32>} : memref<1x8x1024xf32, #tpu.memory_space<vmem>>, vector<1x8x32xf32>,
    %137 = vector.extract_strided_slice %6 {offsets = [0, 144], sizes = [32, 16], strides = [1, 1]} : vector<32x256xf32> to vector<32x16xf32>
    %138 = vector.extract_strided_slice %137 {offsets = [0, 0], sizes = [16, 16], strides = [1, 1]} : vector<32x16xf32> to vector<16x16xf32>
    %cst_66 = arith.constant dense<0.000000e+00> : vector<16x32xf32>
    %139 = tpu.matmul %138, %8, %cst_66 {dimension_numbers = #tpu.dot_dimension_numbers<[1], [0], [0], [1], [0, 0, 1, 1], [], []>} : vector<16x16xf32>, vector<16x32xf32>, vector<16x32xf32> -> vector<16x32xf32>
    %140 = vector.extract_strided_slice %137 {offsets = [16, 0], sizes = [16, 16], strides = [1, 1]} : vector<32x16xf32> to vector<16x16xf32>
    %cst_67 = arith.constant dense<0.000000e+00> : vector<16x32xf32>
    %141 = tpu.matmul %140, %10, %cst_67 {dimension_numbers = #tpu.dot_dimension_numbers<[1], [0], [0], [1], [0, 0, 1, 1], [], []>} : vector<16x16xf32>, vector<16x32xf32>, vector<16x32xf32> -> vector<16x32xf32>
    %142 = arith.addf %139, %141 : vector<16x32xf32>
    %143 = vector.extract_strided_slice %142 {offsets = [0, 0], sizes = [8, 32], strides = [1, 1]} : vector<16x32xf32> to vector<8x32xf32>
    %c0_68 = arith.constant 0 : index
    %c0_69 = arith.constant 0 : index
    %c576 = arith.constant 576 : index
    %144 = vector.load %arg6[%c0_68, %c0_69, %c576] : memref<1x8x1024xf32, #tpu.memory_space<vmem>>, vector<1x8x32xf32>
    %145 = vector.shape_cast %144 : vector<1x8x32xf32> to vector<8x32xf32>
    %146 = vector.shape_cast %143 : vector<8x32xf32> to vector<1x8x32xf32>
    tpu.vector_store %arg6[%c0_68, %c0_69, %c576], %146 {strides = array<i32>} : memref<1x8x1024xf32, #tpu.memory_space<vmem>>, vector<1x8x32xf32>,
    %147 = vector.extract_strided_slice %142 {offsets = [8, 0], sizes = [8, 32], strides = [1, 1]} : vector<16x32xf32> to vector<8x32xf32>
    %c0_70 = arith.constant 0 : index
    %c0_71 = arith.constant 0 : index
    %c608 = arith.constant 608 : index
    %148 = vector.load %arg6[%c0_70, %c0_71, %c608] : memref<1x8x1024xf32, #tpu.memory_space<vmem>>, vector<1x8x32xf32>
    %149 = vector.shape_cast %148 : vector<1x8x32xf32> to vector<8x32xf32>
    %150 = vector.shape_cast %147 : vector<8x32xf32> to vector<1x8x32xf32>
    tpu.vector_store %arg6[%c0_70, %c0_71, %c608], %150 {strides = array<i32>} : memref<1x8x1024xf32, #tpu.memory_space<vmem>>, vector<1x8x32xf32>,
    %151 = vector.extract_strided_slice %6 {offsets = [0, 160], sizes = [32, 16], strides = [1, 1]} : vector<32x256xf32> to vector<32x16xf32>
    %152 = vector.extract_strided_slice %151 {offsets = [0, 0], sizes = [16, 16], strides = [1, 1]} : vector<32x16xf32> to vector<16x16xf32>
    %cst_72 = arith.constant dense<0.000000e+00> : vector<16x32xf32>
    %153 = tpu.matmul %152, %8, %cst_72 {dimension_numbers = #tpu.dot_dimension_numbers<[1], [0], [0], [1], [0, 0, 1, 1], [], []>} : vector<16x16xf32>, vector<16x32xf32>, vector<16x32xf32> -> vector<16x32xf32>
    %154 = vector.extract_strided_slice %151 {offsets = [16, 0], sizes = [16, 16], strides = [1, 1]} : vector<32x16xf32> to vector<16x16xf32>
    %cst_73 = arith.constant dense<0.000000e+00> : vector<16x32xf32>
    %155 = tpu.matmul %154, %10, %cst_73 {dimension_numbers = #tpu.dot_dimension_numbers<[1], [0], [0], [1], [0, 0, 1, 1], [], []>} : vector<16x16xf32>, vector<16x32xf32>, vector<16x32xf32> -> vector<16x32xf32>
    %156 = arith.addf %153, %155 : vector<16x32xf32>
    %157 = vector.extract_strided_slice %156 {offsets = [0, 0], sizes = [8, 32], strides = [1, 1]} : vector<16x32xf32> to vector<8x32xf32>
    %c0_74 = arith.constant 0 : index
    %c0_75 = arith.constant 0 : index
    %c640 = arith.constant 640 : index
    %158 = vector.load %arg6[%c0_74, %c0_75, %c640] : memref<1x8x1024xf32, #tpu.memory_space<vmem>>, vector<1x8x32xf32>
    %159 = vector.shape_cast %158 : vector<1x8x32xf32> to vector<8x32xf32>
    %160 = vector.shape_cast %157 : vector<8x32xf32> to vector<1x8x32xf32>
    tpu.vector_store %arg6[%c0_74, %c0_75, %c640], %160 {strides = array<i32>} : memref<1x8x1024xf32, #tpu.memory_space<vmem>>, vector<1x8x32xf32>,
    %161 = vector.extract_strided_slice %156 {offsets = [8, 0], sizes = [8, 32], strides = [1, 1]} : vector<16x32xf32> to vector<8x32xf32>
    %c0_76 = arith.constant 0 : index
    %c0_77 = arith.constant 0 : index
    %c672 = arith.constant 672 : index
    %162 = vector.load %arg6[%c0_76, %c0_77, %c672] : memref<1x8x1024xf32, #tpu.memory_space<vmem>>, vector<1x8x32xf32>
    %163 = vector.shape_cast %162 : vector<1x8x32xf32> to vector<8x32xf32>
    %164 = vector.shape_cast %161 : vector<8x32xf32> to vector<1x8x32xf32>
    tpu.vector_store %arg6[%c0_76, %c0_77, %c672], %164 {strides = array<i32>} : memref<1x8x1024xf32, #tpu.memory_space<vmem>>, vector<1x8x32xf32>,
    %165 = vector.extract_strided_slice %6 {offsets = [0, 176], sizes = [32, 16], strides = [1, 1]} : vector<32x256xf32> to vector<32x16xf32>
    %166 = vector.extract_strided_slice %165 {offsets = [0, 0], sizes = [16, 16], strides = [1, 1]} : vector<32x16xf32> to vector<16x16xf32>
    %cst_78 = arith.constant dense<0.000000e+00> : vector<16x32xf32>
    %167 = tpu.matmul %166, %8, %cst_78 {dimension_numbers = #tpu.dot_dimension_numbers<[1], [0], [0], [1], [0, 0, 1, 1], [], []>} : vector<16x16xf32>, vector<16x32xf32>, vector<16x32xf32> -> vector<16x32xf32>
    %168 = vector.extract_strided_slice %165 {offsets = [16, 0], sizes = [16, 16], strides = [1, 1]} : vector<32x16xf32> to vector<16x16xf32>
    %cst_79 = arith.constant dense<0.000000e+00> : vector<16x32xf32>
    %169 = tpu.matmul %168, %10, %cst_79 {dimension_numbers = #tpu.dot_dimension_numbers<[1], [0], [0], [1], [0, 0, 1, 1], [], []>} : vector<16x16xf32>, vector<16x32xf32>, vector<16x32xf32> -> vector<16x32xf32>
    %170 = arith.addf %167, %169 : vector<16x32xf32>
    %171 = vector.extract_strided_slice %170 {offsets = [0, 0], sizes = [8, 32], strides = [1, 1]} : vector<16x32xf32> to vector<8x32xf32>
    %c0_80 = arith.constant 0 : index
    %c0_81 = arith.constant 0 : index
    %c704 = arith.constant 704 : index
    %172 = vector.load %arg6[%c0_80, %c0_81, %c704] : memref<1x8x1024xf32, #tpu.memory_space<vmem>>, vector<1x8x32xf32>
    %173 = vector.shape_cast %172 : vector<1x8x32xf32> to vector<8x32xf32>
    %174 = vector.shape_cast %171 : vector<8x32xf32> to vector<1x8x32xf32>
    tpu.vector_store %arg6[%c0_80, %c0_81, %c704], %174 {strides = array<i32>} : memref<1x8x1024xf32, #tpu.memory_space<vmem>>, vector<1x8x32xf32>,
    %175 = vector.extract_strided_slice %170 {offsets = [8, 0], sizes = [8, 32], strides = [1, 1]} : vector<16x32xf32> to vector<8x32xf32>
    %c0_82 = arith.constant 0 : index
    %c0_83 = arith.constant 0 : index
    %c736 = arith.constant 736 : index
    %176 = vector.load %arg6[%c0_82, %c0_83, %c736] : memref<1x8x1024xf32, #tpu.memory_space<vmem>>, vector<1x8x32xf32>
    %177 = vector.shape_cast %176 : vector<1x8x32xf32> to vector<8x32xf32>
    %178 = vector.shape_cast %175 : vector<8x32xf32> to vector<1x8x32xf32>
    tpu.vector_store %arg6[%c0_82, %c0_83, %c736], %178 {strides = array<i32>} : memref<1x8x1024xf32, #tpu.memory_space<vmem>>, vector<1x8x32xf32>,
    %179 = vector.extract_strided_slice %6 {offsets = [0, 192], sizes = [32, 16], strides = [1, 1]} : vector<32x256xf32> to vector<32x16xf32>
    %180 = vector.extract_strided_slice %179 {offsets = [0, 0], sizes = [16, 16], strides = [1, 1]} : vector<32x16xf32> to vector<16x16xf32>
    %cst_84 = arith.constant dense<0.000000e+00> : vector<16x32xf32>
    %181 = tpu.matmul %180, %8, %cst_84 {dimension_numbers = #tpu.dot_dimension_numbers<[1], [0], [0], [1], [0, 0, 1, 1], [], []>} : vector<16x16xf32>, vector<16x32xf32>, vector<16x32xf32> -> vector<16x32xf32>
    %182 = vector.extract_strided_slice %179 {offsets = [16, 0], sizes = [16, 16], strides = [1, 1]} : vector<32x16xf32> to vector<16x16xf32>
    %cst_85 = arith.constant dense<0.000000e+00> : vector<16x32xf32>
    %183 = tpu.matmul %182, %10, %cst_85 {dimension_numbers = #tpu.dot_dimension_numbers<[1], [0], [0], [1], [0, 0, 1, 1], [], []>} : vector<16x16xf32>, vector<16x32xf32>, vector<16x32xf32> -> vector<16x32xf32>
    %184 = arith.addf %181, %183 : vector<16x32xf32>
    %185 = vector.extract_strided_slice %184 {offsets = [0, 0], sizes = [8, 32], strides = [1, 1]} : vector<16x32xf32> to vector<8x32xf32>
    %c0_86 = arith.constant 0 : index
    %c0_87 = arith.constant 0 : index
    %c768 = arith.constant 768 : index
    %186 = vector.load %arg6[%c0_86, %c0_87, %c768] : memref<1x8x1024xf32, #tpu.memory_space<vmem>>, vector<1x8x32xf32>
    %187 = vector.shape_cast %186 : vector<1x8x32xf32> to vector<8x32xf32>
    %188 = vector.shape_cast %185 : vector<8x32xf32> to vector<1x8x32xf32>
    tpu.vector_store %arg6[%c0_86, %c0_87, %c768], %188 {strides = array<i32>} : memref<1x8x1024xf32, #tpu.memory_space<vmem>>, vector<1x8x32xf32>,
    %189 = vector.extract_strided_slice %184 {offsets = [8, 0], sizes = [8, 32], strides = [1, 1]} : vector<16x32xf32> to vector<8x32xf32>
    %c0_88 = arith.constant 0 : index
    %c0_89 = arith.constant 0 : index
    %c800 = arith.constant 800 : index
    %190 = vector.load %arg6[%c0_88, %c0_89, %c800] : memref<1x8x1024xf32, #tpu.memory_space<vmem>>, vector<1x8x32xf32>
    %191 = vector.shape_cast %190 : vector<1x8x32xf32> to vector<8x32xf32>
    %192 = vector.shape_cast %189 : vector<8x32xf32> to vector<1x8x32xf32>
    tpu.vector_store %arg6[%c0_88, %c0_89, %c800], %192 {strides = array<i32>} : memref<1x8x1024xf32, #tpu.memory_space<vmem>>, vector<1x8x32xf32>,
    %193 = vector.extract_strided_slice %6 {offsets = [0, 208], sizes = [32, 16], strides = [1, 1]} : vector<32x256xf32> to vector<32x16xf32>
    %194 = vector.extract_strided_slice %193 {offsets = [0, 0], sizes = [16, 16], strides = [1, 1]} : vector<32x16xf32> to vector<16x16xf32>
    %cst_90 = arith.constant dense<0.000000e+00> : vector<16x32xf32>
    %195 = tpu.matmul %194, %8, %cst_90 {dimension_numbers = #tpu.dot_dimension_numbers<[1], [0], [0], [1], [0, 0, 1, 1], [], []>} : vector<16x16xf32>, vector<16x32xf32>, vector<16x32xf32> -> vector<16x32xf32>
    %196 = vector.extract_strided_slice %193 {offsets = [16, 0], sizes = [16, 16], strides = [1, 1]} : vector<32x16xf32> to vector<16x16xf32>
    %cst_91 = arith.constant dense<0.000000e+00> : vector<16x32xf32>
    %197 = tpu.matmul %196, %10, %cst_91 {dimension_numbers = #tpu.dot_dimension_numbers<[1], [0], [0], [1], [0, 0, 1, 1], [], []>} : vector<16x16xf32>, vector<16x32xf32>, vector<16x32xf32> -> vector<16x32xf32>
    %198 = arith.addf %195, %197 : vector<16x32xf32>
    %199 = vector.extract_strided_slice %198 {offsets = [0, 0], sizes = [8, 32], strides = [1, 1]} : vector<16x32xf32> to vector<8x32xf32>
    %c0_92 = arith.constant 0 : index
    %c0_93 = arith.constant 0 : index
    %c832 = arith.constant 832 : index
    %200 = vector.load %arg6[%c0_92, %c0_93, %c832] : memref<1x8x1024xf32, #tpu.memory_space<vmem>>, vector<1x8x32xf32>
    %201 = vector.shape_cast %200 : vector<1x8x32xf32> to vector<8x32xf32>
    %202 = vector.shape_cast %199 : vector<8x32xf32> to vector<1x8x32xf32>
    tpu.vector_store %arg6[%c0_92, %c0_93, %c832], %202 {strides = array<i32>} : memref<1x8x1024xf32, #tpu.memory_space<vmem>>, vector<1x8x32xf32>,
    %203 = vector.extract_strided_slice %198 {offsets = [8, 0], sizes = [8, 32], strides = [1, 1]} : vector<16x32xf32> to vector<8x32xf32>
    %c0_94 = arith.constant 0 : index
    %c0_95 = arith.constant 0 : index
    %c864 = arith.constant 864 : index
    %204 = vector.load %arg6[%c0_94, %c0_95, %c864] : memref<1x8x1024xf32, #tpu.memory_space<vmem>>, vector<1x8x32xf32>
    %205 = vector.shape_cast %204 : vector<1x8x32xf32> to vector<8x32xf32>
    %206 = vector.shape_cast %203 : vector<8x32xf32> to vector<1x8x32xf32>
    tpu.vector_store %arg6[%c0_94, %c0_95, %c864], %206 {strides = array<i32>} : memref<1x8x1024xf32, #tpu.memory_space<vmem>>, vector<1x8x32xf32>,
    %207 = vector.extract_strided_slice %6 {offsets = [0, 224], sizes = [32, 16], strides = [1, 1]} : vector<32x256xf32> to vector<32x16xf32>
    %208 = vector.extract_strided_slice %207 {offsets = [0, 0], sizes = [16, 16], strides = [1, 1]} : vector<32x16xf32> to vector<16x16xf32>
    %cst_96 = arith.constant dense<0.000000e+00> : vector<16x32xf32>
    %209 = tpu.matmul %208, %8, %cst_96 {dimension_numbers = #tpu.dot_dimension_numbers<[1], [0], [0], [1], [0, 0, 1, 1], [], []>} : vector<16x16xf32>, vector<16x32xf32>, vector<16x32xf32> -> vector<16x32xf32>
    %210 = vector.extract_strided_slice %207 {offsets = [16, 0], sizes = [16, 16], strides = [1, 1]} : vector<32x16xf32> to vector<16x16xf32>
    %cst_97 = arith.constant dense<0.000000e+00> : vector<16x32xf32>
    %211 = tpu.matmul %210, %10, %cst_97 {dimension_numbers = #tpu.dot_dimension_numbers<[1], [0], [0], [1], [0, 0, 1, 1], [], []>} : vector<16x16xf32>, vector<16x32xf32>, vector<16x32xf32> -> vector<16x32xf32>
    %212 = arith.addf %209, %211 : vector<16x32xf32>
    %213 = vector.extract_strided_slice %212 {offsets = [0, 0], sizes = [8, 32], strides = [1, 1]} : vector<16x32xf32> to vector<8x32xf32>
    %c0_98 = arith.constant 0 : index
    %c0_99 = arith.constant 0 : index
    %c896 = arith.constant 896 : index
    %214 = vector.load %arg6[%c0_98, %c0_99, %c896] : memref<1x8x1024xf32, #tpu.memory_space<vmem>>, vector<1x8x32xf32>
    %215 = vector.shape_cast %214 : vector<1x8x32xf32> to vector<8x32xf32>
    %216 = vector.shape_cast %213 : vector<8x32xf32> to vector<1x8x32xf32>
    tpu.vector_store %arg6[%c0_98, %c0_99, %c896], %216 {strides = array<i32>} : memref<1x8x1024xf32, #tpu.memory_space<vmem>>, vector<1x8x32xf32>,
    %217 = vector.extract_strided_slice %212 {offsets = [8, 0], sizes = [8, 32], strides = [1, 1]} : vector<16x32xf32> to vector<8x32xf32>
    %c0_100 = arith.constant 0 : index
    %c0_101 = arith.constant 0 : index
    %c928 = arith.constant 928 : index
    %218 = vector.load %arg6[%c0_100, %c0_101, %c928] : memref<1x8x1024xf32, #tpu.memory_space<vmem>>, vector<1x8x32xf32>
    %219 = vector.shape_cast %218 : vector<1x8x32xf32> to vector<8x32xf32>
    %220 = vector.shape_cast %217 : vector<8x32xf32> to vector<1x8x32xf32>
    tpu.vector_store %arg6[%c0_100, %c0_101, %c928], %220 {strides = array<i32>} : memref<1x8x1024xf32, #tpu.memory_space<vmem>>, vector<1x8x32xf32>,
    %221 = vector.extract_strided_slice %6 {offsets = [0, 240], sizes = [32, 16], strides = [1, 1]} : vector<32x256xf32> to vector<32x16xf32>
    %222 = vector.extract_strided_slice %221 {offsets = [0, 0], sizes = [16, 16], strides = [1, 1]} : vector<32x16xf32> to vector<16x16xf32>
    %cst_102 = arith.constant dense<0.000000e+00> : vector<16x32xf32>
    %223 = tpu.matmul %222, %8, %cst_102 {dimension_numbers = #tpu.dot_dimension_numbers<[1], [0], [0], [1], [0, 0, 1, 1], [], []>} : vector<16x16xf32>, vector<16x32xf32>, vector<16x32xf32> -> vector<16x32xf32>
    %224 = vector.extract_strided_slice %221 {offsets = [16, 0], sizes = [16, 16], strides = [1, 1]} : vector<32x16xf32> to vector<16x16xf32>
    %cst_103 = arith.constant dense<0.000000e+00> : vector<16x32xf32>
    %225 = tpu.matmul %224, %10, %cst_103 {dimension_numbers = #tpu.dot_dimension_numbers<[1], [0], [0], [1], [0, 0, 1, 1], [], []>} : vector<16x16xf32>, vector<16x32xf32>, vector<16x32xf32> -> vector<16x32xf32>
    %226 = arith.addf %223, %225 : vector<16x32xf32>
    %227 = vector.extract_strided_slice %226 {offsets = [0, 0], sizes = [8, 32], strides = [1, 1]} : vector<16x32xf32> to vector<8x32xf32>
    %c0_104 = arith.constant 0 : index
    %c0_105 = arith.constant 0 : index
    %c960 = arith.constant 960 : index
    %228 = vector.load %arg6[%c0_104, %c0_105, %c960] : memref<1x8x1024xf32, #tpu.memory_space<vmem>>, vector<1x8x32xf32>
    %229 = vector.shape_cast %228 : vector<1x8x32xf32> to vector<8x32xf32>
    %230 = vector.shape_cast %227 : vector<8x32xf32> to vector<1x8x32xf32>
    tpu.vector_store %arg6[%c0_104, %c0_105, %c960], %230 {strides = array<i32>} : memref<1x8x1024xf32, #tpu.memory_space<vmem>>, vector<1x8x32xf32>,
    %231 = vector.extract_strided_slice %226 {offsets = [8, 0], sizes = [8, 32], strides = [1, 1]} : vector<16x32xf32> to vector<8x32xf32>
    %c0_106 = arith.constant 0 : index
    %c0_107 = arith.constant 0 : index
    %c992 = arith.constant 992 : index
    %232 = vector.load %arg6[%c0_106, %c0_107, %c992] : memref<1x8x1024xf32, #tpu.memory_space<vmem>>, vector<1x8x32xf32>
    %233 = vector.shape_cast %232 : vector<1x8x32xf32> to vector<8x32xf32>
    %234 = vector.shape_cast %231 : vector<8x32xf32> to vector<1x8x32xf32>
    tpu.vector_store %arg6[%c0_106, %c0_107, %c992], %234 {strides = array<i32>} : memref<1x8x1024xf32, #tpu.memory_space<vmem>>, vector<1x8x32xf32>,
    return
  }
  func.func @transform_0(%arg0: i32, %arg1: i32) -> (i32, i32, i32) {
    %c0_i32 = arith.constant 0 : i32
    %c0_i32_0 = arith.constant 0 : i32
    return %arg0, %c0_i32, %arg1 : i32, i32, i32
  }
  func.func @transform_1(%arg0: i32, %arg1: i32) -> (i32, i32) {
    %c0_i32 = arith.constant 0 : i32
    %c0_i32_0 = arith.constant 0 : i32
    %c0_i32_1 = arith.constant 0 : i32
    return %c0_i32, %c0_i32_0 : i32, i32
  }
  func.func @transform_2(%arg0: i32, %arg1: i32) -> (i32, i32, i32) {
    %c0_i32 = arith.constant 0 : i32
    %c0_i32_0 = arith.constant 0 : i32
    %c0_i32_1 = arith.constant 0 : i32
    %c0_i32_2 = arith.constant 0 : i32
    return %c0_i32, %c0_i32_0, %c0_i32_1 : i32, i32, i32
  }
  func.func @transform_3(%arg0: i32, %arg1: i32) -> (i32, i32) {
    %c0_i32 = arith.constant 0 : i32
    %c0_i32_0 = arith.constant 0 : i32
    %c0_i32_1 = arith.constant 0 : i32
    return %c0_i32, %c0_i32_0 : i32, i32
  }
  func.func @transform_4(%arg0: i32, %arg1: i32) -> (i32, i32, i32) {
    %c0_i32 = arith.constant 0 : i32
    %c0_i32_0 = arith.constant 0 : i32
    return %arg0, %c0_i32, %arg1 : i32, i32, i32
  }
}

</mosaic_0001>

<llo_original>
// kernel: tpu_custom_call.1
$region0: #{tpu_custom_call.1}
  #allocation0 [shape = 'u32[]', space=smem, size = 0x4, offset = 0x4, fixed_abs, tag = 'smem constant byte address 0x4 - core index']
  #allocation1 [shape = 'u32[144,128]{1,0:T(1,128)}', space=vmem, size = 0x12000, scoped, tag = 'internal scratch']
  %s0 = inlined_call_operand.vmem [shape: f32[2,4,256], index: 0, kind: input, shape index: {}]
  %s1 = inlined_call_operand.vmem [shape: f32[32,4], index: 1, kind: input, shape index: {}]
  %s2 = inlined_call_operand.vmem [shape: f32[2,16,32], index: 2, kind: input, shape index: {}]
  %s3 = inlined_call_operand.vmem [shape: f32[32,1], index: 3, kind: input, shape index: {}]
  %s4 = inlined_call_operand.hbm [shape: f32[2,8,1024], index: 4, kind: output, shape index: {}]
  %s5 = sld [smem:[#allocation0]]
  $region49: #{tpu_custom_call.1} parent=0
    _
  %s7 = ssub.s32 1, %s5
  %s8 = scalar_select 0, %s7, %s5
  $region1: #{tpu_custom_call.1} parent=0
    #allocation2 [shape = 'u8[65536]{0}', space=vmem, size = 0x10000, scoped, tag = 'output window, operand 0']
    #allocation3 [shape = 's32[2]{0}', space=sflag, size = 0x8, scoped, tag = 'scoped memory for tpu_custom_call.1']
    %9 = vsyncpa [#allocation3], 0
    %s10 = scalar_lea.sflag [#allocation3], 1
    %11 = vsyncpa %s10, 0
    loop: start=0, step=1, limit=4
    $region2: #{tpu_custom_call.1} parent=1 // loop_pre_header
      _
    $region3: #{tpu_custom_call.1} parent=1 // loop_header
      %s13 = sphi 0, %s17
      %p14 = scmp.ge.s32.totalorder %s13, 4
      %s20 = sphi 0, %s32
      %s21 = sphi 0, %s28
      %s22 = sphi 0, %s20
      %s23 = sphi 0, %s21
      %s24 = sphi 0, %s22
      %s25 = sphi 0, %s23
      %s37 = sphi 0, %s39
      %s40 = sphi 0, %s37
      %s41 = sphi 0, %s40
      %s57 = sphi 0, %s41
      %s61 = sphi 0, %s61
      %s63 = sphi 0, %s61
      %s64 = sphi 0, %s63
      %s78 = sphi 0, %s64
      %s82 = sphi 0, %s82
      %s84 = sphi 0, %s82
      %s85 = sphi 0, %s84
      %s99 = sphi 0, %s85
      %s103 = sphi 0, %s103
      %s105 = sphi 0, %s103
      %s106 = sphi 0, %s105
      %s120 = sphi 0, %s106
      %s128 = sphi 0, %s130
      %s131 = sphi 0, %s128
      %s132 = sphi 0, %s131
      %s148 = sphi 0, %s132
    $region4: #{tpu_custom_call.1} parent=1 // loop_header_branch
      %16 = sbr.rel (%p14) target = $region8
    $region5: #{tpu_custom_call.1} parent=1 // loop_body
      %s18 = ssub.s32 %s13, 1
      %s19 = ssub.s32 %s13, 2
      %s26 = sadd.s32 1, %s21
      %p27 = scmp.ge.s32.totalorder %s26, 1
      %s28 = scalar_select %p27, 0, %s26
      %s29 = sadd.s32 1, %s20
      %s30 = scalar_select %p27, %s29, %s20
      %p31 = scmp.ge.s32.totalorder %s30, 2
      %s32 = scalar_select %p31, 0, %s30
      %s33 = ssub.s32 %s20, %s32
      %s34 = ssub.s32 %s21, %s28
      %s35 = sor.u32 %s33, %s34
      %p36 = scmp.eq.s32.totalorder %s35, 0
      %s38 = sadd.s32 %s37, 1
      %s39 = scalar_select %p36, %s37, %s38
      %p42 = pneg %p36
      %p43 = scmp.eq.s32.totalorder %s13, 1
      %p44 = por %p42, %p43
      %p45 = scmp.ne.s32.totalorder %s37, %s40
      %p46 = scmp.eq.s32.totalorder %s13, 0
      %p47 = por %p45, %p46
      %p48 = scmp.ne.s32.totalorder %s37, %s40
      %p49 = scmp.eq.s32.totalorder %s18, 1
      %p50 = por %p48, %p49
      %p51 = scmp.ne.s32.totalorder %s40, %s41
      %p52 = scmp.eq.s32.totalorder %s18, 0
      %p53 = por %p51, %p52
      %p54 = scmp.ne.s32.totalorder %s40, %s41
      %p55 = scmp.eq.s32.totalorder %s19, 1
      %p56 = por %p54, %p55
      %p58 = scmp.ne.s32.totalorder %s41, %s57
      %p59 = scmp.eq.s32.totalorder %s19, 0
      %p60 = por %p58, %p59
      %s62 = sadd.s32 %s61, 1
      %p65 = scmp.eq.s32.totalorder %s13, 1
      %p66 = scmp.ne.s32.totalorder %s61, %s63
      %p67 = scmp.eq.s32.totalorder %s13, 0
      %p68 = por %p66, %p67
      %p69 = scmp.ne.s32.totalorder %s61, %s63
      %p70 = scmp.eq.s32.totalorder %s18, 1
      %p71 = por %p69, %p70
      %p72 = scmp.ne.s32.totalorder %s63, %s64
      %p73 = scmp.eq.s32.totalorder %s18, 0
      %p74 = por %p72, %p73
      %p75 = scmp.ne.s32.totalorder %s63, %s64
      %p76 = scmp.eq.s32.totalorder %s19, 1
      %p77 = por %p75, %p76
      %p79 = scmp.ne.s32.totalorder %s64, %s78
      %p80 = scmp.eq.s32.totalorder %s19, 0
      %p81 = por %p79, %p80
      %s83 = sadd.s32 %s82, 1
      %p86 = scmp.eq.s32.totalorder %s13, 1
      %p87 = scmp.ne.s32.totalorder %s82, %s84
      %p88 = scmp.eq.s32.totalorder %s13, 0
      %p89 = por %p87, %p88
      %p90 = scmp.ne.s32.totalorder %s82, %s84
      %p91 = scmp.eq.s32.totalorder %s18, 1
      %p92 = por %p90, %p91
      %p93 = scmp.ne.s32.totalorder %s84, %s85
      %p94 = scmp.eq.s32.totalorder %s18, 0
      %p95 = por %p93, %p94
      %p96 = scmp.ne.s32.totalorder %s84, %s85
      %p97 = scmp.eq.s32.totalorder %s19, 1
      %p98 = por %p96, %p97
      %p100 = scmp.ne.s32.totalorder %s85, %s99
      %p101 = scmp.eq.s32.totalorder %s19, 0
      %p102 = por %p100, %p101
      %s104 = sadd.s32 %s103, 1
      %p107 = scmp.eq.s32.totalorder %s13, 1
      %p108 = scmp.ne.s32.totalorder %s103, %s105
      %p109 = scmp.eq.s32.totalorder %s13, 0
      %p110 = por %p108, %p109
      %p111 = scmp.ne.s32.totalorder %s103, %s105
      %p112 = scmp.eq.s32.totalorder %s18, 1
      %p113 = por %p111, %p112
      %p114 = scmp.ne.s32.totalorder %s105, %s106
      %p115 = scmp.eq.s32.totalorder %s18, 0
      %p116 = por %p114, %p115
      %p117 = scmp.ne.s32.totalorder %s105, %s106
      %p118 = scmp.eq.s32.totalorder %s19, 1
      %p119 = por %p117, %p118
      %p121 = scmp.ne.s32.totalorder %s106, %s120
      %p122 = scmp.eq.s32.totalorder %s19, 0
      %p123 = por %p121, %p122
      %s124 = ssub.s32 %s20, %s32
      %s125 = ssub.s32 %s21, %s28
      %s126 = sor.u32 %s124, %s125
      %p127 = scmp.eq.s32.totalorder %s126, 0
      %s129 = sadd.s32 %s128, 1
      %s130 = scalar_select %p127, %s128, %s129
      %p133 = pneg %p127
      %p134 = scmp.eq.s32.totalorder %s13, 1
      %p135 = por %p133, %p134
      %p136 = scmp.ne.s32.totalorder %s128, %s131
      %p137 = scmp.eq.s32.totalorder %s13, 0
      %p138 = por %p136, %p137
      %p139 = scmp.ne.s32.totalorder %s128, %s131
      %p140 = scmp.eq.s32.totalorder %s18, 1
      %p141 = por %p139, %p140
      %p142 = scmp.ne.s32.totalorder %s131, %s132
      %p143 = scmp.eq.s32.totalorder %s18, 0
      %p144 = por %p142, %p143
      %p145 = scmp.ne.s32.totalorder %s131, %s132
      %p146 = scmp.eq.s32.totalorder %s19, 1
      %p147 = por %p145, %p146
      %p149 = scmp.ne.s32.totalorder %s132, %s148
      %p150 = scmp.eq.s32.totalorder %s19, 0
      %p151 = por %p149, %p150
      %p152 = scmp.le.s32.totalorder 1, %s13
      %p153 = scmp.lt.s32.totalorder %s13, 3
      %p154 = pnand %p152, %p153
      %p155 = pneg %p154
      // Predicated region
      $region9: #{tpu_custom_call.1} parent=5 // pred_check
        _
      $region10: #{tpu_custom_call.1} parent=5 // pred_check_branch
        %157 = sbr.rel (%p154) target = $region12
      $region11: #{tpu_custom_call.1} parent=5 // pred_region
        %s158 = ssub.s32 %s13, 1
        // Predicated region
        $region13: #{tpu_custom_call.1} parent=11 // pred_check
          %p159 = pneg %p74
        $region14: #{tpu_custom_call.1} parent=11 // pred_check_branch
          %161 = sbr.rel (%p159) target = $region16
        $region15: #{tpu_custom_call.1} parent=11 // pred_region
          _
        $region16: #{tpu_custom_call.1} parent=11 // pred_fallthru
          _
        // Predicated region
        $region17: #{tpu_custom_call.1} parent=11 // pred_check
          %p162 = pneg %p95
        $region18: #{tpu_custom_call.1} parent=11 // pred_check_branch
          %164 = sbr.rel (%p162) target = $region20
        $region19: #{tpu_custom_call.1} parent=11 // pred_region
          _
        $region20: #{tpu_custom_call.1} parent=11 // pred_fallthru
          _
        // Predicated region
        $region21: #{tpu_custom_call.1} parent=11 // pred_check
          %p165 = pneg %p116
        $region22: #{tpu_custom_call.1} parent=11 // pred_check_branch
          %167 = sbr.rel (%p165) target = $region24
        $region23: #{tpu_custom_call.1} parent=11 // pred_region
          _
        $region24: #{tpu_custom_call.1} parent=11 // pred_fallthru
          _
      $region12: #{tpu_custom_call.1} parent=5 // pred_fallthru
        _
      %p168 = scmp.lt.s32.totalorder %s13, 2
      // Predicated region
      $region25: #{tpu_custom_call.1} parent=5 // pred_check
        %p169 = pneg %p168
      $region26: #{tpu_custom_call.1} parent=5 // pred_check_branch
        %171 = sbr.rel (%p169) target = $region28
      $region27: #{tpu_custom_call.1} parent=5 // pred_region
        // Predicated region
        $region29: #{tpu_custom_call.1} parent=27 // pred_check
          %p172 = pneg %p47
        $region30: #{tpu_custom_call.1} parent=27 // pred_check_branch
          %174 = sbr.rel (%p172) target = $region32
        $region31: #{tpu_custom_call.1} parent=27 // pred_region
          %s175 = smul.u32 2, %s21
          %p176 = scmp.lt.s32.totalorder %s20, 1
          %s177 = scalar_select %p176, %s20, 1
          %p178 = scmp.lt.s32.totalorder %s175, 1
          %s179 = scalar_select %p178, %s175, 1
          %s180 = smul.addr %s177, 2
          %s181 = sadd.s32 %s179, %s180
          %s182 = smul.addr %s181, 4
          %s183 = scalar_lea.vmem %s0, %s182
          %s184 = smul.u32 2, %s21
        $region32: #{tpu_custom_call.1} parent=27 // pred_fallthru
          _
      $region28: #{tpu_custom_call.1} parent=5 // pred_fallthru
        _
      %p185 = scmp.le.s32.totalorder 1, %s13
      %p186 = scmp.lt.s32.totalorder %s13, 3
      %p187 = pnand %p185, %p186
      %p188 = pneg %p187
      // Predicated region
      $region33: #{tpu_custom_call.1} parent=5 // pred_check
        _
      $region34: #{tpu_custom_call.1} parent=5 // pred_check_branch
        %190 = sbr.rel (%p187) target = $region36
      $region35: #{tpu_custom_call.1} parent=5 // pred_region
        %s191 = ssub.s32 %s13, 1
        %s192 = smul.u32 2, %s23
        %p193 = scmp.lt.s32.totalorder %s22, 1
        %s194 = scalar_select %p193, %s22, 1
        %p195 = scmp.lt.s32.totalorder %s192, 1
        %s196 = scalar_select %p195, %s192, 1
        %s197 = smul.addr %s194, 2
        %s198 = sadd.s32 %s196, %s197
        %s199 = smul.addr %s198, 4
        %s200 = scalar_lea.vmem %s0, %s199
        %p201 = pneg %p53
        %p202 = pneg %p50
        %p203 = pneg %p74
        %p204 = pneg %p71
        %p205 = pneg %p95
        %p206 = pneg %p92
        %p207 = pneg %p116
        %p208 = pneg %p113
        %p209 = pneg %p144
        %p210 = pneg %p141
        %s211 = sand.u32 %s131, 1
        %s212 = scalar_lea.sflag [#allocation3], %s211
        %s213 = sand.u32 %s131, 1
        %s214 = smul.addr %s213, 64
        %s215 = scalar_lea.vmem [#allocation2], %s214
        %s216 = smul.u32 2, %s23
        %p217 = scmp.lt.s32.totalorder %s22, 1
        %s218 = scalar_select %p217, %s22, 1
        %p219 = scmp.lt.s32.totalorder %s216, 1
        %s220 = scalar_select %p219, %s216, 1
        %s221 = smul.addr %s218, 2
        %s222 = sadd.s32 %s220, %s221
        %s223 = smul.addr %s222, 4
        %s224 = scalar_lea.vmem %s0, %s223
        %s225 = smul.u32 2, %s23
        %s226 = smul.u32 8, %s23
        %v227 = vld [vmem:[%s1] sm:$0xff]
        %v228 = vld [vmem:[%s1 + $0x8] sm:$0xff]
        %v229 = vld [vmem:[%s1 + $0x10] sm:$0xff]
        %v230 = vld [vmem:[%s1 + $0x18] sm:$0xff]
        %v231 = vld [vmem:[%s224] sm:$0xff]
        %v232 = vld [vmem:[%s3] sm:$0xff]
        %v233 = vld [vmem:[%s3 + $0x8] sm:$0xff]
        %v234 = vld [vmem:[%s3 + $0x10] sm:$0xff]
        %v235 = vld [vmem:[%s3 + $0x18] sm:$0xff]
        %237 = vset.pattern.permute.xlu0 0
        %238 = vperm.xlu0 %237, %v232
        %v239 = vpop.permute.xlu0 %238
        %242 = vset.pattern.permute.xlu0 0
        %243 = vperm.xlu0 %242, %v233
        %v244 = vpop.permute.xlu0 %243
        %247 = vset.pattern.permute.xlu0 0
        %248 = vperm.xlu0 %247, %v234
        %v249 = vpop.permute.xlu0 %248
        %252 = vset.pattern.permute.xlu0 0
        %253 = vperm.xlu0 %252, %v235
        %v254 = vpop.permute.xlu0 %253
        %v257 = vcombine.high %v231, %v231
        %vm258 = vcmask 31744
        %v260 = vsel %vm258, %v227, 0
        %v263 = vsel %vm258, %v228, 0
        %v266 = vsel %vm258, %v229, 0
        %v269 = vsel %vm258, %v230, 0
        %vm271 = vcmask 1043456
        %v272 = vsel %vm271, %v231, 0
        %v274 = vsel %vm271, %v257, 0
        %276 = vmatprep.subr.mxu0 %v274
        %277 = vmatpush1.msra.mxu0 %v272
        %278 = vmatprep.subr.mxu0 0.0
        %279 = vmatpush1.msra.mxu0 0.0
        %280 = vmatprep.subr.mxu0 0.0
        %281 = vmatpush1.msra.mxu0 0.0
        %282 = vmatprep.subr.mxu0 0.0
        %283 = vmatpush1.msra.mxu0 0.0
        %284 = vmatprep.subr.mxu0 0.0
        %285 = vmatpush1.msra.mxu0 0.0
        %286 = vmatprep.subr.mxu0 0.0
        %287 = vmatpush1.msra.mxu0 0.0
        %288 = vmatprep.subr.mxu0 0.0
        %289 = vmatpush1.msra.mxu0 0.0
        %290 = vmatprep.subr.mxu0 0.0
        %291 = vmatpush1.msra.mxu0 0.0
        %292 = vmatprep.subr.mxu0 0.0
        %293 = vmatpush1.msra.mxu0 0.0
        %294 = vmatprep.subr.mxu0 0.0
        %295 = vmatpush1.msra.mxu0 0.0
        %296 = vmatprep.subr.mxu0 0.0
        %297 = vmatpush1.msra.mxu0 0.0
        %298 = vmatprep.subr.mxu0 0.0
        %299 = vmatpush1.msra.mxu0 0.0
        %300 = vmatprep.subr.mxu0 0.0
        %301 = vmatpush1.msra.mxu0 0.0
        %302 = vmatprep.subr.mxu0 0.0
        %303 = vmatpush1.msra.mxu0 0.0
        %304 = vmatprep.subr.mxu0 0.0
        %305 = vmatpush1.msra.mxu0 0.0
        %306 = vmatprep.subr.mxu0 0.0
        %307 = vmatpush1.msra.mxu0 0.0
        %308 = vmatprep.subr.mxu0 0.0
        %309 = vmatpush1.msra.mxu0 0.0
        %310 = vmatprep.subr.mxu0 0.0
        %311 = vmatpush1.msra.mxu0 0.0
        %312 = vmatprep.subr.mxu0 0.0
        %313 = vmatpush1.msra.mxu0 0.0
        %314 = vmatprep.subr.mxu0 0.0
        %315 = vmatpush1.msra.mxu0 0.0
        %316 = vmatprep.subr.mxu0 0.0
        %317 = vmatpush1.msra.mxu0 0.0
        %318 = vmatprep.subr.mxu0 0.0
        %319 = vmatpush1.msra.mxu0 0.0
        %320 = vmatprep.subr.mxu0 0.0
        %321 = vmatpush1.msra.mxu0 0.0
        %322 = vmatprep.subr.mxu0 0.0
        %323 = vmatpush1.msra.mxu0 0.0
        %324 = vmatprep.subr.mxu0 0.0
        %325 = vmatpush1.msra.mxu0 0.0
        %326 = vmatprep.subr.mxu0 0.0
        %327 = vmatpush1.msra.mxu0 0.0
        %328 = vmatprep.subr.mxu0 0.0
        %329 = vmatpush1.msra.mxu0 0.0
        %330 = vmatprep.subr.mxu0 0.0
        %331 = vmatpush1.msra.mxu0 0.0
        %332 = vmatprep.subr.mxu0 0.0
        %333 = vmatpush1.msra.mxu0 0.0
        %334 = vmatprep.subr.mxu0 0.0
        %335 = vmatpush1.msra.mxu0 0.0
        %336 = vmatprep.subr.mxu0 0.0
        %337 = vmatpush1.msra.mxu0 0.0
        %338 = vmatprep.subr.mxu0 0.0
        %339 = vmatpush1.msra.mxu0 0.0
        %340 = vmatprep.mubr.f32.mxu0 0.0
        %341 = vmatmul.mubr.f32.gmra.mrb[0].mxu0 %v260
        %v342 = vpop.f32.mrb[0].mxu0
        %v343 = vadd.f32 %v239, %v342
        %v344 = vpop.f32.mrb[0].mxu0
        %v345 = vadd.f32 %v239, %v344
        %346 = vmatprep.mubr.f32.mxu0 0.0
        %347 = vmatmul.mubr.f32.gmra.mrb[0].mxu0 %v263
        %v348 = vpop.f32.mrb[0].mxu0
        %v349 = vadd.f32 %v244, %v348
        %v350 = vpop.f32.mrb[0].mxu0
        %v351 = vadd.f32 %v244, %v350
        %352 = vmatprep.mubr.f32.mxu0 0.0
        %353 = vmatmul.mubr.f32.gmra.mrb[0].mxu0 %v266
        %v354 = vpop.f32.mrb[0].mxu0
        %v355 = vadd.f32 %v249, %v354
        %v356 = vpop.f32.mrb[0].mxu0
        %v357 = vadd.f32 %v249, %v356
        %358 = vmatprep.mubr.f32.mxu0 0.0
        %359 = vmatmul.mubr.f32.gmra.mrb[0].mxu0 %v269
        %v360 = vpop.f32.mrb[0].mxu0
        %v361 = vadd.f32 %v254, %v360
        %v362 = vpop.f32.mrb[0].mxu0
        %v363 = vadd.f32 %v254, %v362
        %364 = vdwg.mxu0
        %v365 = vld [vmem:[%s2] sm:$0xff]
        %v366 = vld [vmem:[%s2 + $0x8] sm:$0xff]
        %s367 = scalar_lea.vmem %s2, 16
        %v368 = vld [vmem:[%s367] sm:$0xff]
        %v369 = vld [vmem:[%s367 + $0x8] sm:$0xff]
        %vm370 = vcmask 130048
        %v372 = vsel %vm370, %v355, 0
        %v375 = vsel %vm370, %v361, 0
        %377 = vmatprep.subr.mxu0 0.0
        %378 = vmatpush1.msra.mxu0 %v368
        %379 = vmatprep.subr.mxu0 0.0
        %380 = vmatpush1.msra.mxu0 %v369
        %381 = vmatprep.subr.mxu0 0.0
        %382 = vmatpush1.msra.mxu0 0.0
        %383 = vmatprep.subr.mxu0 0.0
        %384 = vmatpush1.msra.mxu0 0.0
        %385 = vmatprep.subr.mxu0 0.0
        %386 = vmatpush1.msra.mxu0 0.0
        %387 = vmatprep.subr.mxu0 0.0
        %388 = vmatpush1.msra.mxu0 0.0
        %389 = vmatprep.subr.mxu0 0.0
        %390 = vmatpush1.msra.mxu0 0.0
        %391 = vmatprep.subr.mxu0 0.0
        %392 = vmatpush1.msra.mxu0 0.0
        %393 = vmatprep.subr.mxu0 0.0
        %394 = vmatpush1.msra.mxu0 0.0
        %395 = vmatprep.subr.mxu0 0.0
        %396 = vmatpush1.msra.mxu0 0.0
        %397 = vmatprep.subr.mxu0 0.0
        %398 = vmatpush1.msra.mxu0 0.0
        %399 = vmatprep.subr.mxu0 0.0
        %400 = vmatpush1.msra.mxu0 0.0
        %401 = vmatprep.subr.mxu0 0.0
        %402 = vmatpush1.msra.mxu0 0.0
        %403 = vmatprep.subr.mxu0 0.0
        %404 = vmatpush1.msra.mxu0 0.0
        %405 = vmatprep.subr.mxu0 0.0
        %406 = vmatpush1.msra.mxu0 0.0
        %407 = vmatprep.subr.mxu0 0.0
        %408 = vmatpush1.msra.mxu0 0.0
        %409 = vmatprep.subr.mxu0 0.0
        %410 = vmatpush1.msra.mxu0 0.0
        %411 = vmatprep.subr.mxu0 0.0
        %412 = vmatpush1.msra.mxu0 0.0
        %413 = vmatprep.subr.mxu0 0.0
        %414 = vmatpush1.msra.mxu0 0.0
        %415 = vmatprep.subr.mxu0 0.0
        %416 = vmatpush1.msra.mxu0 0.0
        %417 = vmatprep.subr.mxu0 0.0
        %418 = vmatpush1.msra.mxu0 0.0
        %419 = vmatprep.subr.mxu0 0.0
        %420 = vmatpush1.msra.mxu0 0.0
        %421 = vmatprep.subr.mxu0 0.0
        %422 = vmatpush1.msra.mxu0 0.0
        %423 = vmatprep.subr.mxu0 0.0
        %424 = vmatpush1.msra.mxu0 0.0
        %425 = vmatprep.subr.mxu0 0.0
        %426 = vmatpush1.msra.mxu0 0.0
        %427 = vmatprep.subr.mxu0 0.0
        %428 = vmatpush1.msra.mxu0 0.0
        %429 = vmatprep.subr.mxu0 0.0
        %430 = vmatpush1.msra.mxu0 0.0
        %431 = vmatprep.subr.mxu0 0.0
        %432 = vmatpush1.msra.mxu0 0.0
        %433 = vmatprep.subr.mxu0 0.0
        %434 = vmatpush1.msra.mxu0 0.0
        %435 = vmatprep.subr.mxu0 0.0
        %436 = vmatpush1.msra.mxu0 0.0
        %437 = vmatprep.subr.mxu0 0.0
        %438 = vmatpush1.msra.mxu0 0.0
        %439 = vmatprep.subr.mxu0 0.0
        %440 = vmatpush1.msra.mxu0 0.0
        %441 = vmatprep.mubr.f32.mxu0 0.0
        %442 = vmatmul.mubr.f32.gmra.mrb[0].mxu0 %v372
        %v443 = vpop.f32.mrb[0].mxu0
        %v444 = vadd.f32 0.0, %v443
        %v445 = vpop.f32.mrb[0].mxu0
        %446 = vmatprep.mubr.f32.mxu0 0.0
        %447 = vmatmul.mubr.f32.gmra.mrb[0].mxu0 %v375
        %v448 = vpop.f32.mrb[0].mxu0
        %v449 = vadd.f32 0.0, %v448
        %v450 = vpop.f32.mrb[0].mxu0
        %451 = vdwg.mxu0
        %v453 = vsel %vm370, %v343, 0
        %v456 = vsel %vm370, %v349, 0
        %458 = vmatprep.subr.mxu0 0.0
        %459 = vmatpush1.msra.mxu0 %v365
        %460 = vmatprep.subr.mxu0 0.0
        %461 = vmatpush1.msra.mxu0 %v366
        %462 = vmatprep.subr.mxu0 0.0
        %463 = vmatpush1.msra.mxu0 0.0
        %464 = vmatprep.subr.mxu0 0.0
        %465 = vmatpush1.msra.mxu0 0.0
        %466 = vmatprep.subr.mxu0 0.0
        %467 = vmatpush1.msra.mxu0 0.0
        %468 = vmatprep.subr.mxu0 0.0
        %469 = vmatpush1.msra.mxu0 0.0
        %470 = vmatprep.subr.mxu0 0.0
        %471 = vmatpush1.msra.mxu0 0.0
        %472 = vmatprep.subr.mxu0 0.0
        %473 = vmatpush1.msra.mxu0 0.0
        %474 = vmatprep.subr.mxu0 0.0
        %475 = vmatpush1.msra.mxu0 0.0
        %476 = vmatprep.subr.mxu0 0.0
        %477 = vmatpush1.msra.mxu0 0.0
        %478 = vmatprep.subr.mxu0 0.0
        %479 = vmatpush1.msra.mxu0 0.0
        %480 = vmatprep.subr.mxu0 0.0
        %481 = vmatpush1.msra.mxu0 0.0
        %482 = vmatprep.subr.mxu0 0.0
        %483 = vmatpush1.msra.mxu0 0.0
        %484 = vmatprep.subr.mxu0 0.0
        %485 = vmatpush1.msra.mxu0 0.0
        %486 = vmatprep.subr.mxu0 0.0
        %487 = vmatpush1.msra.mxu0 0.0
        %488 = vmatprep.subr.mxu0 0.0
        %489 = vmatpush1.msra.mxu0 0.0
        %490 = vmatprep.subr.mxu0 0.0
        %491 = vmatpush1.msra.mxu0 0.0
        %492 = vmatprep.subr.mxu0 0.0
        %493 = vmatpush1.msra.mxu0 0.0
        %494 = vmatprep.subr.mxu0 0.0
        %495 = vmatpush1.msra.mxu0 0.0
        %496 = vmatprep.subr.mxu0 0.0
        %497 = vmatpush1.msra.mxu0 0.0
        %498 = vmatprep.subr.mxu0 0.0
        %499 = vmatpush1.msra.mxu0 0.0
        %500 = vmatprep.subr.mxu0 0.0
        %501 = vmatpush1.msra.mxu0 0.0
        %502 = vmatprep.subr.mxu0 0.0
        %503 = vmatpush1.msra.mxu0 0.0
        %504 = vmatprep.subr.mxu0 0.0
        %505 = vmatpush1.msra.mxu0 0.0
        %506 = vmatprep.subr.mxu0 0.0
        %507 = vmatpush1.msra.mxu0 0.0
        %508 = vmatprep.subr.mxu0 0.0
        %509 = vmatpush1.msra.mxu0 0.0
        %510 = vmatprep.subr.mxu0 0.0
        %511 = vmatpush1.msra.mxu0 0.0
        %512 = vmatprep.subr.mxu0 0.0
        %513 = vmatpush1.msra.mxu0 0.0
        %514 = vmatprep.subr.mxu0 0.0
        %515 = vmatpush1.msra.mxu0 0.0
        %516 = vmatprep.subr.mxu0 0.0
        %517 = vmatpush1.msra.mxu0 0.0
        %518 = vmatprep.subr.mxu0 0.0
        %519 = vmatpush1.msra.mxu0 0.0
        %520 = vmatprep.subr.mxu0 0.0
        %521 = vmatpush1.msra.mxu0 0.0
        %522 = vmatprep.mubr.f32.mxu0 0.0
        %523 = vmatmul.mubr.f32.gmra.mrb[0].mxu0 %v453
        %v524 = vpop.f32.mrb[0].mxu0
        %v525 = vadd.f32 %v444, %v524
        %v526 = vpop.f32.mrb[0].mxu0
        %527 = vmatprep.mubr.f32.mxu0 0.0
        %528 = vmatmul.mubr.f32.gmra.mrb[0].mxu0 %v456
        %v529 = vpop.f32.mrb[0].mxu0
        %v530 = vadd.f32 %v449, %v529
        %v531 = vpop.f32.mrb[0].mxu0
        %532 = vdwg.mxu0
        %vm533 = vcmask 261120
        %534 = vst.msk [vmem:[%s215] sm:$0xff] %vm533, %v525
        %536 = vrot.lane.b32.xlu0 %v530, 32
        %v537 = vpop.permute.xlu0 %536
        %vm539 = vcmask 523520
        %540 = vst.msk [vmem:[%s215] sm:$0xff] %vm539, %v537
        %541 = vrot.lane.b32.xlu0 %v355, 112
        %v542 = vpop.permute.xlu0 %541
        %543 = vrot.lane.b32.xlu0 %v361, 112
        %v544 = vpop.permute.xlu0 %543
        %v545 = vsel %vm370, %v542, 0
        %v547 = vsel %vm370, %v544, 0
        %549 = vmatprep.subr.mxu0 0.0
        %550 = vmatpush1.msra.mxu0 %v368
        %551 = vmatprep.subr.mxu0 0.0
        %552 = vmatpush1.msra.mxu0 %v369
        %553 = vmatprep.subr.mxu0 0.0
        %554 = vmatpush1.msra.mxu0 0.0
        %555 = vmatprep.subr.mxu0 0.0
        %556 = vmatpush1.msra.mxu0 0.0
        %557 = vmatprep.subr.mxu0 0.0
        %558 = vmatpush1.msra.mxu0 0.0
        %559 = vmatprep.subr.mxu0 0.0
        %560 = vmatpush1.msra.mxu0 0.0
        %561 = vmatprep.subr.mxu0 0.0
        %562 = vmatpush1.msra.mxu0 0.0
        %563 = vmatprep.subr.mxu0 0.0
        %564 = vmatpush1.msra.mxu0 0.0
        %565 = vmatprep.subr.mxu0 0.0
        %566 = vmatpush1.msra.mxu0 0.0
        %567 = vmatprep.subr.mxu0 0.0
        %568 = vmatpush1.msra.mxu0 0.0
        %569 = vmatprep.subr.mxu0 0.0
        %570 = vmatpush1.msra.mxu0 0.0
        %571 = vmatprep.subr.mxu0 0.0
        %572 = vmatpush1.msra.mxu0 0.0
        %573 = vmatprep.subr.mxu0 0.0
        %574 = vmatpush1.msra.mxu0 0.0
        %575 = vmatprep.subr.mxu0 0.0
        %576 = vmatpush1.msra.mxu0 0.0
        %577 = vmatprep.subr.mxu0 0.0
        %578 = vmatpush1.msra.mxu0 0.0
        %579 = vmatprep.subr.mxu0 0.0
        %580 = vmatpush1.msra.mxu0 0.0
        %581 = vmatprep.subr.mxu0 0.0
        %582 = vmatpush1.msra.mxu0 0.0
        %583 = vmatprep.subr.mxu0 0.0
        %584 = vmatpush1.msra.mxu0 0.0
        %585 = vmatprep.subr.mxu0 0.0
        %586 = vmatpush1.msra.mxu0 0.0
        %587 = vmatprep.subr.mxu0 0.0
        %588 = vmatpush1.msra.mxu0 0.0
        %589 = vmatprep.subr.mxu0 0.0
        %590 = vmatpush1.msra.mxu0 0.0
        %591 = vmatprep.subr.mxu0 0.0
        %592 = vmatpush1.msra.mxu0 0.0
        %593 = vmatprep.subr.mxu0 0.0
        %594 = vmatpush1.msra.mxu0 0.0
        %595 = vmatprep.subr.mxu0 0.0
        %596 = vmatpush1.msra.mxu0 0.0
        %597 = vmatprep.subr.mxu0 0.0
        %598 = vmatpush1.msra.mxu0 0.0
        %599 = vmatprep.subr.mxu0 0.0
        %600 = vmatpush1.msra.mxu0 0.0
        %601 = vmatprep.subr.mxu0 0.0
        %602 = vmatpush1.msra.mxu0 0.0
        %603 = vmatprep.subr.mxu0 0.0
        %604 = vmatpush1.msra.mxu0 0.0
        %605 = vmatprep.subr.mxu0 0.0
        %606 = vmatpush1.msra.mxu0 0.0
        %607 = vmatprep.subr.mxu0 0.0
        %608 = vmatpush1.msra.mxu0 0.0
        %609 = vmatprep.subr.mxu0 0.0
        %610 = vmatpush1.msra.mxu0 0.0
        %611 = vmatprep.subr.mxu0 0.0
        %612 = vmatpush1.msra.mxu0 0.0
        %613 = vmatprep.mubr.f32.mxu0 0.0
        %614 = vmatmul.mubr.f32.gmra.mrb[0].mxu0 %v545
        %v615 = vpop.f32.mrb[0].mxu0
        %v616 = vadd.f32 0.0, %v615
        %v617 = vpop.f32.mrb[0].mxu0
        %618 = vmatprep.mubr.f32.mxu0 0.0
        %619 = vmatmul.mubr.f32.gmra.mrb[0].mxu0 %v547
        %v620 = vpop.f32.mrb[0].mxu0
        %v621 = vadd.f32 0.0, %v620
        %v622 = vpop.f32.mrb[0].mxu0
        %623 = vdwg.mxu0
        %624 = vrot.lane.b32.xlu0 %v343, 112
        %v625 = vpop.permute.xlu0 %624
        %626 = vrot.lane.b32.xlu0 %v349, 112
        %v627 = vpop.permute.xlu0 %626
        %v628 = vsel %vm370, %v625, 0
        %v630 = vsel %vm370, %v627, 0
        %632 = vmatprep.subr.mxu0 0.0
        %633 = vmatpush1.msra.mxu0 %v365
        %634 = vmatprep.subr.mxu0 0.0
        %635 = vmatpush1.msra.mxu0 %v366
        %636 = vmatprep.subr.mxu0 0.0
        %637 = vmatpush1.msra.mxu0 0.0
        %638 = vmatprep.subr.mxu0 0.0
        %639 = vmatpush1.msra.mxu0 0.0
        %640 = vmatprep.subr.mxu0 0.0
        %641 = vmatpush1.msra.mxu0 0.0
        %642 = vmatprep.subr.mxu0 0.0
        %643 = vmatpush1.msra.mxu0 0.0
        %644 = vmatprep.subr.mxu0 0.0
        %645 = vmatpush1.msra.mxu0 0.0
        %646 = vmatprep.subr.mxu0 0.0
        %647 = vmatpush1.msra.mxu0 0.0
        %648 = vmatprep.subr.mxu0 0.0
        %649 = vmatpush1.msra.mxu0 0.0
        %650 = vmatprep.subr.mxu0 0.0
        %651 = vmatpush1.msra.mxu0 0.0
        %652 = vmatprep.subr.mxu0 0.0
        %653 = vmatpush1.msra.mxu0 0.0
        %654 = vmatprep.subr.mxu0 0.0
        %655 = vmatpush1.msra.mxu0 0.0
        %656 = vmatprep.subr.mxu0 0.0
        %657 = vmatpush1.msra.mxu0 0.0
        %658 = vmatprep.subr.mxu0 0.0
        %659 = vmatpush1.msra.mxu0 0.0
        %660 = vmatprep.subr.mxu0 0.0
        %661 = vmatpush1.msra.mxu0 0.0
        %662 = vmatprep.subr.mxu0 0.0
        %663 = vmatpush1.msra.mxu0 0.0
        %664 = vmatprep.subr.mxu0 0.0
        %665 = vmatpush1.msra.mxu0 0.0
        %666 = vmatprep.subr.mxu0 0.0
        %667 = vmatpush1.msra.mxu0 0.0
        %668 = vmatprep.subr.mxu0 0.0
        %669 = vmatpush1.msra.mxu0 0.0
        %670 = vmatprep.subr.mxu0 0.0
        %671 = vmatpush1.msra.mxu0 0.0
        %672 = vmatprep.subr.mxu0 0.0
        %673 = vmatpush1.msra.mxu0 0.0
        %674 = vmatprep.subr.mxu0 0.0
        %675 = vmatpush1.msra.mxu0 0.0
        %676 = vmatprep.subr.mxu0 0.0
        %677 = vmatpush1.msra.mxu0 0.0
        %678 = vmatprep.subr.mxu0 0.0
        %679 = vmatpush1.msra.mxu0 0.0
        %680 = vmatprep.subr.mxu0 0.0
        %681 = vmatpush1.msra.mxu0 0.0
        %682 = vmatprep.subr.mxu0 0.0
        %683 = vmatpush1.msra.mxu0 0.0
        %684 = vmatprep.subr.mxu0 0.0
        %685 = vmatpush1.msra.mxu0 0.0
        %686 = vmatprep.subr.mxu0 0.0
        %687 = vmatpush1.msra.mxu0 0.0
        %688 = vmatprep.subr.mxu0 0.0
        %689 = vmatpush1.msra.mxu0 0.0
        %690 = vmatprep.subr.mxu0 0.0
        %691 = vmatpush1.msra.mxu0 0.0
        %692 = vmatprep.subr.mxu0 0.0
        %693 = vmatpush1.msra.mxu0 0.0
        %694 = vmatprep.subr.mxu0 0.0
        %695 = vmatpush1.msra.mxu0 0.0
        %696 = vmatprep.mubr.f32.mxu0 0.0
        %697 = vmatmul.mubr.f32.gmra.mrb[0].mxu0 %v628
        %v698 = vpop.f32.mrb[0].mxu0
        %v699 = vadd.f32 %v616, %v698
        %v700 = vpop.f32.mrb[0].mxu0
        %701 = vmatprep.mubr.f32.mxu0 0.0
        %702 = vmatmul.mubr.f32.gmra.mrb[0].mxu0 %v630
        %v703 = vpop.f32.mrb[0].mxu0
        %v704 = vadd.f32 %v621, %v703
        %v705 = vpop.f32.mrb[0].mxu0
        %706 = vdwg.mxu0
        %708 = vrot.lane.b32.xlu0 %v699, 64
        %v709 = vpop.permute.xlu0 %708
        %vm711 = vcmask 785920
        %712 = vst.msk [vmem:[%s215] sm:$0xff] %vm711, %v709
        %714 = vrot.lane.b32.xlu0 %v704, 96
        %v715 = vpop.permute.xlu0 %714
        %vm717 = vcmask 1048320
        %718 = vst.msk [vmem:[%s215] sm:$0xff] %vm717, %v715
        %719 = vrot.lane.b32.xlu0 %v355, 96
        %v720 = vpop.permute.xlu0 %719
        %721 = vrot.lane.b32.xlu0 %v361, 96
        %v722 = vpop.permute.xlu0 %721
        %v723 = vsel %vm370, %v720, 0
        %v725 = vsel %vm370, %v722, 0
        %727 = vmatprep.subr.mxu0 0.0
        %728 = vmatpush1.msra.mxu0 %v368
        %729 = vmatprep.subr.mxu0 0.0
        %730 = vmatpush1.msra.mxu0 %v369
        %731 = vmatprep.subr.mxu0 0.0
        %732 = vmatpush1.msra.mxu0 0.0
        %733 = vmatprep.subr.mxu0 0.0
        %734 = vmatpush1.msra.mxu0 0.0
        %735 = vmatprep.subr.mxu0 0.0
        %736 = vmatpush1.msra.mxu0 0.0
        %737 = vmatprep.subr.mxu0 0.0
        %738 = vmatpush1.msra.mxu0 0.0
        %739 = vmatprep.subr.mxu0 0.0
        %740 = vmatpush1.msra.mxu0 0.0
        %741 = vmatprep.subr.mxu0 0.0
        %742 = vmatpush1.msra.mxu0 0.0
        %743 = vmatprep.subr.mxu0 0.0
        %744 = vmatpush1.msra.mxu0 0.0
        %745 = vmatprep.subr.mxu0 0.0
        %746 = vmatpush1.msra.mxu0 0.0
        %747 = vmatprep.subr.mxu0 0.0
        %748 = vmatpush1.msra.mxu0 0.0
        %749 = vmatprep.subr.mxu0 0.0
        %750 = vmatpush1.msra.mxu0 0.0
        %751 = vmatprep.subr.mxu0 0.0
        %752 = vmatpush1.msra.mxu0 0.0
        %753 = vmatprep.subr.mxu0 0.0
        %754 = vmatpush1.msra.mxu0 0.0
        %755 = vmatprep.subr.mxu0 0.0
        %756 = vmatpush1.msra.mxu0 0.0
        %757 = vmatprep.subr.mxu0 0.0
        %758 = vmatpush1.msra.mxu0 0.0
        %759 = vmatprep.subr.mxu0 0.0
        %760 = vmatpush1.msra.mxu0 0.0
        %761 = vmatprep.subr.mxu0 0.0
        %762 = vmatpush1.msra.mxu0 0.0
        %763 = vmatprep.subr.mxu0 0.0
        %764 = vmatpush1.msra.mxu0 0.0
        %765 = vmatprep.subr.mxu0 0.0
        %766 = vmatpush1.msra.mxu0 0.0
        %767 = vmatprep.subr.mxu0 0.0
        %768 = vmatpush1.msra.mxu0 0.0
        %769 = vmatprep.subr.mxu0 0.0
        %770 = vmatpush1.msra.mxu0 0.0
        %771 = vmatprep.subr.mxu0 0.0
        %772 = vmatpush1.msra.mxu0 0.0
        %773 = vmatprep.subr.mxu0 0.0
        %774 = vmatpush1.msra.mxu0 0.0
        %775 = vmatprep.subr.mxu0 0.0
        %776 = vmatpush1.msra.mxu0 0.0
        %777 = vmatprep.subr.mxu0 0.0
        %778 = vmatpush1.msra.mxu0 0.0
        %779 = vmatprep.subr.mxu0 0.0
        %780 = vmatpush1.msra.mxu0 0.0
        %781 = vmatprep.subr.mxu0 0.0
        %782 = vmatpush1.msra.mxu0 0.0
        %783 = vmatprep.subr.mxu0 0.0
        %784 = vmatpush1.msra.mxu0 0.0
        %785 = vmatprep.subr.mxu0 0.0
        %786 = vmatpush1.msra.mxu0 0.0
        %787 = vmatprep.subr.mxu0 0.0
        %788 = vmatpush1.msra.mxu0 0.0
        %789 = vmatprep.subr.mxu0 0.0
        %790 = vmatpush1.msra.mxu0 0.0
        %791 = vmatprep.mubr.f32.mxu0 0.0
        %792 = vmatmul.mubr.f32.gmra.mrb[0].mxu0 %v723
        %v793 = vpop.f32.mrb[0].mxu0
        %v794 = vadd.f32 0.0, %v793
        %v795 = vpop.f32.mrb[0].mxu0
        %796 = vmatprep.mubr.f32.mxu0 0.0
        %797 = vmatmul.mubr.f32.gmra.mrb[0].mxu0 %v725
        %v798 = vpop.f32.mrb[0].mxu0
        %v799 = vadd.f32 0.0, %v798
        %v800 = vpop.f32.mrb[0].mxu0
        %801 = vdwg.mxu0
        %802 = vrot.lane.b32.xlu0 %v343, 96
        %v803 = vpop.permute.xlu0 %802
        %804 = vrot.lane.b32.xlu0 %v349, 96
        %v805 = vpop.permute.xlu0 %804
        %v806 = vsel %vm370, %v803, 0
        %v808 = vsel %vm370, %v805, 0
        %810 = vmatprep.subr.mxu0 0.0
        %811 = vmatpush1.msra.mxu0 %v365
        %812 = vmatprep.subr.mxu0 0.0
        %813 = vmatpush1.msra.mxu0 %v366
        %814 = vmatprep.subr.mxu0 0.0
        %815 = vmatpush1.msra.mxu0 0.0
        %816 = vmatprep.subr.mxu0 0.0
        %817 = vmatpush1.msra.mxu0 0.0
        %818 = vmatprep.subr.mxu0 0.0
        %819 = vmatpush1.msra.mxu0 0.0
        %820 = vmatprep.subr.mxu0 0.0
        %821 = vmatpush1.msra.mxu0 0.0
        %822 = vmatprep.subr.mxu0 0.0
        %823 = vmatpush1.msra.mxu0 0.0
        %824 = vmatprep.subr.mxu0 0.0
        %825 = vmatpush1.msra.mxu0 0.0
        %826 = vmatprep.subr.mxu0 0.0
        %827 = vmatpush1.msra.mxu0 0.0
        %828 = vmatprep.subr.mxu0 0.0
        %829 = vmatpush1.msra.mxu0 0.0
        %830 = vmatprep.subr.mxu0 0.0
        %831 = vmatpush1.msra.mxu0 0.0
        %832 = vmatprep.subr.mxu0 0.0
        %833 = vmatpush1.msra.mxu0 0.0
        %834 = vmatprep.subr.mxu0 0.0
        %835 = vmatpush1.msra.mxu0 0.0
        %836 = vmatprep.subr.mxu0 0.0
        %837 = vmatpush1.msra.mxu0 0.0
        %838 = vmatprep.subr.mxu0 0.0
        %839 = vmatpush1.msra.mxu0 0.0
        %840 = vmatprep.subr.mxu0 0.0
        %841 = vmatpush1.msra.mxu0 0.0
        %842 = vmatprep.subr.mxu0 0.0
        %843 = vmatpush1.msra.mxu0 0.0
        %844 = vmatprep.subr.mxu0 0.0
        %845 = vmatpush1.msra.mxu0 0.0
        %846 = vmatprep.subr.mxu0 0.0
        %847 = vmatpush1.msra.mxu0 0.0
        %848 = vmatprep.subr.mxu0 0.0
        %849 = vmatpush1.msra.mxu0 0.0
        %850 = vmatprep.subr.mxu0 0.0
        %851 = vmatpush1.msra.mxu0 0.0
        %852 = vmatprep.subr.mxu0 0.0
        %853 = vmatpush1.msra.mxu0 0.0
        %854 = vmatprep.subr.mxu0 0.0
        %855 = vmatpush1.msra.mxu0 0.0
        %856 = vmatprep.subr.mxu0 0.0
        %857 = vmatpush1.msra.mxu0 0.0
        %858 = vmatprep.subr.mxu0 0.0
        %859 = vmatpush1.msra.mxu0 0.0
        %860 = vmatprep.subr.mxu0 0.0
        %861 = vmatpush1.msra.mxu0 0.0
        %862 = vmatprep.subr.mxu0 0.0
        %863 = vmatpush1.msra.mxu0 0.0
        %864 = vmatprep.subr.mxu0 0.0
        %865 = vmatpush1.msra.mxu0 0.0
        %866 = vmatprep.subr.mxu0 0.0
        %867 = vmatpush1.msra.mxu0 0.0
        %868 = vmatprep.subr.mxu0 0.0
        %869 = vmatpush1.msra.mxu0 0.0
        %870 = vmatprep.subr.mxu0 0.0
        %871 = vmatpush1.msra.mxu0 0.0
        %872 = vmatprep.subr.mxu0 0.0
        %873 = vmatpush1.msra.mxu0 0.0
        %874 = vmatprep.mubr.f32.mxu0 0.0
        %875 = vmatmul.mubr.f32.gmra.mrb[0].mxu0 %v806
        %v876 = vpop.f32.mrb[0].mxu0
        %v877 = vadd.f32 %v794, %v876
        %v878 = vpop.f32.mrb[0].mxu0
        %879 = vmatprep.mubr.f32.mxu0 0.0
        %880 = vmatmul.mubr.f32.gmra.mrb[0].mxu0 %v808
        %v881 = vpop.f32.mrb[0].mxu0
        %v882 = vadd.f32 %v799, %v881
        %v883 = vpop.f32.mrb[0].mxu0
        %884 = vdwg.mxu0
        %885 = vst.msk [vmem:[%s215 + $0x8] sm:$0xff] %vm533, %v877
        %887 = vrot.lane.b32.xlu0 %v882, 32
        %v888 = vpop.permute.xlu0 %887
        %890 = vst.msk [vmem:[%s215 + $0x8] sm:$0xff] %vm539, %v888
        %891 = vrot.lane.b32.xlu0 %v355, 80
        %v892 = vpop.permute.xlu0 %891
        %893 = vrot.lane.b32.xlu0 %v361, 80
        %v894 = vpop.permute.xlu0 %893
        %v895 = vsel %vm370, %v892, 0
        %v897 = vsel %vm370, %v894, 0
        %899 = vmatprep.subr.mxu0 0.0
        %900 = vmatpush1.msra.mxu0 %v368
        %901 = vmatprep.subr.mxu0 0.0
        %902 = vmatpush1.msra.mxu0 %v369
        %903 = vmatprep.subr.mxu0 0.0
        %904 = vmatpush1.msra.mxu0 0.0
        %905 = vmatprep.subr.mxu0 0.0
        %906 = vmatpush1.msra.mxu0 0.0
        %907 = vmatprep.subr.mxu0 0.0
        %908 = vmatpush1.msra.mxu0 0.0
        %909 = vmatprep.subr.mxu0 0.0
        %910 = vmatpush1.msra.mxu0 0.0
        %911 = vmatprep.subr.mxu0 0.0
        %912 = vmatpush1.msra.mxu0 0.0
        %913 = vmatprep.subr.mxu0 0.0
        %914 = vmatpush1.msra.mxu0 0.0
        %915 = vmatprep.subr.mxu0 0.0
        %916 = vmatpush1.msra.mxu0 0.0
        %917 = vmatprep.subr.mxu0 0.0
        %918 = vmatpush1.msra.mxu0 0.0
        %919 = vmatprep.subr.mxu0 0.0
        %920 = vmatpush1.msra.mxu0 0.0
        %921 = vmatprep.subr.mxu0 0.0
        %922 = vmatpush1.msra.mxu0 0.0
        %923 = vmatprep.subr.mxu0 0.0
        %924 = vmatpush1.msra.mxu0 0.0
        %925 = vmatprep.subr.mxu0 0.0
        %926 = vmatpush1.msra.mxu0 0.0
        %927 = vmatprep.subr.mxu0 0.0
        %928 = vmatpush1.msra.mxu0 0.0
        %929 = vmatprep.subr.mxu0 0.0
        %930 = vmatpush1.msra.mxu0 0.0
        %931 = vmatprep.subr.mxu0 0.0
        %932 = vmatpush1.msra.mxu0 0.0
        %933 = vmatprep.subr.mxu0 0.0
        %934 = vmatpush1.msra.mxu0 0.0
        %935 = vmatprep.subr.mxu0 0.0
        %936 = vmatpush1.msra.mxu0 0.0
        %937 = vmatprep.subr.mxu0 0.0
        %938 = vmatpush1.msra.mxu0 0.0
        %939 = vmatprep.subr.mxu0 0.0
        %940 = vmatpush1.msra.mxu0 0.0
        %941 = vmatprep.subr.mxu0 0.0
        %942 = vmatpush1.msra.mxu0 0.0
        %943 = vmatprep.subr.mxu0 0.0
        %944 = vmatpush1.msra.mxu0 0.0
        %945 = vmatprep.subr.mxu0 0.0
        %946 = vmatpush1.msra.mxu0 0.0
        %947 = vmatprep.subr.mxu0 0.0
        %948 = vmatpush1.msra.mxu0 0.0
        %949 = vmatprep.subr.mxu0 0.0
        %950 = vmatpush1.msra.mxu0 0.0
        %951 = vmatprep.subr.mxu0 0.0
        %952 = vmatpush1.msra.mxu0 0.0
        %953 = vmatprep.subr.mxu0 0.0
        %954 = vmatpush1.msra.mxu0 0.0
        %955 = vmatprep.subr.mxu0 0.0
        %956 = vmatpush1.msra.mxu0 0.0
        %957 = vmatprep.subr.mxu0 0.0
        %958 = vmatpush1.msra.mxu0 0.0
        %959 = vmatprep.subr.mxu0 0.0
        %960 = vmatpush1.msra.mxu0 0.0
        %961 = vmatprep.subr.mxu0 0.0
        %962 = vmatpush1.msra.mxu0 0.0
        %963 = vmatprep.mubr.f32.mxu0 0.0
        %964 = vmatmul.mubr.f32.gmra.mrb[0].mxu0 %v895
        %v965 = vpop.f32.mrb[0].mxu0
        %v966 = vadd.f32 0.0, %v965
        %v967 = vpop.f32.mrb[0].mxu0
        %968 = vmatprep.mubr.f32.mxu0 0.0
        %969 = vmatmul.mubr.f32.gmra.mrb[0].mxu0 %v897
        %v970 = vpop.f32.mrb[0].mxu0
        %v971 = vadd.f32 0.0, %v970
        %v972 = vpop.f32.mrb[0].mxu0
        %973 = vdwg.mxu0
        %974 = vrot.lane.b32.xlu0 %v343, 80
        %v975 = vpop.permute.xlu0 %974
        %976 = vrot.lane.b32.xlu0 %v349, 80
        %v977 = vpop.permute.xlu0 %976
        %v978 = vsel %vm370, %v975, 0
        %v980 = vsel %vm370, %v977, 0
        %982 = vmatprep.subr.mxu0 0.0
        %983 = vmatpush1.msra.mxu0 %v365
        %984 = vmatprep.subr.mxu0 0.0
        %985 = vmatpush1.msra.mxu0 %v366
        %986 = vmatprep.subr.mxu0 0.0
        %987 = vmatpush1.msra.mxu0 0.0
        %988 = vmatprep.subr.mxu0 0.0
        %989 = vmatpush1.msra.mxu0 0.0
        %990 = vmatprep.subr.mxu0 0.0
        %991 = vmatpush1.msra.mxu0 0.0
        %992 = vmatprep.subr.mxu0 0.0
        %993 = vmatpush1.msra.mxu0 0.0
        %994 = vmatprep.subr.mxu0 0.0
        %995 = vmatpush1.msra.mxu0 0.0
        %996 = vmatprep.subr.mxu0 0.0
        %997 = vmatpush1.msra.mxu0 0.0
        %998 = vmatprep.subr.mxu0 0.0
        %999 = vmatpush1.msra.mxu0 0.0
        %1000 = vmatprep.subr.mxu0 0.0
        %1001 = vmatpush1.msra.mxu0 0.0
        %1002 = vmatprep.subr.mxu0 0.0
        %1003 = vmatpush1.msra.mxu0 0.0
        %1004 = vmatprep.subr.mxu0 0.0
        %1005 = vmatpush1.msra.mxu0 0.0
        %1006 = vmatprep.subr.mxu0 0.0
        %1007 = vmatpush1.msra.mxu0 0.0
        %1008 = vmatprep.subr.mxu0 0.0
        %1009 = vmatpush1.msra.mxu0 0.0
        %1010 = vmatprep.subr.mxu0 0.0
        %1011 = vmatpush1.msra.mxu0 0.0
        %1012 = vmatprep.subr.mxu0 0.0
        %1013 = vmatpush1.msra.mxu0 0.0
        %1014 = vmatprep.subr.mxu0 0.0
        %1015 = vmatpush1.msra.mxu0 0.0
        %1016 = vmatprep.subr.mxu0 0.0
        %1017 = vmatpush1.msra.mxu0 0.0
        %1018 = vmatprep.subr.mxu0 0.0
        %1019 = vmatpush1.msra.mxu0 0.0
        %1020 = vmatprep.subr.mxu0 0.0
        %1021 = vmatpush1.msra.mxu0 0.0
        %1022 = vmatprep.subr.mxu0 0.0
        %1023 = vmatpush1.msra.mxu0 0.0
        %1024 = vmatprep.subr.mxu0 0.0
        %1025 = vmatpush1.msra.mxu0 0.0
        %1026 = vmatprep.subr.mxu0 0.0
        %1027 = vmatpush1.msra.mxu0 0.0
        %1028 = vmatprep.subr.mxu0 0.0
        %1029 = vmatpush1.msra.mxu0 0.0
        %1030 = vmatprep.subr.mxu0 0.0
        %1031 = vmatpush1.msra.mxu0 0.0
        %1032 = vmatprep.subr.mxu0 0.0
        %1033 = vmatpush1.msra.mxu0 0.0
        %1034 = vmatprep.subr.mxu0 0.0
        %1035 = vmatpush1.msra.mxu0 0.0
        %1036 = vmatprep.subr.mxu0 0.0
        %1037 = vmatpush1.msra.mxu0 0.0
        %1038 = vmatprep.subr.mxu0 0.0
        %1039 = vmatpush1.msra.mxu0 0.0
        %1040 = vmatprep.subr.mxu0 0.0
        %1041 = vmatpush1.msra.mxu0 0.0
        %1042 = vmatprep.subr.mxu0 0.0
        %1043 = vmatpush1.msra.mxu0 0.0
        %1044 = vmatprep.subr.mxu0 0.0
        %1045 = vmatpush1.msra.mxu0 0.0
        %1046 = vmatprep.mubr.f32.mxu0 0.0
        %1047 = vmatmul.mubr.f32.gmra.mrb[0].mxu0 %v978
        %v1048 = vpop.f32.mrb[0].mxu0
        %v1049 = vadd.f32 %v966, %v1048
        %v1050 = vpop.f32.mrb[0].mxu0
        %1051 = vmatprep.mubr.f32.mxu0 0.0
        %1052 = vmatmul.mubr.f32.gmra.mrb[0].mxu0 %v980
        %v1053 = vpop.f32.mrb[0].mxu0
        %v1054 = vadd.f32 %v971, %v1053
        %v1055 = vpop.f32.mrb[0].mxu0
        %1056 = vdwg.mxu0
        %1058 = vrot.lane.b32.xlu0 %v1049, 64
        %v1059 = vpop.permute.xlu0 %1058
        %1061 = vst.msk [vmem:[%s215 + $0x8] sm:$0xff] %vm711, %v1059
        %1063 = vrot.lane.b32.xlu0 %v1054, 96
        %v1064 = vpop.permute.xlu0 %1063
        %1066 = vst.msk [vmem:[%s215 + $0x8] sm:$0xff] %vm717, %v1064
        %1067 = vrot.lane.b32.xlu0 %v355, 64
        %v1068 = vpop.permute.xlu0 %1067
        %1069 = vrot.lane.b32.xlu0 %v361, 64
        %v1070 = vpop.permute.xlu0 %1069
        %v1071 = vsel %vm370, %v1068, 0
        %v1073 = vsel %vm370, %v1070, 0
        %1075 = vmatprep.subr.mxu0 0.0
        %1076 = vmatpush1.msra.mxu0 %v368
        %1077 = vmatprep.subr.mxu0 0.0
        %1078 = vmatpush1.msra.mxu0 %v369
        %1079 = vmatprep.subr.mxu0 0.0
        %1080 = vmatpush1.msra.mxu0 0.0
        %1081 = vmatprep.subr.mxu0 0.0
        %1082 = vmatpush1.msra.mxu0 0.0
        %1083 = vmatprep.subr.mxu0 0.0
        %1084 = vmatpush1.msra.mxu0 0.0
        %1085 = vmatprep.subr.mxu0 0.0
        %1086 = vmatpush1.msra.mxu0 0.0
        %1087 = vmatprep.subr.mxu0 0.0
        %1088 = vmatpush1.msra.mxu0 0.0
        %1089 = vmatprep.subr.mxu0 0.0
        %1090 = vmatpush1.msra.mxu0 0.0
        %1091 = vmatprep.subr.mxu0 0.0
        %1092 = vmatpush1.msra.mxu0 0.0
        %1093 = vmatprep.subr.mxu0 0.0
        %1094 = vmatpush1.msra.mxu0 0.0
        %1095 = vmatprep.subr.mxu0 0.0
        %1096 = vmatpush1.msra.mxu0 0.0
        %1097 = vmatprep.subr.mxu0 0.0
        %1098 = vmatpush1.msra.mxu0 0.0
        %1099 = vmatprep.subr.mxu0 0.0
        %1100 = vmatpush1.msra.mxu0 0.0
        %1101 = vmatprep.subr.mxu0 0.0
        %1102 = vmatpush1.msra.mxu0 0.0
        %1103 = vmatprep.subr.mxu0 0.0
        %1104 = vmatpush1.msra.mxu0 0.0
        %1105 = vmatprep.subr.mxu0 0.0
        %1106 = vmatpush1.msra.mxu0 0.0
        %1107 = vmatprep.subr.mxu0 0.0
        %1108 = vmatpush1.msra.mxu0 0.0
        %1109 = vmatprep.subr.mxu0 0.0
        %1110 = vmatpush1.msra.mxu0 0.0
        %1111 = vmatprep.subr.mxu0 0.0
        %1112 = vmatpush1.msra.mxu0 0.0
        %1113 = vmatprep.subr.mxu0 0.0
        %1114 = vmatpush1.msra.mxu0 0.0
        %1115 = vmatprep.subr.mxu0 0.0
        %1116 = vmatpush1.msra.mxu0 0.0
        %1117 = vmatprep.subr.mxu0 0.0
        %1118 = vmatpush1.msra.mxu0 0.0
        %1119 = vmatprep.subr.mxu0 0.0
        %1120 = vmatpush1.msra.mxu0 0.0
        %1121 = vmatprep.subr.mxu0 0.0
        %1122 = vmatpush1.msra.mxu0 0.0
        %1123 = vmatprep.subr.mxu0 0.0
        %1124 = vmatpush1.msra.mxu0 0.0
        %1125 = vmatprep.subr.mxu0 0.0
        %1126 = vmatpush1.msra.mxu0 0.0
        %1127 = vmatprep.subr.mxu0 0.0
        %1128 = vmatpush1.msra.mxu0 0.0
        %1129 = vmatprep.subr.mxu0 0.0
        %1130 = vmatpush1.msra.mxu0 0.0
        %1131 = vmatprep.subr.mxu0 0.0
        %1132 = vmatpush1.msra.mxu0 0.0
        %1133 = vmatprep.subr.mxu0 0.0
        %1134 = vmatpush1.msra.mxu0 0.0
        %1135 = vmatprep.subr.mxu0 0.0
        %1136 = vmatpush1.msra.mxu0 0.0
        %1137 = vmatprep.subr.mxu0 0.0
        %1138 = vmatpush1.msra.mxu0 0.0
        %1139 = vmatprep.mubr.f32.mxu0 0.0
        %1140 = vmatmul.mubr.f32.gmra.mrb[0].mxu0 %v1071
        %v1141 = vpop.f32.mrb[0].mxu0
        %v1142 = vadd.f32 0.0, %v1141
        %v1143 = vpop.f32.mrb[0].mxu0
        %1144 = vmatprep.mubr.f32.mxu0 0.0
        %1145 = vmatmul.mubr.f32.gmra.mrb[0].mxu0 %v1073
        %v1146 = vpop.f32.mrb[0].mxu0
        %v1147 = vadd.f32 0.0, %v1146
        %v1148 = vpop.f32.mrb[0].mxu0
        %1149 = vdwg.mxu0
        %1150 = vrot.lane.b32.xlu0 %v343, 64
        %v1151 = vpop.permute.xlu0 %1150
        %1152 = vrot.lane.b32.xlu0 %v349, 64
        %v1153 = vpop.permute.xlu0 %1152
        %v1154 = vsel %vm370, %v1151, 0
        %v1156 = vsel %vm370, %v1153, 0
        %1158 = vmatprep.subr.mxu0 0.0
        %1159 = vmatpush1.msra.mxu0 %v365
        %1160 = vmatprep.subr.mxu0 0.0
        %1161 = vmatpush1.msra.mxu0 %v366
        %1162 = vmatprep.subr.mxu0 0.0
        %1163 = vmatpush1.msra.mxu0 0.0
        %1164 = vmatprep.subr.mxu0 0.0
        %1165 = vmatpush1.msra.mxu0 0.0
        %1166 = vmatprep.subr.mxu0 0.0
        %1167 = vmatpush1.msra.mxu0 0.0
        %1168 = vmatprep.subr.mxu0 0.0
        %1169 = vmatpush1.msra.mxu0 0.0
        %1170 = vmatprep.subr.mxu0 0.0
        %1171 = vmatpush1.msra.mxu0 0.0
        %1172 = vmatprep.subr.mxu0 0.0
        %1173 = vmatpush1.msra.mxu0 0.0
        %1174 = vmatprep.subr.mxu0 0.0
        %1175 = vmatpush1.msra.mxu0 0.0
        %1176 = vmatprep.subr.mxu0 0.0
        %1177 = vmatpush1.msra.mxu0 0.0
        %1178 = vmatprep.subr.mxu0 0.0
        %1179 = vmatpush1.msra.mxu0 0.0
        %1180 = vmatprep.subr.mxu0 0.0
        %1181 = vmatpush1.msra.mxu0 0.0
        %1182 = vmatprep.subr.mxu0 0.0
        %1183 = vmatpush1.msra.mxu0 0.0
        %1184 = vmatprep.subr.mxu0 0.0
        %1185 = vmatpush1.msra.mxu0 0.0
        %1186 = vmatprep.subr.mxu0 0.0
        %1187 = vmatpush1.msra.mxu0 0.0
        %1188 = vmatprep.subr.mxu0 0.0
        %1189 = vmatpush1.msra.mxu0 0.0
        %1190 = vmatprep.subr.mxu0 0.0
        %1191 = vmatpush1.msra.mxu0 0.0
        %1192 = vmatprep.subr.mxu0 0.0
        %1193 = vmatpush1.msra.mxu0 0.0
        %1194 = vmatprep.subr.mxu0 0.0
        %1195 = vmatpush1.msra.mxu0 0.0
        %1196 = vmatprep.subr.mxu0 0.0
        %1197 = vmatpush1.msra.mxu0 0.0
        %1198 = vmatprep.subr.mxu0 0.0
        %1199 = vmatpush1.msra.mxu0 0.0
        %1200 = vmatprep.subr.mxu0 0.0
        %1201 = vmatpush1.msra.mxu0 0.0
        %1202 = vmatprep.subr.mxu0 0.0
        %1203 = vmatpush1.msra.mxu0 0.0
        %1204 = vmatprep.subr.mxu0 0.0
        %1205 = vmatpush1.msra.mxu0 0.0
        %1206 = vmatprep.subr.mxu0 0.0
        %1207 = vmatpush1.msra.mxu0 0.0
        %1208 = vmatprep.subr.mxu0 0.0
        %1209 = vmatpush1.msra.mxu0 0.0
        %1210 = vmatprep.subr.mxu0 0.0
        %1211 = vmatpush1.msra.mxu0 0.0
        %1212 = vmatprep.subr.mxu0 0.0
        %1213 = vmatpush1.msra.mxu0 0.0
        %1214 = vmatprep.subr.mxu0 0.0
        %1215 = vmatpush1.msra.mxu0 0.0
        %1216 = vmatprep.subr.mxu0 0.0
        %1217 = vmatpush1.msra.mxu0 0.0
        %1218 = vmatprep.subr.mxu0 0.0
        %1219 = vmatpush1.msra.mxu0 0.0
        %1220 = vmatprep.subr.mxu0 0.0
        %1221 = vmatpush1.msra.mxu0 0.0
        %1222 = vmatprep.mubr.f32.mxu0 0.0
        %1223 = vmatmul.mubr.f32.gmra.mrb[0].mxu0 %v1154
        %v1224 = vpop.f32.mrb[0].mxu0
        %v1225 = vadd.f32 %v1142, %v1224
        %v1226 = vpop.f32.mrb[0].mxu0
        %1227 = vmatprep.mubr.f32.mxu0 0.0
        %1228 = vmatmul.mubr.f32.gmra.mrb[0].mxu0 %v1156
        %v1229 = vpop.f32.mrb[0].mxu0
        %v1230 = vadd.f32 %v1147, %v1229
        %v1231 = vpop.f32.mrb[0].mxu0
        %1232 = vdwg.mxu0
        %1233 = vst.msk [vmem:[%s215 + $0x10] sm:$0xff] %vm533, %v1225
        %1235 = vrot.lane.b32.xlu0 %v1230, 32
        %v1236 = vpop.permute.xlu0 %1235
        %1238 = vst.msk [vmem:[%s215 + $0x10] sm:$0xff] %vm539, %v1236
        %1239 = vrot.lane.b32.xlu0 %v355, 48
        %v1240 = vpop.permute.xlu0 %1239
        %1241 = vrot.lane.b32.xlu0 %v361, 48
        %v1242 = vpop.permute.xlu0 %1241
        %v1243 = vsel %vm370, %v1240, 0
        %v1245 = vsel %vm370, %v1242, 0
        %1247 = vmatprep.subr.mxu0 0.0
        %1248 = vmatpush1.msra.mxu0 %v368
        %1249 = vmatprep.subr.mxu0 0.0
        %1250 = vmatpush1.msra.mxu0 %v369
        %1251 = vmatprep.subr.mxu0 0.0
        %1252 = vmatpush1.msra.mxu0 0.0
        %1253 = vmatprep.subr.mxu0 0.0
        %1254 = vmatpush1.msra.mxu0 0.0
        %1255 = vmatprep.subr.mxu0 0.0
        %1256 = vmatpush1.msra.mxu0 0.0
        %1257 = vmatprep.subr.mxu0 0.0
        %1258 = vmatpush1.msra.mxu0 0.0
        %1259 = vmatprep.subr.mxu0 0.0
        %1260 = vmatpush1.msra.mxu0 0.0
        %1261 = vmatprep.subr.mxu0 0.0
        %1262 = vmatpush1.msra.mxu0 0.0
        %1263 = vmatprep.subr.mxu0 0.0
        %1264 = vmatpush1.msra.mxu0 0.0
        %1265 = vmatprep.subr.mxu0 0.0
        %1266 = vmatpush1.msra.mxu0 0.0
        %1267 = vmatprep.subr.mxu0 0.0
        %1268 = vmatpush1.msra.mxu0 0.0
        %1269 = vmatprep.subr.mxu0 0.0
        %1270 = vmatpush1.msra.mxu0 0.0
        %1271 = vmatprep.subr.mxu0 0.0
        %1272 = vmatpush1.msra.mxu0 0.0
        %1273 = vmatprep.subr.mxu0 0.0
        %1274 = vmatpush1.msra.mxu0 0.0
        %1275 = vmatprep.subr.mxu0 0.0
        %1276 = vmatpush1.msra.mxu0 0.0
        %1277 = vmatprep.subr.mxu0 0.0
        %1278 = vmatpush1.msra.mxu0 0.0
        %1279 = vmatprep.subr.mxu0 0.0
        %1280 = vmatpush1.msra.mxu0 0.0
        %1281 = vmatprep.subr.mxu0 0.0
        %1282 = vmatpush1.msra.mxu0 0.0
        %1283 = vmatprep.subr.mxu0 0.0
        %1284 = vmatpush1.msra.mxu0 0.0
        %1285 = vmatprep.subr.mxu0 0.0
        %1286 = vmatpush1.msra.mxu0 0.0
        %1287 = vmatprep.subr.mxu0 0.0
        %1288 = vmatpush1.msra.mxu0 0.0
        %1289 = vmatprep.subr.mxu0 0.0
        %1290 = vmatpush1.msra.mxu0 0.0
        %1291 = vmatprep.subr.mxu0 0.0
        %1292 = vmatpush1.msra.mxu0 0.0
        %1293 = vmatprep.subr.mxu0 0.0
        %1294 = vmatpush1.msra.mxu0 0.0
        %1295 = vmatprep.subr.mxu0 0.0
        %1296 = vmatpush1.msra.mxu0 0.0
        %1297 = vmatprep.subr.mxu0 0.0
        %1298 = vmatpush1.msra.mxu0 0.0
        %1299 = vmatprep.subr.mxu0 0.0
        %1300 = vmatpush1.msra.mxu0 0.0
        %1301 = vmatprep.subr.mxu0 0.0
        %1302 = vmatpush1.msra.mxu0 0.0
        %1303 = vmatprep.subr.mxu0 0.0
        %1304 = vmatpush1.msra.mxu0 0.0
        %1305 = vmatprep.subr.mxu0 0.0
        %1306 = vmatpush1.msra.mxu0 0.0
        %1307 = vmatprep.subr.mxu0 0.0
        %1308 = vmatpush1.msra.mxu0 0.0
        %1309 = vmatprep.subr.mxu0 0.0
        %1310 = vmatpush1.msra.mxu0 0.0
        %1311 = vmatprep.mubr.f32.mxu0 0.0
        %1312 = vmatmul.mubr.f32.gmra.mrb[0].mxu0 %v1243
        %v1313 = vpop.f32.mrb[0].mxu0
        %v1314 = vadd.f32 0.0, %v1313
        %v1315 = vpop.f32.mrb[0].mxu0
        %1316 = vmatprep.mubr.f32.mxu0 0.0
        %1317 = vmatmul.mubr.f32.gmra.mrb[0].mxu0 %v1245
        %v1318 = vpop.f32.mrb[0].mxu0
        %v1319 = vadd.f32 0.0, %v1318
        %v1320 = vpop.f32.mrb[0].mxu0
        %1321 = vdwg.mxu0
        %1322 = vrot.lane.b32.xlu0 %v343, 48
        %v1323 = vpop.permute.xlu0 %1322
        %1324 = vrot.lane.b32.xlu0 %v349, 48
        %v1325 = vpop.permute.xlu0 %1324
        %v1326 = vsel %vm370, %v1323, 0
        %v1328 = vsel %vm370, %v1325, 0
        %1330 = vmatprep.subr.mxu0 0.0
        %1331 = vmatpush1.msra.mxu0 %v365
        %1332 = vmatprep.subr.mxu0 0.0
        %1333 = vmatpush1.msra.mxu0 %v366
        %1334 = vmatprep.subr.mxu0 0.0
        %1335 = vmatpush1.msra.mxu0 0.0
        %1336 = vmatprep.subr.mxu0 0.0
        %1337 = vmatpush1.msra.mxu0 0.0
        %1338 = vmatprep.subr.mxu0 0.0
        %1339 = vmatpush1.msra.mxu0 0.0
        %1340 = vmatprep.subr.mxu0 0.0
        %1341 = vmatpush1.msra.mxu0 0.0
        %1342 = vmatprep.subr.mxu0 0.0
        %1343 = vmatpush1.msra.mxu0 0.0
        %1344 = vmatprep.subr.mxu0 0.0
        %1345 = vmatpush1.msra.mxu0 0.0
        %1346 = vmatprep.subr.mxu0 0.0
        %1347 = vmatpush1.msra.mxu0 0.0
        %1348 = vmatprep.subr.mxu0 0.0
        %1349 = vmatpush1.msra.mxu0 0.0
        %1350 = vmatprep.subr.mxu0 0.0
        %1351 = vmatpush1.msra.mxu0 0.0
        %1352 = vmatprep.subr.mxu0 0.0
        %1353 = vmatpush1.msra.mxu0 0.0
        %1354 = vmatprep.subr.mxu0 0.0
        %1355 = vmatpush1.msra.mxu0 0.0
        %1356 = vmatprep.subr.mxu0 0.0
        %1357 = vmatpush1.msra.mxu0 0.0
        %1358 = vmatprep.subr.mxu0 0.0
        %1359 = vmatpush1.msra.mxu0 0.0
        %1360 = vmatprep.subr.mxu0 0.0
        %1361 = vmatpush1.msra.mxu0 0.0
        %1362 = vmatprep.subr.mxu0 0.0
        %1363 = vmatpush1.msra.mxu0 0.0
        %1364 = vmatprep.subr.mxu0 0.0
        %1365 = vmatpush1.msra.mxu0 0.0
        %1366 = vmatprep.subr.mxu0 0.0
        %1367 = vmatpush1.msra.mxu0 0.0
        %1368 = vmatprep.subr.mxu0 0.0
        %1369 = vmatpush1.msra.mxu0 0.0
        %1370 = vmatprep.subr.mxu0 0.0
        %1371 = vmatpush1.msra.mxu0 0.0
        %1372 = vmatprep.subr.mxu0 0.0
        %1373 = vmatpush1.msra.mxu0 0.0
        %1374 = vmatprep.subr.mxu0 0.0
        %1375 = vmatpush1.msra.mxu0 0.0
        %1376 = vmatprep.subr.mxu0 0.0
        %1377 = vmatpush1.msra.mxu0 0.0
        %1378 = vmatprep.subr.mxu0 0.0
        %1379 = vmatpush1.msra.mxu0 0.0
        %1380 = vmatprep.subr.mxu0 0.0
        %1381 = vmatpush1.msra.mxu0 0.0
        %1382 = vmatprep.subr.mxu0 0.0
        %1383 = vmatpush1.msra.mxu0 0.0
        %1384 = vmatprep.subr.mxu0 0.0
        %1385 = vmatpush1.msra.mxu0 0.0
        %1386 = vmatprep.subr.mxu0 0.0
        %1387 = vmatpush1.msra.mxu0 0.0
        %1388 = vmatprep.subr.mxu0 0.0
        %1389 = vmatpush1.msra.mxu0 0.0
        %1390 = vmatprep.subr.mxu0 0.0
        %1391 = vmatpush1.msra.mxu0 0.0
        %1392 = vmatprep.subr.mxu0 0.0
        %1393 = vmatpush1.msra.mxu0 0.0
        %1394 = vmatprep.mubr.f32.mxu0 0.0
        %1395 = vmatmul.mubr.f32.gmra.mrb[0].mxu0 %v1326
        %v1396 = vpop.f32.mrb[0].mxu0
        %v1397 = vadd.f32 %v1314, %v1396
        %v1398 = vpop.f32.mrb[0].mxu0
        %1399 = vmatprep.mubr.f32.mxu0 0.0
        %1400 = vmatmul.mubr.f32.gmra.mrb[0].mxu0 %v1328
        %v1401 = vpop.f32.mrb[0].mxu0
        %v1402 = vadd.f32 %v1319, %v1401
        %v1403 = vpop.f32.mrb[0].mxu0
        %1404 = vdwg.mxu0
        %1406 = vrot.lane.b32.xlu0 %v1397, 64
        %v1407 = vpop.permute.xlu0 %1406
        %1409 = vst.msk [vmem:[%s215 + $0x10] sm:$0xff] %vm711, %v1407
        %1411 = vrot.lane.b32.xlu0 %v1402, 96
        %v1412 = vpop.permute.xlu0 %1411
        %1414 = vst.msk [vmem:[%s215 + $0x10] sm:$0xff] %vm717, %v1412
        %1415 = vrot.lane.b32.xlu0 %v355, 32
        %v1416 = vpop.permute.xlu0 %1415
        %1417 = vrot.lane.b32.xlu0 %v361, 32
        %v1418 = vpop.permute.xlu0 %1417
        %v1419 = vsel %vm370, %v1416, 0
        %v1421 = vsel %vm370, %v1418, 0
        %1423 = vmatprep.subr.mxu0 0.0
        %1424 = vmatpush1.msra.mxu0 %v368
        %1425 = vmatprep.subr.mxu0 0.0
        %1426 = vmatpush1.msra.mxu0 %v369
        %1427 = vmatprep.subr.mxu0 0.0
        %1428 = vmatpush1.msra.mxu0 0.0
        %1429 = vmatprep.subr.mxu0 0.0
        %1430 = vmatpush1.msra.mxu0 0.0
        %1431 = vmatprep.subr.mxu0 0.0
        %1432 = vmatpush1.msra.mxu0 0.0
        %1433 = vmatprep.subr.mxu0 0.0
        %1434 = vmatpush1.msra.mxu0 0.0
        %1435 = vmatprep.subr.mxu0 0.0
        %1436 = vmatpush1.msra.mxu0 0.0
        %1437 = vmatprep.subr.mxu0 0.0
        %1438 = vmatpush1.msra.mxu0 0.0
        %1439 = vmatprep.subr.mxu0 0.0
        %1440 = vmatpush1.msra.mxu0 0.0
        %1441 = vmatprep.subr.mxu0 0.0
        %1442 = vmatpush1.msra.mxu0 0.0
        %1443 = vmatprep.subr.mxu0 0.0
        %1444 = vmatpush1.msra.mxu0 0.0
        %1445 = vmatprep.subr.mxu0 0.0
        %1446 = vmatpush1.msra.mxu0 0.0
        %1447 = vmatprep.subr.mxu0 0.0
        %1448 = vmatpush1.msra.mxu0 0.0
        %1449 = vmatprep.subr.mxu0 0.0
        %1450 = vmatpush1.msra.mxu0 0.0
        %1451 = vmatprep.subr.mxu0 0.0
        %1452 = vmatpush1.msra.mxu0 0.0
        %1453 = vmatprep.subr.mxu0 0.0
        %1454 = vmatpush1.msra.mxu0 0.0
        %1455 = vmatprep.subr.mxu0 0.0
        %1456 = vmatpush1.msra.mxu0 0.0
        %1457 = vmatprep.subr.mxu0 0.0
        %1458 = vmatpush1.msra.mxu0 0.0
        %1459 = vmatprep.subr.mxu0 0.0
        %1460 = vmatpush1.msra.mxu0 0.0
        %1461 = vmatprep.subr.mxu0 0.0
        %1462 = vmatpush1.msra.mxu0 0.0
        %1463 = vmatprep.subr.mxu0 0.0
        %1464 = vmatpush1.msra.mxu0 0.0
        %1465 = vmatprep.subr.mxu0 0.0
        %1466 = vmatpush1.msra.mxu0 0.0
        %1467 = vmatprep.subr.mxu0 0.0
        %1468 = vmatpush1.msra.mxu0 0.0
        %1469 = vmatprep.subr.mxu0 0.0
        %1470 = vmatpush1.msra.mxu0 0.0
        %1471 = vmatprep.subr.mxu0 0.0
        %1472 = vmatpush1.msra.mxu0 0.0
        %1473 = vmatprep.subr.mxu0 0.0
        %1474 = vmatpush1.msra.mxu0 0.0
        %1475 = vmatprep.subr.mxu0 0.0
        %1476 = vmatpush1.msra.mxu0 0.0
        %1477 = vmatprep.subr.mxu0 0.0
        %1478 = vmatpush1.msra.mxu0 0.0
        %1479 = vmatprep.subr.mxu0 0.0
        %1480 = vmatpush1.msra.mxu0 0.0
        %1481 = vmatprep.subr.mxu0 0.0
        %1482 = vmatpush1.msra.mxu0 0.0
        %1483 = vmatprep.subr.mxu0 0.0
        %1484 = vmatpush1.msra.mxu0 0.0
        %1485 = vmatprep.subr.mxu0 0.0
        %1486 = vmatpush1.msra.mxu0 0.0
        %1487 = vmatprep.mubr.f32.mxu0 0.0
        %1488 = vmatmul.mubr.f32.gmra.mrb[0].mxu0 %v1419
        %v1489 = vpop.f32.mrb[0].mxu0
        %v1490 = vadd.f32 0.0, %v1489
        %v1491 = vpop.f32.mrb[0].mxu0
        %1492 = vmatprep.mubr.f32.mxu0 0.0
        %1493 = vmatmul.mubr.f32.gmra.mrb[0].mxu0 %v1421
        %v1494 = vpop.f32.mrb[0].mxu0
        %v1495 = vadd.f32 0.0, %v1494
        %v1496 = vpop.f32.mrb[0].mxu0
        %1497 = vdwg.mxu0
        %1498 = vrot.lane.b32.xlu0 %v343, 32
        %v1499 = vpop.permute.xlu0 %1498
        %1500 = vrot.lane.b32.xlu0 %v349, 32
        %v1501 = vpop.permute.xlu0 %1500
        %v1502 = vsel %vm370, %v1499, 0
        %v1504 = vsel %vm370, %v1501, 0
        %1506 = vmatprep.subr.mxu0 0.0
        %1507 = vmatpush1.msra.mxu0 %v365
        %1508 = vmatprep.subr.mxu0 0.0
        %1509 = vmatpush1.msra.mxu0 %v366
        %1510 = vmatprep.subr.mxu0 0.0
        %1511 = vmatpush1.msra.mxu0 0.0
        %1512 = vmatprep.subr.mxu0 0.0
        %1513 = vmatpush1.msra.mxu0 0.0
        %1514 = vmatprep.subr.mxu0 0.0
        %1515 = vmatpush1.msra.mxu0 0.0
        %1516 = vmatprep.subr.mxu0 0.0
        %1517 = vmatpush1.msra.mxu0 0.0
        %1518 = vmatprep.subr.mxu0 0.0
        %1519 = vmatpush1.msra.mxu0 0.0
        %1520 = vmatprep.subr.mxu0 0.0
        %1521 = vmatpush1.msra.mxu0 0.0
        %1522 = vmatprep.subr.mxu0 0.0
        %1523 = vmatpush1.msra.mxu0 0.0
        %1524 = vmatprep.subr.mxu0 0.0
        %1525 = vmatpush1.msra.mxu0 0.0
        %1526 = vmatprep.subr.mxu0 0.0
        %1527 = vmatpush1.msra.mxu0 0.0
        %1528 = vmatprep.subr.mxu0 0.0
        %1529 = vmatpush1.msra.mxu0 0.0
        %1530 = vmatprep.subr.mxu0 0.0
        %1531 = vmatpush1.msra.mxu0 0.0
        %1532 = vmatprep.subr.mxu0 0.0
        %1533 = vmatpush1.msra.mxu0 0.0
        %1534 = vmatprep.subr.mxu0 0.0
        %1535 = vmatpush1.msra.mxu0 0.0
        %1536 = vmatprep.subr.mxu0 0.0
        %1537 = vmatpush1.msra.mxu0 0.0
        %1538 = vmatprep.subr.mxu0 0.0
        %1539 = vmatpush1.msra.mxu0 0.0
        %1540 = vmatprep.subr.mxu0 0.0
        %1541 = vmatpush1.msra.mxu0 0.0
        %1542 = vmatprep.subr.mxu0 0.0
        %1543 = vmatpush1.msra.mxu0 0.0
        %1544 = vmatprep.subr.mxu0 0.0
        %1545 = vmatpush1.msra.mxu0 0.0
        %1546 = vmatprep.subr.mxu0 0.0
        %1547 = vmatpush1.msra.mxu0 0.0
        %1548 = vmatprep.subr.mxu0 0.0
        %1549 = vmatpush1.msra.mxu0 0.0
        %1550 = vmatprep.subr.mxu0 0.0
        %1551 = vmatpush1.msra.mxu0 0.0
        %1552 = vmatprep.subr.mxu0 0.0
        %1553 = vmatpush1.msra.mxu0 0.0
        %1554 = vmatprep.subr.mxu0 0.0
        %1555 = vmatpush1.msra.mxu0 0.0
        %1556 = vmatprep.subr.mxu0 0.0
        %1557 = vmatpush1.msra.mxu0 0.0
        %1558 = vmatprep.subr.mxu0 0.0
        %1559 = vmatpush1.msra.mxu0 0.0
        %1560 = vmatprep.subr.mxu0 0.0
        %1561 = vmatpush1.msra.mxu0 0.0
        %1562 = vmatprep.subr.mxu0 0.0
        %1563 = vmatpush1.msra.mxu0 0.0
        %1564 = vmatprep.subr.mxu0 0.0
        %1565 = vmatpush1.msra.mxu0 0.0
        %1566 = vmatprep.subr.mxu0 0.0
        %1567 = vmatpush1.msra.mxu0 0.0
        %1568 = vmatprep.subr.mxu0 0.0
        %1569 = vmatpush1.msra.mxu0 0.0
        %1570 = vmatprep.mubr.f32.mxu0 0.0
        %1571 = vmatmul.mubr.f32.gmra.mrb[0].mxu0 %v1502
        %v1572 = vpop.f32.mrb[0].mxu0
        %v1573 = vadd.f32 %v1490, %v1572
        %v1574 = vpop.f32.mrb[0].mxu0
        %1575 = vmatprep.mubr.f32.mxu0 0.0
        %1576 = vmatmul.mubr.f32.gmra.mrb[0].mxu0 %v1504
        %v1577 = vpop.f32.mrb[0].mxu0
        %v1578 = vadd.f32 %v1495, %v1577
        %v1579 = vpop.f32.mrb[0].mxu0
        %1580 = vdwg.mxu0
        %1581 = vst.msk [vmem:[%s215 + $0x18] sm:$0xff] %vm533, %v1573
        %1583 = vrot.lane.b32.xlu0 %v1578, 32
        %v1584 = vpop.permute.xlu0 %1583
        %1586 = vst.msk [vmem:[%s215 + $0x18] sm:$0xff] %vm539, %v1584
        %1587 = vrot.lane.b32.xlu0 %v355, 16
        %v1588 = vpop.permute.xlu0 %1587
        %1589 = vrot.lane.b32.xlu0 %v361, 16
        %v1590 = vpop.permute.xlu0 %1589
        %v1591 = vsel %vm370, %v1588, 0
        %v1593 = vsel %vm370, %v1590, 0
        %1595 = vmatprep.subr.mxu0 0.0
        %1596 = vmatpush1.msra.mxu0 %v368
        %1597 = vmatprep.subr.mxu0 0.0
        %1598 = vmatpush1.msra.mxu0 %v369
        %1599 = vmatprep.subr.mxu0 0.0
        %1600 = vmatpush1.msra.mxu0 0.0
        %1601 = vmatprep.subr.mxu0 0.0
        %1602 = vmatpush1.msra.mxu0 0.0
        %1603 = vmatprep.subr.mxu0 0.0
        %1604 = vmatpush1.msra.mxu0 0.0
        %1605 = vmatprep.subr.mxu0 0.0
        %1606 = vmatpush1.msra.mxu0 0.0
        %1607 = vmatprep.subr.mxu0 0.0
        %1608 = vmatpush1.msra.mxu0 0.0
        %1609 = vmatprep.subr.mxu0 0.0
        %1610 = vmatpush1.msra.mxu0 0.0
        %1611 = vmatprep.subr.mxu0 0.0
        %1612 = vmatpush1.msra.mxu0 0.0
        %1613 = vmatprep.subr.mxu0 0.0
        %1614 = vmatpush1.msra.mxu0 0.0
        %1615 = vmatprep.subr.mxu0 0.0
        %1616 = vmatpush1.msra.mxu0 0.0
        %1617 = vmatprep.subr.mxu0 0.0
        %1618 = vmatpush1.msra.mxu0 0.0
        %1619 = vmatprep.subr.mxu0 0.0
        %1620 = vmatpush1.msra.mxu0 0.0
        %1621 = vmatprep.subr.mxu0 0.0
        %1622 = vmatpush1.msra.mxu0 0.0
        %1623 = vmatprep.subr.mxu0 0.0
        %1624 = vmatpush1.msra.mxu0 0.0
        %1625 = vmatprep.subr.mxu0 0.0
        %1626 = vmatpush1.msra.mxu0 0.0
        %1627 = vmatprep.subr.mxu0 0.0
        %1628 = vmatpush1.msra.mxu0 0.0
        %1629 = vmatprep.subr.mxu0 0.0
        %1630 = vmatpush1.msra.mxu0 0.0
        %1631 = vmatprep.subr.mxu0 0.0
        %1632 = vmatpush1.msra.mxu0 0.0
        %1633 = vmatprep.subr.mxu0 0.0
        %1634 = vmatpush1.msra.mxu0 0.0
        %1635 = vmatprep.subr.mxu0 0.0
        %1636 = vmatpush1.msra.mxu0 0.0
        %1637 = vmatprep.subr.mxu0 0.0
        %1638 = vmatpush1.msra.mxu0 0.0
        %1639 = vmatprep.subr.mxu0 0.0
        %1640 = vmatpush1.msra.mxu0 0.0
        %1641 = vmatprep.subr.mxu0 0.0
        %1642 = vmatpush1.msra.mxu0 0.0
        %1643 = vmatprep.subr.mxu0 0.0
        %1644 = vmatpush1.msra.mxu0 0.0
        %1645 = vmatprep.subr.mxu0 0.0
        %1646 = vmatpush1.msra.mxu0 0.0
        %1647 = vmatprep.subr.mxu0 0.0
        %1648 = vmatpush1.msra.mxu0 0.0
        %1649 = vmatprep.subr.mxu0 0.0
        %1650 = vmatpush1.msra.mxu0 0.0
        %1651 = vmatprep.subr.mxu0 0.0
        %1652 = vmatpush1.msra.mxu0 0.0
        %1653 = vmatprep.subr.mxu0 0.0
        %1654 = vmatpush1.msra.mxu0 0.0
        %1655 = vmatprep.subr.mxu0 0.0
        %1656 = vmatpush1.msra.mxu0 0.0
        %1657 = vmatprep.subr.mxu0 0.0
        %1658 = vmatpush1.msra.mxu0 0.0
        %1659 = vmatprep.mubr.f32.mxu0 0.0
        %1660 = vmatmul.mubr.f32.gmra.mrb[0].mxu0 %v1591
        %v1661 = vpop.f32.mrb[0].mxu0
        %v1662 = vadd.f32 0.0, %v1661
        %v1663 = vpop.f32.mrb[0].mxu0
        %1664 = vmatprep.mubr.f32.mxu0 0.0
        %1665 = vmatmul.mubr.f32.gmra.mrb[0].mxu0 %v1593
        %v1666 = vpop.f32.mrb[0].mxu0
        %v1667 = vadd.f32 0.0, %v1666
        %v1668 = vpop.f32.mrb[0].mxu0
        %1669 = vdwg.mxu0
        %1670 = vrot.lane.b32.xlu0 %v343, 16
        %v1671 = vpop.permute.xlu0 %1670
        %1672 = vrot.lane.b32.xlu0 %v349, 16
        %v1673 = vpop.permute.xlu0 %1672
        %v1674 = vsel %vm370, %v1671, 0
        %v1676 = vsel %vm370, %v1673, 0
        %1678 = vmatprep.subr.mxu0 0.0
        %1679 = vmatpush1.msra.mxu0 %v365
        %1680 = vmatprep.subr.mxu0 0.0
        %1681 = vmatpush1.msra.mxu0 %v366
        %1682 = vmatprep.subr.mxu0 0.0
        %1683 = vmatpush1.msra.mxu0 0.0
        %1684 = vmatprep.subr.mxu0 0.0
        %1685 = vmatpush1.msra.mxu0 0.0
        %1686 = vmatprep.subr.mxu0 0.0
        %1687 = vmatpush1.msra.mxu0 0.0
        %1688 = vmatprep.subr.mxu0 0.0
        %1689 = vmatpush1.msra.mxu0 0.0
        %1690 = vmatprep.subr.mxu0 0.0
        %1691 = vmatpush1.msra.mxu0 0.0
        %1692 = vmatprep.subr.mxu0 0.0
        %1693 = vmatpush1.msra.mxu0 0.0
        %1694 = vmatprep.subr.mxu0 0.0
        %1695 = vmatpush1.msra.mxu0 0.0
        %1696 = vmatprep.subr.mxu0 0.0
        %1697 = vmatpush1.msra.mxu0 0.0
        %1698 = vmatprep.subr.mxu0 0.0
        %1699 = vmatpush1.msra.mxu0 0.0
        %1700 = vmatprep.subr.mxu0 0.0
        %1701 = vmatpush1.msra.mxu0 0.0
        %1702 = vmatprep.subr.mxu0 0.0
        %1703 = vmatpush1.msra.mxu0 0.0
        %1704 = vmatprep.subr.mxu0 0.0
        %1705 = vmatpush1.msra.mxu0 0.0
        %1706 = vmatprep.subr.mxu0 0.0
        %1707 = vmatpush1.msra.mxu0 0.0
        %1708 = vmatprep.subr.mxu0 0.0
        %1709 = vmatpush1.msra.mxu0 0.0
        %1710 = vmatprep.subr.mxu0 0.0
        %1711 = vmatpush1.msra.mxu0 0.0
        %1712 = vmatprep.subr.mxu0 0.0
        %1713 = vmatpush1.msra.mxu0 0.0
        %1714 = vmatprep.subr.mxu0 0.0
        %1715 = vmatpush1.msra.mxu0 0.0
        %1716 = vmatprep.subr.mxu0 0.0
        %1717 = vmatpush1.msra.mxu0 0.0
        %1718 = vmatprep.subr.mxu0 0.0
        %1719 = vmatpush1.msra.mxu0 0.0
        %1720 = vmatprep.subr.mxu0 0.0
        %1721 = vmatpush1.msra.mxu0 0.0
        %1722 = vmatprep.subr.mxu0 0.0
        %1723 = vmatpush1.msra.mxu0 0.0
        %1724 = vmatprep.subr.mxu0 0.0
        %1725 = vmatpush1.msra.mxu0 0.0
        %1726 = vmatprep.subr.mxu0 0.0
        %1727 = vmatpush1.msra.mxu0 0.0
        %1728 = vmatprep.subr.mxu0 0.0
        %1729 = vmatpush1.msra.mxu0 0.0
        %1730 = vmatprep.subr.mxu0 0.0
        %1731 = vmatpush1.msra.mxu0 0.0
        %1732 = vmatprep.subr.mxu0 0.0
        %1733 = vmatpush1.msra.mxu0 0.0
        %1734 = vmatprep.subr.mxu0 0.0
        %1735 = vmatpush1.msra.mxu0 0.0
        %1736 = vmatprep.subr.mxu0 0.0
        %1737 = vmatpush1.msra.mxu0 0.0
        %1738 = vmatprep.subr.mxu0 0.0
        %1739 = vmatpush1.msra.mxu0 0.0
        %1740 = vmatprep.subr.mxu0 0.0
        %1741 = vmatpush1.msra.mxu0 0.0
        %1742 = vmatprep.mubr.f32.mxu0 0.0
        %1743 = vmatmul.mubr.f32.gmra.mrb[0].mxu0 %v1674
        %v1744 = vpop.f32.mrb[0].mxu0
        %v1745 = vadd.f32 %v1662, %v1744
        %v1746 = vpop.f32.mrb[0].mxu0
        %1747 = vmatprep.mubr.f32.mxu0 0.0
        %1748 = vmatmul.mubr.f32.gmra.mrb[0].mxu0 %v1676
        %v1749 = vpop.f32.mrb[0].mxu0
        %v1750 = vadd.f32 %v1667, %v1749
        %v1751 = vpop.f32.mrb[0].mxu0
        %1752 = vdwg.mxu0
        %1754 = vrot.lane.b32.xlu0 %v1745, 64
        %v1755 = vpop.permute.xlu0 %1754
        %1757 = vst.msk [vmem:[%s215 + $0x18] sm:$0xff] %vm711, %v1755
        %1759 = vrot.lane.b32.xlu0 %v1750, 96
        %v1760 = vpop.permute.xlu0 %1759
        %1762 = vst.msk [vmem:[%s215 + $0x18] sm:$0xff] %vm717, %v1760
        %v1764 = vsel %vm370, %v357, 0
        %v1767 = vsel %vm370, %v363, 0
        %1769 = vmatprep.subr.mxu0 0.0
        %1770 = vmatpush1.msra.mxu0 %v368
        %1771 = vmatprep.subr.mxu0 0.0
        %1772 = vmatpush1.msra.mxu0 %v369
        %1773 = vmatprep.subr.mxu0 0.0
        %1774 = vmatpush1.msra.mxu0 0.0
        %1775 = vmatprep.subr.mxu0 0.0
        %1776 = vmatpush1.msra.mxu0 0.0
        %1777 = vmatprep.subr.mxu0 0.0
        %1778 = vmatpush1.msra.mxu0 0.0
        %1779 = vmatprep.subr.mxu0 0.0
        %1780 = vmatpush1.msra.mxu0 0.0
        %1781 = vmatprep.subr.mxu0 0.0
        %1782 = vmatpush1.msra.mxu0 0.0
        %1783 = vmatprep.subr.mxu0 0.0
        %1784 = vmatpush1.msra.mxu0 0.0
        %1785 = vmatprep.subr.mxu0 0.0
        %1786 = vmatpush1.msra.mxu0 0.0
        %1787 = vmatprep.subr.mxu0 0.0
        %1788 = vmatpush1.msra.mxu0 0.0
        %1789 = vmatprep.subr.mxu0 0.0
        %1790 = vmatpush1.msra.mxu0 0.0
        %1791 = vmatprep.subr.mxu0 0.0
        %1792 = vmatpush1.msra.mxu0 0.0
        %1793 = vmatprep.subr.mxu0 0.0
        %1794 = vmatpush1.msra.mxu0 0.0
        %1795 = vmatprep.subr.mxu0 0.0
        %1796 = vmatpush1.msra.mxu0 0.0
        %1797 = vmatprep.subr.mxu0 0.0
        %1798 = vmatpush1.msra.mxu0 0.0
        %1799 = vmatprep.subr.mxu0 0.0
        %1800 = vmatpush1.msra.mxu0 0.0
        %1801 = vmatprep.subr.mxu0 0.0
        %1802 = vmatpush1.msra.mxu0 0.0
        %1803 = vmatprep.subr.mxu0 0.0
        %1804 = vmatpush1.msra.mxu0 0.0
        %1805 = vmatprep.subr.mxu0 0.0
        %1806 = vmatpush1.msra.mxu0 0.0
        %1807 = vmatprep.subr.mxu0 0.0
        %1808 = vmatpush1.msra.mxu0 0.0
        %1809 = vmatprep.subr.mxu0 0.0
        %1810 = vmatpush1.msra.mxu0 0.0
        %1811 = vmatprep.subr.mxu0 0.0
        %1812 = vmatpush1.msra.mxu0 0.0
        %1813 = vmatprep.subr.mxu0 0.0
        %1814 = vmatpush1.msra.mxu0 0.0
        %1815 = vmatprep.subr.mxu0 0.0
        %1816 = vmatpush1.msra.mxu0 0.0
        %1817 = vmatprep.subr.mxu0 0.0
        %1818 = vmatpush1.msra.mxu0 0.0
        %1819 = vmatprep.subr.mxu0 0.0
        %1820 = vmatpush1.msra.mxu0 0.0
        %1821 = vmatprep.subr.mxu0 0.0
        %1822 = vmatpush1.msra.mxu0 0.0
        %1823 = vmatprep.subr.mxu0 0.0
        %1824 = vmatpush1.msra.mxu0 0.0
        %1825 = vmatprep.subr.mxu0 0.0
        %1826 = vmatpush1.msra.mxu0 0.0
        %1827 = vmatprep.subr.mxu0 0.0
        %1828 = vmatpush1.msra.mxu0 0.0
        %1829 = vmatprep.subr.mxu0 0.0
        %1830 = vmatpush1.msra.mxu0 0.0
        %1831 = vmatprep.subr.mxu0 0.0
        %1832 = vmatpush1.msra.mxu0 0.0
        %1833 = vmatprep.mubr.f32.mxu0 0.0
        %1834 = vmatmul.mubr.f32.gmra.mrb[0].mxu0 %v1764
        %v1835 = vpop.f32.mrb[0].mxu0
        %v1836 = vadd.f32 0.0, %v1835
        %v1837 = vpop.f32.mrb[0].mxu0
        %1838 = vmatprep.mubr.f32.mxu0 0.0
        %1839 = vmatmul.mubr.f32.gmra.mrb[0].mxu0 %v1767
        %v1840 = vpop.f32.mrb[0].mxu0
        %v1841 = vadd.f32 0.0, %v1840
        %v1842 = vpop.f32.mrb[0].mxu0
        %1843 = vdwg.mxu0
        %v1845 = vsel %vm370, %v345, 0
        %v1848 = vsel %vm370, %v351, 0
        %1850 = vmatprep.subr.mxu0 0.0
        %1851 = vmatpush1.msra.mxu0 %v365
        %1852 = vmatprep.subr.mxu0 0.0
        %1853 = vmatpush1.msra.mxu0 %v366
        %1854 = vmatprep.subr.mxu0 0.0
        %1855 = vmatpush1.msra.mxu0 0.0
        %1856 = vmatprep.subr.mxu0 0.0
        %1857 = vmatpush1.msra.mxu0 0.0
        %1858 = vmatprep.subr.mxu0 0.0
        %1859 = vmatpush1.msra.mxu0 0.0
        %1860 = vmatprep.subr.mxu0 0.0
        %1861 = vmatpush1.msra.mxu0 0.0
        %1862 = vmatprep.subr.mxu0 0.0
        %1863 = vmatpush1.msra.mxu0 0.0
        %1864 = vmatprep.subr.mxu0 0.0
        %1865 = vmatpush1.msra.mxu0 0.0
        %1866 = vmatprep.subr.mxu0 0.0
        %1867 = vmatpush1.msra.mxu0 0.0
        %1868 = vmatprep.subr.mxu0 0.0
        %1869 = vmatpush1.msra.mxu0 0.0
        %1870 = vmatprep.subr.mxu0 0.0
        %1871 = vmatpush1.msra.mxu0 0.0
        %1872 = vmatprep.subr.mxu0 0.0
        %1873 = vmatpush1.msra.mxu0 0.0
        %1874 = vmatprep.subr.mxu0 0.0
        %1875 = vmatpush1.msra.mxu0 0.0
        %1876 = vmatprep.subr.mxu0 0.0
        %1877 = vmatpush1.msra.mxu0 0.0
        %1878 = vmatprep.subr.mxu0 0.0
        %1879 = vmatpush1.msra.mxu0 0.0
        %1880 = vmatprep.subr.mxu0 0.0
        %1881 = vmatpush1.msra.mxu0 0.0
        %1882 = vmatprep.subr.mxu0 0.0
        %1883 = vmatpush1.msra.mxu0 0.0
        %1884 = vmatprep.subr.mxu0 0.0
        %1885 = vmatpush1.msra.mxu0 0.0
        %1886 = vmatprep.subr.mxu0 0.0
        %1887 = vmatpush1.msra.mxu0 0.0
        %1888 = vmatprep.subr.mxu0 0.0
        %1889 = vmatpush1.msra.mxu0 0.0
        %1890 = vmatprep.subr.mxu0 0.0
        %1891 = vmatpush1.msra.mxu0 0.0
        %1892 = vmatprep.subr.mxu0 0.0
        %1893 = vmatpush1.msra.mxu0 0.0
        %1894 = vmatprep.subr.mxu0 0.0
        %1895 = vmatpush1.msra.mxu0 0.0
        %1896 = vmatprep.subr.mxu0 0.0
        %1897 = vmatpush1.msra.mxu0 0.0
        %1898 = vmatprep.subr.mxu0 0.0
        %1899 = vmatpush1.msra.mxu0 0.0
        %1900 = vmatprep.subr.mxu0 0.0
        %1901 = vmatpush1.msra.mxu0 0.0
        %1902 = vmatprep.subr.mxu0 0.0
        %1903 = vmatpush1.msra.mxu0 0.0
        %1904 = vmatprep.subr.mxu0 0.0
        %1905 = vmatpush1.msra.mxu0 0.0
        %1906 = vmatprep.subr.mxu0 0.0
        %1907 = vmatpush1.msra.mxu0 0.0
        %1908 = vmatprep.subr.mxu0 0.0
        %1909 = vmatpush1.msra.mxu0 0.0
        %1910 = vmatprep.subr.mxu0 0.0
        %1911 = vmatpush1.msra.mxu0 0.0
        %1912 = vmatprep.subr.mxu0 0.0
        %1913 = vmatpush1.msra.mxu0 0.0
        %1914 = vmatprep.mubr.f32.mxu0 0.0
        %1915 = vmatmul.mubr.f32.gmra.mrb[0].mxu0 %v1845
        %v1916 = vpop.f32.mrb[0].mxu0
        %v1917 = vadd.f32 %v1836, %v1916
        %v1918 = vpop.f32.mrb[0].mxu0
        %1919 = vmatprep.mubr.f32.mxu0 0.0
        %1920 = vmatmul.mubr.f32.gmra.mrb[0].mxu0 %v1848
        %v1921 = vpop.f32.mrb[0].mxu0
        %v1922 = vadd.f32 %v1841, %v1921
        %v1923 = vpop.f32.mrb[0].mxu0
        %1924 = vdwg.mxu0
        %1925 = vst.msk [vmem:[%s215 + $0x20] sm:$0xff] %vm533, %v1917
        %1927 = vrot.lane.b32.xlu0 %v1922, 32
        %v1928 = vpop.permute.xlu0 %1927
        %1930 = vst.msk [vmem:[%s215 + $0x20] sm:$0xff] %vm539, %v1928
        %1931 = vrot.lane.b32.xlu0 %v357, 112
        %v1932 = vpop.permute.xlu0 %1931
        %1933 = vrot.lane.b32.xlu0 %v363, 112
        %v1934 = vpop.permute.xlu0 %1933
        %v1935 = vsel %vm370, %v1932, 0
        %v1937 = vsel %vm370, %v1934, 0
        %1939 = vmatprep.subr.mxu0 0.0
        %1940 = vmatpush1.msra.mxu0 %v368
        %1941 = vmatprep.subr.mxu0 0.0
        %1942 = vmatpush1.msra.mxu0 %v369
        %1943 = vmatprep.subr.mxu0 0.0
        %1944 = vmatpush1.msra.mxu0 0.0
        %1945 = vmatprep.subr.mxu0 0.0
        %1946 = vmatpush1.msra.mxu0 0.0
        %1947 = vmatprep.subr.mxu0 0.0
        %1948 = vmatpush1.msra.mxu0 0.0
        %1949 = vmatprep.subr.mxu0 0.0
        %1950 = vmatpush1.msra.mxu0 0.0
        %1951 = vmatprep.subr.mxu0 0.0
        %1952 = vmatpush1.msra.mxu0 0.0
        %1953 = vmatprep.subr.mxu0 0.0
        %1954 = vmatpush1.msra.mxu0 0.0
        %1955 = vmatprep.subr.mxu0 0.0
        %1956 = vmatpush1.msra.mxu0 0.0
        %1957 = vmatprep.subr.mxu0 0.0
        %1958 = vmatpush1.msra.mxu0 0.0
        %1959 = vmatprep.subr.mxu0 0.0
        %1960 = vmatpush1.msra.mxu0 0.0
        %1961 = vmatprep.subr.mxu0 0.0
        %1962 = vmatpush1.msra.mxu0 0.0
        %1963 = vmatprep.subr.mxu0 0.0
        %1964 = vmatpush1.msra.mxu0 0.0
        %1965 = vmatprep.subr.mxu0 0.0
        %1966 = vmatpush1.msra.mxu0 0.0
        %1967 = vmatprep.subr.mxu0 0.0
        %1968 = vmatpush1.msra.mxu0 0.0
        %1969 = vmatprep.subr.mxu0 0.0
        %1970 = vmatpush1.msra.mxu0 0.0
        %1971 = vmatprep.subr.mxu0 0.0
        %1972 = vmatpush1.msra.mxu0 0.0
        %1973 = vmatprep.subr.mxu0 0.0
        %1974 = vmatpush1.msra.mxu0 0.0
        %1975 = vmatprep.subr.mxu0 0.0
        %1976 = vmatpush1.msra.mxu0 0.0
        %1977 = vmatprep.subr.mxu0 0.0
        %1978 = vmatpush1.msra.mxu0 0.0
        %1979 = vmatprep.subr.mxu0 0.0
        %1980 = vmatpush1.msra.mxu0 0.0
        %1981 = vmatprep.subr.mxu0 0.0
        %1982 = vmatpush1.msra.mxu0 0.0
        %1983 = vmatprep.subr.mxu0 0.0
        %1984 = vmatpush1.msra.mxu0 0.0
        %1985 = vmatprep.subr.mxu0 0.0
        %1986 = vmatpush1.msra.mxu0 0.0
        %1987 = vmatprep.subr.mxu0 0.0
        %1988 = vmatpush1.msra.mxu0 0.0
        %1989 = vmatprep.subr.mxu0 0.0
        %1990 = vmatpush1.msra.mxu0 0.0
        %1991 = vmatprep.subr.mxu0 0.0
        %1992 = vmatpush1.msra.mxu0 0.0
        %1993 = vmatprep.subr.mxu0 0.0
        %1994 = vmatpush1.msra.mxu0 0.0
        %1995 = vmatprep.subr.mxu0 0.0
        %1996 = vmatpush1.msra.mxu0 0.0
        %1997 = vmatprep.subr.mxu0 0.0
        %1998 = vmatpush1.msra.mxu0 0.0
        %1999 = vmatprep.subr.mxu0 0.0
        %2000 = vmatpush1.msra.mxu0 0.0
        %2001 = vmatprep.subr.mxu0 0.0
        %2002 = vmatpush1.msra.mxu0 0.0
        %2003 = vmatprep.mubr.f32.mxu0 0.0
        %2004 = vmatmul.mubr.f32.gmra.mrb[0].mxu0 %v1935
        %v2005 = vpop.f32.mrb[0].mxu0
        %v2006 = vadd.f32 0.0, %v2005
        %v2007 = vpop.f32.mrb[0].mxu0
        %2008 = vmatprep.mubr.f32.mxu0 0.0
        %2009 = vmatmul.mubr.f32.gmra.mrb[0].mxu0 %v1937
        %v2010 = vpop.f32.mrb[0].mxu0
        %v2011 = vadd.f32 0.0, %v2010
        %v2012 = vpop.f32.mrb[0].mxu0
        %2013 = vdwg.mxu0
        %2014 = vrot.lane.b32.xlu0 %v345, 112
        %v2015 = vpop.permute.xlu0 %2014
        %2016 = vrot.lane.b32.xlu0 %v351, 112
        %v2017 = vpop.permute.xlu0 %2016
        %v2018 = vsel %vm370, %v2015, 0
        %v2020 = vsel %vm370, %v2017, 0
        %2022 = vmatprep.subr.mxu0 0.0
        %2023 = vmatpush1.msra.mxu0 %v365
        %2024 = vmatprep.subr.mxu0 0.0
        %2025 = vmatpush1.msra.mxu0 %v366
        %2026 = vmatprep.subr.mxu0 0.0
        %2027 = vmatpush1.msra.mxu0 0.0
        %2028 = vmatprep.subr.mxu0 0.0
        %2029 = vmatpush1.msra.mxu0 0.0
        %2030 = vmatprep.subr.mxu0 0.0
        %2031 = vmatpush1.msra.mxu0 0.0
        %2032 = vmatprep.subr.mxu0 0.0
        %2033 = vmatpush1.msra.mxu0 0.0
        %2034 = vmatprep.subr.mxu0 0.0
        %2035 = vmatpush1.msra.mxu0 0.0
        %2036 = vmatprep.subr.mxu0 0.0
        %2037 = vmatpush1.msra.mxu0 0.0
        %2038 = vmatprep.subr.mxu0 0.0
        %2039 = vmatpush1.msra.mxu0 0.0
        %2040 = vmatprep.subr.mxu0 0.0
        %2041 = vmatpush1.msra.mxu0 0.0
        %2042 = vmatprep.subr.mxu0 0.0
        %2043 = vmatpush1.msra.mxu0 0.0
        %2044 = vmatprep.subr.mxu0 0.0
        %2045 = vmatpush1.msra.mxu0 0.0
        %2046 = vmatprep.subr.mxu0 0.0
        %2047 = vmatpush1.msra.mxu0 0.0
        %2048 = vmatprep.subr.mxu0 0.0
        %2049 = vmatpush1.msra.mxu0 0.0
        %2050 = vmatprep.subr.mxu0 0.0
        %2051 = vmatpush1.msra.mxu0 0.0
        %2052 = vmatprep.subr.mxu0 0.0
        %2053 = vmatpush1.msra.mxu0 0.0
        %2054 = vmatprep.subr.mxu0 0.0
        %2055 = vmatpush1.msra.mxu0 0.0
        %2056 = vmatprep.subr.mxu0 0.0
        %2057 = vmatpush1.msra.mxu0 0.0
        %2058 = vmatprep.subr.mxu0 0.0
        %2059 = vmatpush1.msra.mxu0 0.0
        %2060 = vmatprep.subr.mxu0 0.0
        %2061 = vmatpush1.msra.mxu0 0.0
        %2062 = vmatprep.subr.mxu0 0.0
        %2063 = vmatpush1.msra.mxu0 0.0
        %2064 = vmatprep.subr.mxu0 0.0
        %2065 = vmatpush1.msra.mxu0 0.0
        %2066 = vmatprep.subr.mxu0 0.0
        %2067 = vmatpush1.msra.mxu0 0.0
        %2068 = vmatprep.subr.mxu0 0.0
        %2069 = vmatpush1.msra.mxu0 0.0
        %2070 = vmatprep.subr.mxu0 0.0
        %2071 = vmatpush1.msra.mxu0 0.0
        %2072 = vmatprep.subr.mxu0 0.0
        %2073 = vmatpush1.msra.mxu0 0.0
        %2074 = vmatprep.subr.mxu0 0.0
        %2075 = vmatpush1.msra.mxu0 0.0
        %2076 = vmatprep.subr.mxu0 0.0
        %2077 = vmatpush1.msra.mxu0 0.0
        %2078 = vmatprep.subr.mxu0 0.0
        %2079 = vmatpush1.msra.mxu0 0.0
        %2080 = vmatprep.subr.mxu0 0.0
        %2081 = vmatpush1.msra.mxu0 0.0
        %2082 = vmatprep.subr.mxu0 0.0
        %2083 = vmatpush1.msra.mxu0 0.0
        %2084 = vmatprep.subr.mxu0 0.0
        %2085 = vmatpush1.msra.mxu0 0.0
        %2086 = vmatprep.mubr.f32.mxu0 0.0
        %2087 = vmatmul.mubr.f32.gmra.mrb[0].mxu0 %v2018
        %v2088 = vpop.f32.mrb[0].mxu0
        %v2089 = vadd.f32 %v2006, %v2088
        %v2090 = vpop.f32.mrb[0].mxu0
        %2091 = vmatprep.mubr.f32.mxu0 0.0
        %2092 = vmatmul.mubr.f32.gmra.mrb[0].mxu0 %v2020
        %v2093 = vpop.f32.mrb[0].mxu0
        %v2094 = vadd.f32 %v2011, %v2093
        %v2095 = vpop.f32.mrb[0].mxu0
        %2096 = vdwg.mxu0
        %2098 = vrot.lane.b32.xlu0 %v2089, 64
        %v2099 = vpop.permute.xlu0 %2098
        %2101 = vst.msk [vmem:[%s215 + $0x20] sm:$0xff] %vm711, %v2099
        %2103 = vrot.lane.b32.xlu0 %v2094, 96
        %v2104 = vpop.permute.xlu0 %2103
        %2106 = vst.msk [vmem:[%s215 + $0x20] sm:$0xff] %vm717, %v2104
        %2107 = vrot.lane.b32.xlu0 %v357, 96
        %v2108 = vpop.permute.xlu0 %2107
        %2109 = vrot.lane.b32.xlu0 %v363, 96
        %v2110 = vpop.permute.xlu0 %2109
        %v2111 = vsel %vm370, %v2108, 0
        %v2113 = vsel %vm370, %v2110, 0
        %2115 = vmatprep.subr.mxu0 0.0
        %2116 = vmatpush1.msra.mxu0 %v368
        %2117 = vmatprep.subr.mxu0 0.0
        %2118 = vmatpush1.msra.mxu0 %v369
        %2119 = vmatprep.subr.mxu0 0.0
        %2120 = vmatpush1.msra.mxu0 0.0
        %2121 = vmatprep.subr.mxu0 0.0
        %2122 = vmatpush1.msra.mxu0 0.0
        %2123 = vmatprep.subr.mxu0 0.0
        %2124 = vmatpush1.msra.mxu0 0.0
        %2125 = vmatprep.subr.mxu0 0.0
        %2126 = vmatpush1.msra.mxu0 0.0
        %2127 = vmatprep.subr.mxu0 0.0
        %2128 = vmatpush1.msra.mxu0 0.0
        %2129 = vmatprep.subr.mxu0 0.0
        %2130 = vmatpush1.msra.mxu0 0.0
        %2131 = vmatprep.subr.mxu0 0.0
        %2132 = vmatpush1.msra.mxu0 0.0
        %2133 = vmatprep.subr.mxu0 0.0
        %2134 = vmatpush1.msra.mxu0 0.0
        %2135 = vmatprep.subr.mxu0 0.0
        %2136 = vmatpush1.msra.mxu0 0.0
        %2137 = vmatprep.subr.mxu0 0.0
        %2138 = vmatpush1.msra.mxu0 0.0
        %2139 = vmatprep.subr.mxu0 0.0
        %2140 = vmatpush1.msra.mxu0 0.0
        %2141 = vmatprep.subr.mxu0 0.0
        %2142 = vmatpush1.msra.mxu0 0.0
        %2143 = vmatprep.subr.mxu0 0.0
        %2144 = vmatpush1.msra.mxu0 0.0
        %2145 = vmatprep.subr.mxu0 0.0
        %2146 = vmatpush1.msra.mxu0 0.0
        %2147 = vmatprep.subr.mxu0 0.0
        %2148 = vmatpush1.msra.mxu0 0.0
        %2149 = vmatprep.subr.mxu0 0.0
        %2150 = vmatpush1.msra.mxu0 0.0
        %2151 = vmatprep.subr.mxu0 0.0
        %2152 = vmatpush1.msra.mxu0 0.0
        %2153 = vmatprep.subr.mxu0 0.0
        %2154 = vmatpush1.msra.mxu0 0.0
        %2155 = vmatprep.subr.mxu0 0.0
        %2156 = vmatpush1.msra.mxu0 0.0
        %2157 = vmatprep.subr.mxu0 0.0
        %2158 = vmatpush1.msra.mxu0 0.0
        %2159 = vmatprep.subr.mxu0 0.0
        %2160 = vmatpush1.msra.mxu0 0.0
        %2161 = vmatprep.subr.mxu0 0.0
        %2162 = vmatpush1.msra.mxu0 0.0
        %2163 = vmatprep.subr.mxu0 0.0
        %2164 = vmatpush1.msra.mxu0 0.0
        %2165 = vmatprep.subr.mxu0 0.0
        %2166 = vmatpush1.msra.mxu0 0.0
        %2167 = vmatprep.subr.mxu0 0.0
        %2168 = vmatpush1.msra.mxu0 0.0
        %2169 = vmatprep.subr.mxu0 0.0
        %2170 = vmatpush1.msra.mxu0 0.0
        %2171 = vmatprep.subr.mxu0 0.0
        %2172 = vmatpush1.msra.mxu0 0.0
        %2173 = vmatprep.subr.mxu0 0.0
        %2174 = vmatpush1.msra.mxu0 0.0
        %2175 = vmatprep.subr.mxu0 0.0
        %2176 = vmatpush1.msra.mxu0 0.0
        %2177 = vmatprep.subr.mxu0 0.0
        %2178 = vmatpush1.msra.mxu0 0.0
        %2179 = vmatprep.mubr.f32.mxu0 0.0
        %2180 = vmatmul.mubr.f32.gmra.mrb[0].mxu0 %v2111
        %v2181 = vpop.f32.mrb[0].mxu0
        %v2182 = vadd.f32 0.0, %v2181
        %v2183 = vpop.f32.mrb[0].mxu0
        %2184 = vmatprep.mubr.f32.mxu0 0.0
        %2185 = vmatmul.mubr.f32.gmra.mrb[0].mxu0 %v2113
        %v2186 = vpop.f32.mrb[0].mxu0
        %v2187 = vadd.f32 0.0, %v2186
        %v2188 = vpop.f32.mrb[0].mxu0
        %2189 = vdwg.mxu0
        %2190 = vrot.lane.b32.xlu0 %v345, 96
        %v2191 = vpop.permute.xlu0 %2190
        %2192 = vrot.lane.b32.xlu0 %v351, 96
        %v2193 = vpop.permute.xlu0 %2192
        %v2194 = vsel %vm370, %v2191, 0
        %v2196 = vsel %vm370, %v2193, 0
        %2198 = vmatprep.subr.mxu0 0.0
        %2199 = vmatpush1.msra.mxu0 %v365
        %2200 = vmatprep.subr.mxu0 0.0
        %2201 = vmatpush1.msra.mxu0 %v366
        %2202 = vmatprep.subr.mxu0 0.0
        %2203 = vmatpush1.msra.mxu0 0.0
        %2204 = vmatprep.subr.mxu0 0.0
        %2205 = vmatpush1.msra.mxu0 0.0
        %2206 = vmatprep.subr.mxu0 0.0
        %2207 = vmatpush1.msra.mxu0 0.0
        %2208 = vmatprep.subr.mxu0 0.0
        %2209 = vmatpush1.msra.mxu0 0.0
        %2210 = vmatprep.subr.mxu0 0.0
        %2211 = vmatpush1.msra.mxu0 0.0
        %2212 = vmatprep.subr.mxu0 0.0
        %2213 = vmatpush1.msra.mxu0 0.0
        %2214 = vmatprep.subr.mxu0 0.0
        %2215 = vmatpush1.msra.mxu0 0.0
        %2216 = vmatprep.subr.mxu0 0.0
        %2217 = vmatpush1.msra.mxu0 0.0
        %2218 = vmatprep.subr.mxu0 0.0
        %2219 = vmatpush1.msra.mxu0 0.0
        %2220 = vmatprep.subr.mxu0 0.0
        %2221 = vmatpush1.msra.mxu0 0.0
        %2222 = vmatprep.subr.mxu0 0.0
        %2223 = vmatpush1.msra.mxu0 0.0
        %2224 = vmatprep.subr.mxu0 0.0
        %2225 = vmatpush1.msra.mxu0 0.0
        %2226 = vmatprep.subr.mxu0 0.0
        %2227 = vmatpush1.msra.mxu0 0.0
        %2228 = vmatprep.subr.mxu0 0.0
        %2229 = vmatpush1.msra.mxu0 0.0
        %2230 = vmatprep.subr.mxu0 0.0
        %2231 = vmatpush1.msra.mxu0 0.0
        %2232 = vmatprep.subr.mxu0 0.0
        %2233 = vmatpush1.msra.mxu0 0.0
        %2234 = vmatprep.subr.mxu0 0.0
        %2235 = vmatpush1.msra.mxu0 0.0
        %2236 = vmatprep.subr.mxu0 0.0
        %2237 = vmatpush1.msra.mxu0 0.0
        %2238 = vmatprep.subr.mxu0 0.0
        %2239 = vmatpush1.msra.mxu0 0.0
        %2240 = vmatprep.subr.mxu0 0.0
        %2241 = vmatpush1.msra.mxu0 0.0
        %2242 = vmatprep.subr.mxu0 0.0
        %2243 = vmatpush1.msra.mxu0 0.0
        %2244 = vmatprep.subr.mxu0 0.0
        %2245 = vmatpush1.msra.mxu0 0.0
        %2246 = vmatprep.subr.mxu0 0.0
        %2247 = vmatpush1.msra.mxu0 0.0
        %2248 = vmatprep.subr.mxu0 0.0
        %2249 = vmatpush1.msra.mxu0 0.0
        %2250 = vmatprep.subr.mxu0 0.0
        %2251 = vmatpush1.msra.mxu0 0.0
        %2252 = vmatprep.subr.mxu0 0.0
        %2253 = vmatpush1.msra.mxu0 0.0
        %2254 = vmatprep.subr.mxu0 0.0
        %2255 = vmatpush1.msra.mxu0 0.0
        %2256 = vmatprep.subr.mxu0 0.0
        %2257 = vmatpush1.msra.mxu0 0.0
        %2258 = vmatprep.subr.mxu0 0.0
        %2259 = vmatpush1.msra.mxu0 0.0
        %2260 = vmatprep.subr.mxu0 0.0
        %2261 = vmatpush1.msra.mxu0 0.0
        %2262 = vmatprep.mubr.f32.mxu0 0.0
        %2263 = vmatmul.mubr.f32.gmra.mrb[0].mxu0 %v2194
        %v2264 = vpop.f32.mrb[0].mxu0
        %v2265 = vadd.f32 %v2182, %v2264
        %v2266 = vpop.f32.mrb[0].mxu0
        %2267 = vmatprep.mubr.f32.mxu0 0.0
        %2268 = vmatmul.mubr.f32.gmra.mrb[0].mxu0 %v2196
        %v2269 = vpop.f32.mrb[0].mxu0
        %v2270 = vadd.f32 %v2187, %v2269
        %v2271 = vpop.f32.mrb[0].mxu0
        %2272 = vdwg.mxu0
        %2273 = vst.msk [vmem:[%s215 + $0x28] sm:$0xff] %vm533, %v2265
        %2275 = vrot.lane.b32.xlu0 %v2270, 32
        %v2276 = vpop.permute.xlu0 %2275
        %2278 = vst.msk [vmem:[%s215 + $0x28] sm:$0xff] %vm539, %v2276
        %2279 = vrot.lane.b32.xlu0 %v357, 80
        %v2280 = vpop.permute.xlu0 %2279
        %2281 = vrot.lane.b32.xlu0 %v363, 80
        %v2282 = vpop.permute.xlu0 %2281
        %v2283 = vsel %vm370, %v2280, 0
        %v2285 = vsel %vm370, %v2282, 0
        %2287 = vmatprep.subr.mxu0 0.0
        %2288 = vmatpush1.msra.mxu0 %v368
        %2289 = vmatprep.subr.mxu0 0.0
        %2290 = vmatpush1.msra.mxu0 %v369
        %2291 = vmatprep.subr.mxu0 0.0
        %2292 = vmatpush1.msra.mxu0 0.0
        %2293 = vmatprep.subr.mxu0 0.0
        %2294 = vmatpush1.msra.mxu0 0.0
        %2295 = vmatprep.subr.mxu0 0.0
        %2296 = vmatpush1.msra.mxu0 0.0
        %2297 = vmatprep.subr.mxu0 0.0
        %2298 = vmatpush1.msra.mxu0 0.0
        %2299 = vmatprep.subr.mxu0 0.0
        %2300 = vmatpush1.msra.mxu0 0.0
        %2301 = vmatprep.subr.mxu0 0.0
        %2302 = vmatpush1.msra.mxu0 0.0
        %2303 = vmatprep.subr.mxu0 0.0
        %2304 = vmatpush1.msra.mxu0 0.0
        %2305 = vmatprep.subr.mxu0 0.0
        %2306 = vmatpush1.msra.mxu0 0.0
        %2307 = vmatprep.subr.mxu0 0.0
        %2308 = vmatpush1.msra.mxu0 0.0
        %2309 = vmatprep.subr.mxu0 0.0
        %2310 = vmatpush1.msra.mxu0 0.0
        %2311 = vmatprep.subr.mxu0 0.0
        %2312 = vmatpush1.msra.mxu0 0.0
        %2313 = vmatprep.subr.mxu0 0.0
        %2314 = vmatpush1.msra.mxu0 0.0
        %2315 = vmatprep.subr.mxu0 0.0
        %2316 = vmatpush1.msra.mxu0 0.0
        %2317 = vmatprep.subr.mxu0 0.0
        %2318 = vmatpush1.msra.mxu0 0.0
        %2319 = vmatprep.subr.mxu0 0.0
        %2320 = vmatpush1.msra.mxu0 0.0
        %2321 = vmatprep.subr.mxu0 0.0
        %2322 = vmatpush1.msra.mxu0 0.0
        %2323 = vmatprep.subr.mxu0 0.0
        %2324 = vmatpush1.msra.mxu0 0.0
        %2325 = vmatprep.subr.mxu0 0.0
        %2326 = vmatpush1.msra.mxu0 0.0
        %2327 = vmatprep.subr.mxu0 0.0
        %2328 = vmatpush1.msra.mxu0 0.0
        %2329 = vmatprep.subr.mxu0 0.0
        %2330 = vmatpush1.msra.mxu0 0.0
        %2331 = vmatprep.subr.mxu0 0.0
        %2332 = vmatpush1.msra.mxu0 0.0
        %2333 = vmatprep.subr.mxu0 0.0
        %2334 = vmatpush1.msra.mxu0 0.0
        %2335 = vmatprep.subr.mxu0 0.0
        %2336 = vmatpush1.msra.mxu0 0.0
        %2337 = vmatprep.subr.mxu0 0.0
        %2338 = vmatpush1.msra.mxu0 0.0
        %2339 = vmatprep.subr.mxu0 0.0
        %2340 = vmatpush1.msra.mxu0 0.0
        %2341 = vmatprep.subr.mxu0 0.0
        %2342 = vmatpush1.msra.mxu0 0.0
        %2343 = vmatprep.subr.mxu0 0.0
        %2344 = vmatpush1.msra.mxu0 0.0
        %2345 = vmatprep.subr.mxu0 0.0
        %2346 = vmatpush1.msra.mxu0 0.0
        %2347 = vmatprep.subr.mxu0 0.0
        %2348 = vmatpush1.msra.mxu0 0.0
        %2349 = vmatprep.subr.mxu0 0.0
        %2350 = vmatpush1.msra.mxu0 0.0
        %2351 = vmatprep.mubr.f32.mxu0 0.0
        %2352 = vmatmul.mubr.f32.gmra.mrb[0].mxu0 %v2283
        %v2353 = vpop.f32.mrb[0].mxu0
        %v2354 = vadd.f32 0.0, %v2353
        %v2355 = vpop.f32.mrb[0].mxu0
        %2356 = vmatprep.mubr.f32.mxu0 0.0
        %2357 = vmatmul.mubr.f32.gmra.mrb[0].mxu0 %v2285
        %v2358 = vpop.f32.mrb[0].mxu0
        %v2359 = vadd.f32 0.0, %v2358
        %v2360 = vpop.f32.mrb[0].mxu0
        %2361 = vdwg.mxu0
        %2362 = vrot.lane.b32.xlu0 %v345, 80
        %v2363 = vpop.permute.xlu0 %2362
        %2364 = vrot.lane.b32.xlu0 %v351, 80
        %v2365 = vpop.permute.xlu0 %2364
        %v2366 = vsel %vm370, %v2363, 0
        %v2368 = vsel %vm370, %v2365, 0
        %2370 = vmatprep.subr.mxu0 0.0
        %2371 = vmatpush1.msra.mxu0 %v365
        %2372 = vmatprep.subr.mxu0 0.0
        %2373 = vmatpush1.msra.mxu0 %v366
        %2374 = vmatprep.subr.mxu0 0.0
        %2375 = vmatpush1.msra.mxu0 0.0
        %2376 = vmatprep.subr.mxu0 0.0
        %2377 = vmatpush1.msra.mxu0 0.0
        %2378 = vmatprep.subr.mxu0 0.0
        %2379 = vmatpush1.msra.mxu0 0.0
        %2380 = vmatprep.subr.mxu0 0.0
        %2381 = vmatpush1.msra.mxu0 0.0
        %2382 = vmatprep.subr.mxu0 0.0
        %2383 = vmatpush1.msra.mxu0 0.0
        %2384 = vmatprep.subr.mxu0 0.0
        %2385 = vmatpush1.msra.mxu0 0.0
        %2386 = vmatprep.subr.mxu0 0.0
        %2387 = vmatpush1.msra.mxu0 0.0
        %2388 = vmatprep.subr.mxu0 0.0
        %2389 = vmatpush1.msra.mxu0 0.0
        %2390 = vmatprep.subr.mxu0 0.0
        %2391 = vmatpush1.msra.mxu0 0.0
        %2392 = vmatprep.subr.mxu0 0.0
        %2393 = vmatpush1.msra.mxu0 0.0
        %2394 = vmatprep.subr.mxu0 0.0
        %2395 = vmatpush1.msra.mxu0 0.0
        %2396 = vmatprep.subr.mxu0 0.0
        %2397 = vmatpush1.msra.mxu0 0.0
        %2398 = vmatprep.subr.mxu0 0.0
        %2399 = vmatpush1.msra.mxu0 0.0
        %2400 = vmatprep.subr.mxu0 0.0
        %2401 = vmatpush1.msra.mxu0 0.0
        %2402 = vmatprep.subr.mxu0 0.0
        %2403 = vmatpush1.msra.mxu0 0.0
        %2404 = vmatprep.subr.mxu0 0.0
        %2405 = vmatpush1.msra.mxu0 0.0
        %2406 = vmatprep.subr.mxu0 0.0
        %2407 = vmatpush1.msra.mxu0 0.0
        %2408 = vmatprep.subr.mxu0 0.0
        %2409 = vmatpush1.msra.mxu0 0.0
        %2410 = vmatprep.subr.mxu0 0.0
        %2411 = vmatpush1.msra.mxu0 0.0
        %2412 = vmatprep.subr.mxu0 0.0
        %2413 = vmatpush1.msra.mxu0 0.0
        %2414 = vmatprep.subr.mxu0 0.0
        %2415 = vmatpush1.msra.mxu0 0.0
        %2416 = vmatprep.subr.mxu0 0.0
        %2417 = vmatpush1.msra.mxu0 0.0
        %2418 = vmatprep.subr.mxu0 0.0
        %2419 = vmatpush1.msra.mxu0 0.0
        %2420 = vmatprep.subr.mxu0 0.0
        %2421 = vmatpush1.msra.mxu0 0.0
        %2422 = vmatprep.subr.mxu0 0.0
        %2423 = vmatpush1.msra.mxu0 0.0
        %2424 = vmatprep.subr.mxu0 0.0
        %2425 = vmatpush1.msra.mxu0 0.0
        %2426 = vmatprep.subr.mxu0 0.0
        %2427 = vmatpush1.msra.mxu0 0.0
        %2428 = vmatprep.subr.mxu0 0.0
        %2429 = vmatpush1.msra.mxu0 0.0
        %2430 = vmatprep.subr.mxu0 0.0
        %2431 = vmatpush1.msra.mxu0 0.0
        %2432 = vmatprep.subr.mxu0 0.0
        %2433 = vmatpush1.msra.mxu0 0.0
        %2434 = vmatprep.mubr.f32.mxu0 0.0
        %2435 = vmatmul.mubr.f32.gmra.mrb[0].mxu0 %v2366
        %v2436 = vpop.f32.mrb[0].mxu0
        %v2437 = vadd.f32 %v2354, %v2436
        %v2438 = vpop.f32.mrb[0].mxu0
        %2439 = vmatprep.mubr.f32.mxu0 0.0
        %2440 = vmatmul.mubr.f32.gmra.mrb[0].mxu0 %v2368
        %v2441 = vpop.f32.mrb[0].mxu0
        %v2442 = vadd.f32 %v2359, %v2441
        %v2443 = vpop.f32.mrb[0].mxu0
        %2444 = vdwg.mxu0
        %2446 = vrot.lane.b32.xlu0 %v2437, 64
        %v2447 = vpop.permute.xlu0 %2446
        %2449 = vst.msk [vmem:[%s215 + $0x28] sm:$0xff] %vm711, %v2447
        %2451 = vrot.lane.b32.xlu0 %v2442, 96
        %v2452 = vpop.permute.xlu0 %2451
        %2454 = vst.msk [vmem:[%s215 + $0x28] sm:$0xff] %vm717, %v2452
        %2455 = vrot.lane.b32.xlu0 %v357, 64
        %v2456 = vpop.permute.xlu0 %2455
        %2457 = vrot.lane.b32.xlu0 %v363, 64
        %v2458 = vpop.permute.xlu0 %2457
        %v2459 = vsel %vm370, %v2456, 0
        %v2461 = vsel %vm370, %v2458, 0
        %2463 = vmatprep.subr.mxu0 0.0
        %2464 = vmatpush1.msra.mxu0 %v368
        %2465 = vmatprep.subr.mxu0 0.0
        %2466 = vmatpush1.msra.mxu0 %v369
        %2467 = vmatprep.subr.mxu0 0.0
        %2468 = vmatpush1.msra.mxu0 0.0
        %2469 = vmatprep.subr.mxu0 0.0
        %2470 = vmatpush1.msra.mxu0 0.0
        %2471 = vmatprep.subr.mxu0 0.0
        %2472 = vmatpush1.msra.mxu0 0.0
        %2473 = vmatprep.subr.mxu0 0.0
        %2474 = vmatpush1.msra.mxu0 0.0
        %2475 = vmatprep.subr.mxu0 0.0
        %2476 = vmatpush1.msra.mxu0 0.0
        %2477 = vmatprep.subr.mxu0 0.0
        %2478 = vmatpush1.msra.mxu0 0.0
        %2479 = vmatprep.subr.mxu0 0.0
        %2480 = vmatpush1.msra.mxu0 0.0
        %2481 = vmatprep.subr.mxu0 0.0
        %2482 = vmatpush1.msra.mxu0 0.0
        %2483 = vmatprep.subr.mxu0 0.0
        %2484 = vmatpush1.msra.mxu0 0.0
        %2485 = vmatprep.subr.mxu0 0.0
        %2486 = vmatpush1.msra.mxu0 0.0
        %2487 = vmatprep.subr.mxu0 0.0
        %2488 = vmatpush1.msra.mxu0 0.0
        %2489 = vmatprep.subr.mxu0 0.0
        %2490 = vmatpush1.msra.mxu0 0.0
        %2491 = vmatprep.subr.mxu0 0.0
        %2492 = vmatpush1.msra.mxu0 0.0
        %2493 = vmatprep.subr.mxu0 0.0
        %2494 = vmatpush1.msra.mxu0 0.0
        %2495 = vmatprep.subr.mxu0 0.0
        %2496 = vmatpush1.msra.mxu0 0.0
        %2497 = vmatprep.subr.mxu0 0.0
        %2498 = vmatpush1.msra.mxu0 0.0
        %2499 = vmatprep.subr.mxu0 0.0
        %2500 = vmatpush1.msra.mxu0 0.0
        %2501 = vmatprep.subr.mxu0 0.0
        %2502 = vmatpush1.msra.mxu0 0.0
        %2503 = vmatprep.subr.mxu0 0.0
        %2504 = vmatpush1.msra.mxu0 0.0
        %2505 = vmatprep.subr.mxu0 0.0
        %2506 = vmatpush1.msra.mxu0 0.0
        %2507 = vmatprep.subr.mxu0 0.0
        %2508 = vmatpush1.msra.mxu0 0.0
        %2509 = vmatprep.subr.mxu0 0.0
        %2510 = vmatpush1.msra.mxu0 0.0
        %2511 = vmatprep.subr.mxu0 0.0
        %2512 = vmatpush1.msra.mxu0 0.0
        %2513 = vmatprep.subr.mxu0 0.0
        %2514 = vmatpush1.msra.mxu0 0.0
        %2515 = vmatprep.subr.mxu0 0.0
        %2516 = vmatpush1.msra.mxu0 0.0
        %2517 = vmatprep.subr.mxu0 0.0
        %2518 = vmatpush1.msra.mxu0 0.0
        %2519 = vmatprep.subr.mxu0 0.0
        %2520 = vmatpush1.msra.mxu0 0.0
        %2521 = vmatprep.subr.mxu0 0.0
        %2522 = vmatpush1.msra.mxu0 0.0
        %2523 = vmatprep.subr.mxu0 0.0
        %2524 = vmatpush1.msra.mxu0 0.0
        %2525 = vmatprep.subr.mxu0 0.0
        %2526 = vmatpush1.msra.mxu0 0.0
        %2527 = vmatprep.mubr.f32.mxu0 0.0
        %2528 = vmatmul.mubr.f32.gmra.mrb[0].mxu0 %v2459
        %v2529 = vpop.f32.mrb[0].mxu0
        %v2530 = vadd.f32 0.0, %v2529
        %v2531 = vpop.f32.mrb[0].mxu0
        %2532 = vmatprep.mubr.f32.mxu0 0.0
        %2533 = vmatmul.mubr.f32.gmra.mrb[0].mxu0 %v2461
        %v2534 = vpop.f32.mrb[0].mxu0
        %v2535 = vadd.f32 0.0, %v2534
        %v2536 = vpop.f32.mrb[0].mxu0
        %2537 = vdwg.mxu0
        %2538 = vrot.lane.b32.xlu0 %v345, 64
        %v2539 = vpop.permute.xlu0 %2538
        %2540 = vrot.lane.b32.xlu0 %v351, 64
        %v2541 = vpop.permute.xlu0 %2540
        %v2542 = vsel %vm370, %v2539, 0
        %v2544 = vsel %vm370, %v2541, 0
        %2546 = vmatprep.subr.mxu0 0.0
        %2547 = vmatpush1.msra.mxu0 %v365
        %2548 = vmatprep.subr.mxu0 0.0
        %2549 = vmatpush1.msra.mxu0 %v366
        %2550 = vmatprep.subr.mxu0 0.0
        %2551 = vmatpush1.msra.mxu0 0.0
        %2552 = vmatprep.subr.mxu0 0.0
        %2553 = vmatpush1.msra.mxu0 0.0
        %2554 = vmatprep.subr.mxu0 0.0
        %2555 = vmatpush1.msra.mxu0 0.0
        %2556 = vmatprep.subr.mxu0 0.0
        %2557 = vmatpush1.msra.mxu0 0.0
        %2558 = vmatprep.subr.mxu0 0.0
        %2559 = vmatpush1.msra.mxu0 0.0
        %2560 = vmatprep.subr.mxu0 0.0
        %2561 = vmatpush1.msra.mxu0 0.0
        %2562 = vmatprep.subr.mxu0 0.0
        %2563 = vmatpush1.msra.mxu0 0.0
        %2564 = vmatprep.subr.mxu0 0.0
        %2565 = vmatpush1.msra.mxu0 0.0
        %2566 = vmatprep.subr.mxu0 0.0
        %2567 = vmatpush1.msra.mxu0 0.0
        %2568 = vmatprep.subr.mxu0 0.0
        %2569 = vmatpush1.msra.mxu0 0.0
        %2570 = vmatprep.subr.mxu0 0.0
        %2571 = vmatpush1.msra.mxu0 0.0
        %2572 = vmatprep.subr.mxu0 0.0
        %2573 = vmatpush1.msra.mxu0 0.0
        %2574 = vmatprep.subr.mxu0 0.0
        %2575 = vmatpush1.msra.mxu0 0.0
        %2576 = vmatprep.subr.mxu0 0.0
        %2577 = vmatpush1.msra.mxu0 0.0
        %2578 = vmatprep.subr.mxu0 0.0
        %2579 = vmatpush1.msra.mxu0 0.0
        %2580 = vmatprep.subr.mxu0 0.0
        %2581 = vmatpush1.msra.mxu0 0.0
        %2582 = vmatprep.subr.mxu0 0.0
        %2583 = vmatpush1.msra.mxu0 0.0
        %2584 = vmatprep.subr.mxu0 0.0
        %2585 = vmatpush1.msra.mxu0 0.0
        %2586 = vmatprep.subr.mxu0 0.0
        %2587 = vmatpush1.msra.mxu0 0.0
        %2588 = vmatprep.subr.mxu0 0.0
        %2589 = vmatpush1.msra.mxu0 0.0
        %2590 = vmatprep.subr.mxu0 0.0
        %2591 = vmatpush1.msra.mxu0 0.0
        %2592 = vmatprep.subr.mxu0 0.0
        %2593 = vmatpush1.msra.mxu0 0.0
        %2594 = vmatprep.subr.mxu0 0.0
        %2595 = vmatpush1.msra.mxu0 0.0
        %2596 = vmatprep.subr.mxu0 0.0
        %2597 = vmatpush1.msra.mxu0 0.0
        %2598 = vmatprep.subr.mxu0 0.0
        %2599 = vmatpush1.msra.mxu0 0.0
        %2600 = vmatprep.subr.mxu0 0.0
        %2601 = vmatpush1.msra.mxu0 0.0
        %2602 = vmatprep.subr.mxu0 0.0
        %2603 = vmatpush1.msra.mxu0 0.0
        %2604 = vmatprep.subr.mxu0 0.0
        %2605 = vmatpush1.msra.mxu0 0.0
        %2606 = vmatprep.subr.mxu0 0.0
        %2607 = vmatpush1.msra.mxu0 0.0
        %2608 = vmatprep.subr.mxu0 0.0
        %2609 = vmatpush1.msra.mxu0 0.0
        %2610 = vmatprep.mubr.f32.mxu0 0.0
        %2611 = vmatmul.mubr.f32.gmra.mrb[0].mxu0 %v2542
        %v2612 = vpop.f32.mrb[0].mxu0
        %v2613 = vadd.f32 %v2530, %v2612
        %v2614 = vpop.f32.mrb[0].mxu0
        %2615 = vmatprep.mubr.f32.mxu0 0.0
        %2616 = vmatmul.mubr.f32.gmra.mrb[0].mxu0 %v2544
        %v2617 = vpop.f32.mrb[0].mxu0
        %v2618 = vadd.f32 %v2535, %v2617
        %v2619 = vpop.f32.mrb[0].mxu0
        %2620 = vdwg.mxu0
        %2621 = vst.msk [vmem:[%s215 + $0x30] sm:$0xff] %vm533, %v2613
        %2623 = vrot.lane.b32.xlu0 %v2618, 32
        %v2624 = vpop.permute.xlu0 %2623
        %2626 = vst.msk [vmem:[%s215 + $0x30] sm:$0xff] %vm539, %v2624
        %2627 = vrot.lane.b32.xlu0 %v357, 48
        %v2628 = vpop.permute.xlu0 %2627
        %2629 = vrot.lane.b32.xlu0 %v363, 48
        %v2630 = vpop.permute.xlu0 %2629
        %v2631 = vsel %vm370, %v2628, 0
        %v2633 = vsel %vm370, %v2630, 0
        %2635 = vmatprep.subr.mxu0 0.0
        %2636 = vmatpush1.msra.mxu0 %v368
        %2637 = vmatprep.subr.mxu0 0.0
        %2638 = vmatpush1.msra.mxu0 %v369
        %2639 = vmatprep.subr.mxu0 0.0
        %2640 = vmatpush1.msra.mxu0 0.0
        %2641 = vmatprep.subr.mxu0 0.0
        %2642 = vmatpush1.msra.mxu0 0.0
        %2643 = vmatprep.subr.mxu0 0.0
        %2644 = vmatpush1.msra.mxu0 0.0
        %2645 = vmatprep.subr.mxu0 0.0
        %2646 = vmatpush1.msra.mxu0 0.0
        %2647 = vmatprep.subr.mxu0 0.0
        %2648 = vmatpush1.msra.mxu0 0.0
        %2649 = vmatprep.subr.mxu0 0.0
        %2650 = vmatpush1.msra.mxu0 0.0
        %2651 = vmatprep.subr.mxu0 0.0
        %2652 = vmatpush1.msra.mxu0 0.0
        %2653 = vmatprep.subr.mxu0 0.0
        %2654 = vmatpush1.msra.mxu0 0.0
        %2655 = vmatprep.subr.mxu0 0.0
        %2656 = vmatpush1.msra.mxu0 0.0
        %2657 = vmatprep.subr.mxu0 0.0
        %2658 = vmatpush1.msra.mxu0 0.0
        %2659 = vmatprep.subr.mxu0 0.0
        %2660 = vmatpush1.msra.mxu0 0.0
        %2661 = vmatprep.subr.mxu0 0.0
        %2662 = vmatpush1.msra.mxu0 0.0
        %2663 = vmatprep.subr.mxu0 0.0
        %2664 = vmatpush1.msra.mxu0 0.0
        %2665 = vmatprep.subr.mxu0 0.0
        %2666 = vmatpush1.msra.mxu0 0.0
        %2667 = vmatprep.subr.mxu0 0.0
        %2668 = vmatpush1.msra.mxu0 0.0
        %2669 = vmatprep.subr.mxu0 0.0
        %2670 = vmatpush1.msra.mxu0 0.0
        %2671 = vmatprep.subr.mxu0 0.0
        %2672 = vmatpush1.msra.mxu0 0.0
        %2673 = vmatprep.subr.mxu0 0.0
        %2674 = vmatpush1.msra.mxu0 0.0
        %2675 = vmatprep.subr.mxu0 0.0
        %2676 = vmatpush1.msra.mxu0 0.0
        %2677 = vmatprep.subr.mxu0 0.0
        %2678 = vmatpush1.msra.mxu0 0.0
        %2679 = vmatprep.subr.mxu0 0.0
        %2680 = vmatpush1.msra.mxu0 0.0
        %2681 = vmatprep.subr.mxu0 0.0
        %2682 = vmatpush1.msra.mxu0 0.0
        %2683 = vmatprep.subr.mxu0 0.0
        %2684 = vmatpush1.msra.mxu0 0.0
        %2685 = vmatprep.subr.mxu0 0.0
        %2686 = vmatpush1.msra.mxu0 0.0
        %2687 = vmatprep.subr.mxu0 0.0
        %2688 = vmatpush1.msra.mxu0 0.0
        %2689 = vmatprep.subr.mxu0 0.0
        %2690 = vmatpush1.msra.mxu0 0.0
        %2691 = vmatprep.subr.mxu0 0.0
        %2692 = vmatpush1.msra.mxu0 0.0
        %2693 = vmatprep.subr.mxu0 0.0
        %2694 = vmatpush1.msra.mxu0 0.0
        %2695 = vmatprep.subr.mxu0 0.0
        %2696 = vmatpush1.msra.mxu0 0.0
        %2697 = vmatprep.subr.mxu0 0.0
        %2698 = vmatpush1.msra.mxu0 0.0
        %2699 = vmatprep.mubr.f32.mxu0 0.0
        %2700 = vmatmul.mubr.f32.gmra.mrb[0].mxu0 %v2631
        %v2701 = vpop.f32.mrb[0].mxu0
        %v2702 = vadd.f32 0.0, %v2701
        %v2703 = vpop.f32.mrb[0].mxu0
        %2704 = vmatprep.mubr.f32.mxu0 0.0
        %2705 = vmatmul.mubr.f32.gmra.mrb[0].mxu0 %v2633
        %v2706 = vpop.f32.mrb[0].mxu0
        %v2707 = vadd.f32 0.0, %v2706
        %v2708 = vpop.f32.mrb[0].mxu0
        %2709 = vdwg.mxu0
        %2710 = vrot.lane.b32.xlu0 %v345, 48
        %v2711 = vpop.permute.xlu0 %2710
        %2712 = vrot.lane.b32.xlu0 %v351, 48
        %v2713 = vpop.permute.xlu0 %2712
        %v2714 = vsel %vm370, %v2711, 0
        %v2716 = vsel %vm370, %v2713, 0
        %2718 = vmatprep.subr.mxu0 0.0
        %2719 = vmatpush1.msra.mxu0 %v365
        %2720 = vmatprep.subr.mxu0 0.0
        %2721 = vmatpush1.msra.mxu0 %v366
        %2722 = vmatprep.subr.mxu0 0.0
        %2723 = vmatpush1.msra.mxu0 0.0
        %2724 = vmatprep.subr.mxu0 0.0
        %2725 = vmatpush1.msra.mxu0 0.0
        %2726 = vmatprep.subr.mxu0 0.0
        %2727 = vmatpush1.msra.mxu0 0.0
        %2728 = vmatprep.subr.mxu0 0.0
        %2729 = vmatpush1.msra.mxu0 0.0
        %2730 = vmatprep.subr.mxu0 0.0
        %2731 = vmatpush1.msra.mxu0 0.0
        %2732 = vmatprep.subr.mxu0 0.0
        %2733 = vmatpush1.msra.mxu0 0.0
        %2734 = vmatprep.subr.mxu0 0.0
        %2735 = vmatpush1.msra.mxu0 0.0
        %2736 = vmatprep.subr.mxu0 0.0
        %2737 = vmatpush1.msra.mxu0 0.0
        %2738 = vmatprep.subr.mxu0 0.0
        %2739 = vmatpush1.msra.mxu0 0.0
        %2740 = vmatprep.subr.mxu0 0.0
        %2741 = vmatpush1.msra.mxu0 0.0
        %2742 = vmatprep.subr.mxu0 0.0
        %2743 = vmatpush1.msra.mxu0 0.0
        %2744 = vmatprep.subr.mxu0 0.0
        %2745 = vmatpush1.msra.mxu0 0.0
        %2746 = vmatprep.subr.mxu0 0.0
        %2747 = vmatpush1.msra.mxu0 0.0
        %2748 = vmatprep.subr.mxu0 0.0
        %2749 = vmatpush1.msra.mxu0 0.0
        %2750 = vmatprep.subr.mxu0 0.0
        %2751 = vmatpush1.msra.mxu0 0.0
        %2752 = vmatprep.subr.mxu0 0.0
        %2753 = vmatpush1.msra.mxu0 0.0
        %2754 = vmatprep.subr.mxu0 0.0
        %2755 = vmatpush1.msra.mxu0 0.0
        %2756 = vmatprep.subr.mxu0 0.0
        %2757 = vmatpush1.msra.mxu0 0.0
        %2758 = vmatprep.subr.mxu0 0.0
        %2759 = vmatpush1.msra.mxu0 0.0
        %2760 = vmatprep.subr.mxu0 0.0
        %2761 = vmatpush1.msra.mxu0 0.0
        %2762 = vmatprep.subr.mxu0 0.0
        %2763 = vmatpush1.msra.mxu0 0.0
        %2764 = vmatprep.subr.mxu0 0.0
        %2765 = vmatpush1.msra.mxu0 0.0
        %2766 = vmatprep.subr.mxu0 0.0
        %2767 = vmatpush1.msra.mxu0 0.0
        %2768 = vmatprep.subr.mxu0 0.0
        %2769 = vmatpush1.msra.mxu0 0.0
        %2770 = vmatprep.subr.mxu0 0.0
        %2771 = vmatpush1.msra.mxu0 0.0
        %2772 = vmatprep.subr.mxu0 0.0
        %2773 = vmatpush1.msra.mxu0 0.0
        %2774 = vmatprep.subr.mxu0 0.0
        %2775 = vmatpush1.msra.mxu0 0.0
        %2776 = vmatprep.subr.mxu0 0.0
        %2777 = vmatpush1.msra.mxu0 0.0
        %2778 = vmatprep.subr.mxu0 0.0
        %2779 = vmatpush1.msra.mxu0 0.0
        %2780 = vmatprep.subr.mxu0 0.0
        %2781 = vmatpush1.msra.mxu0 0.0
        %2782 = vmatprep.mubr.f32.mxu0 0.0
        %2783 = vmatmul.mubr.f32.gmra.mrb[0].mxu0 %v2714
        %v2784 = vpop.f32.mrb[0].mxu0
        %v2785 = vadd.f32 %v2702, %v2784
        %v2786 = vpop.f32.mrb[0].mxu0
        %2787 = vmatprep.mubr.f32.mxu0 0.0
        %2788 = vmatmul.mubr.f32.gmra.mrb[0].mxu0 %v2716
        %v2789 = vpop.f32.mrb[0].mxu0
        %v2790 = vadd.f32 %v2707, %v2789
        %v2791 = vpop.f32.mrb[0].mxu0
        %2792 = vdwg.mxu0
        %2794 = vrot.lane.b32.xlu0 %v2785, 64
        %v2795 = vpop.permute.xlu0 %2794
        %2797 = vst.msk [vmem:[%s215 + $0x30] sm:$0xff] %vm711, %v2795
        %2799 = vrot.lane.b32.xlu0 %v2790, 96
        %v2800 = vpop.permute.xlu0 %2799
        %2802 = vst.msk [vmem:[%s215 + $0x30] sm:$0xff] %vm717, %v2800
        %2803 = vrot.lane.b32.xlu0 %v357, 32
        %v2804 = vpop.permute.xlu0 %2803
        %2805 = vrot.lane.b32.xlu0 %v363, 32
        %v2806 = vpop.permute.xlu0 %2805
        %v2807 = vsel %vm370, %v2804, 0
        %v2809 = vsel %vm370, %v2806, 0
        %2811 = vmatprep.subr.mxu0 0.0
        %2812 = vmatpush1.msra.mxu0 %v368
        %2813 = vmatprep.subr.mxu0 0.0
        %2814 = vmatpush1.msra.mxu0 %v369
        %2815 = vmatprep.subr.mxu0 0.0
        %2816 = vmatpush1.msra.mxu0 0.0
        %2817 = vmatprep.subr.mxu0 0.0
        %2818 = vmatpush1.msra.mxu0 0.0
        %2819 = vmatprep.subr.mxu0 0.0
        %2820 = vmatpush1.msra.mxu0 0.0
        %2821 = vmatprep.subr.mxu0 0.0
        %2822 = vmatpush1.msra.mxu0 0.0
        %2823 = vmatprep.subr.mxu0 0.0
        %2824 = vmatpush1.msra.mxu0 0.0
        %2825 = vmatprep.subr.mxu0 0.0
        %2826 = vmatpush1.msra.mxu0 0.0
        %2827 = vmatprep.subr.mxu0 0.0
        %2828 = vmatpush1.msra.mxu0 0.0
        %2829 = vmatprep.subr.mxu0 0.0
        %2830 = vmatpush1.msra.mxu0 0.0
        %2831 = vmatprep.subr.mxu0 0.0
        %2832 = vmatpush1.msra.mxu0 0.0
        %2833 = vmatprep.subr.mxu0 0.0
        %2834 = vmatpush1.msra.mxu0 0.0
        %2835 = vmatprep.subr.mxu0 0.0
        %2836 = vmatpush1.msra.mxu0 0.0
        %2837 = vmatprep.subr.mxu0 0.0
        %2838 = vmatpush1.msra.mxu0 0.0
        %2839 = vmatprep.subr.mxu0 0.0
        %2840 = vmatpush1.msra.mxu0 0.0
        %2841 = vmatprep.subr.mxu0 0.0
        %2842 = vmatpush1.msra.mxu0 0.0
        %2843 = vmatprep.subr.mxu0 0.0
        %2844 = vmatpush1.msra.mxu0 0.0
        %2845 = vmatprep.subr.mxu0 0.0
        %2846 = vmatpush1.msra.mxu0 0.0
        %2847 = vmatprep.subr.mxu0 0.0
        %2848 = vmatpush1.msra.mxu0 0.0
        %2849 = vmatprep.subr.mxu0 0.0
        %2850 = vmatpush1.msra.mxu0 0.0
        %2851 = vmatprep.subr.mxu0 0.0
        %2852 = vmatpush1.msra.mxu0 0.0
        %2853 = vmatprep.subr.mxu0 0.0
        %2854 = vmatpush1.msra.mxu0 0.0
        %2855 = vmatprep.subr.mxu0 0.0
        %2856 = vmatpush1.msra.mxu0 0.0
        %2857 = vmatprep.subr.mxu0 0.0
        %2858 = vmatpush1.msra.mxu0 0.0
        %2859 = vmatprep.subr.mxu0 0.0
        %2860 = vmatpush1.msra.mxu0 0.0
        %2861 = vmatprep.subr.mxu0 0.0
        %2862 = vmatpush1.msra.mxu0 0.0
        %2863 = vmatprep.subr.mxu0 0.0
        %2864 = vmatpush1.msra.mxu0 0.0
        %2865 = vmatprep.subr.mxu0 0.0
        %2866 = vmatpush1.msra.mxu0 0.0
        %2867 = vmatprep.subr.mxu0 0.0
        %2868 = vmatpush1.msra.mxu0 0.0
        %2869 = vmatprep.subr.mxu0 0.0
        %2870 = vmatpush1.msra.mxu0 0.0
        %2871 = vmatprep.subr.mxu0 0.0
        %2872 = vmatpush1.msra.mxu0 0.0
        %2873 = vmatprep.subr.mxu0 0.0
        %2874 = vmatpush1.msra.mxu0 0.0
        %2875 = vmatprep.mubr.f32.mxu0 0.0
        %2876 = vmatmul.mubr.f32.gmra.mrb[0].mxu0 %v2807
        %v2877 = vpop.f32.mrb[0].mxu0
        %v2878 = vadd.f32 0.0, %v2877
        %v2879 = vpop.f32.mrb[0].mxu0
        %2880 = vmatprep.mubr.f32.mxu0 0.0
        %2881 = vmatmul.mubr.f32.gmra.mrb[0].mxu0 %v2809
        %v2882 = vpop.f32.mrb[0].mxu0
        %v2883 = vadd.f32 0.0, %v2882
        %v2884 = vpop.f32.mrb[0].mxu0
        %2885 = vdwg.mxu0
        %2886 = vrot.lane.b32.xlu0 %v345, 32
        %v2887 = vpop.permute.xlu0 %2886
        %2888 = vrot.lane.b32.xlu0 %v351, 32
        %v2889 = vpop.permute.xlu0 %2888
        %v2890 = vsel %vm370, %v2887, 0
        %v2892 = vsel %vm370, %v2889, 0
        %2894 = vmatprep.subr.mxu0 0.0
        %2895 = vmatpush1.msra.mxu0 %v365
        %2896 = vmatprep.subr.mxu0 0.0
        %2897 = vmatpush1.msra.mxu0 %v366
        %2898 = vmatprep.subr.mxu0 0.0
        %2899 = vmatpush1.msra.mxu0 0.0
        %2900 = vmatprep.subr.mxu0 0.0
        %2901 = vmatpush1.msra.mxu0 0.0
        %2902 = vmatprep.subr.mxu0 0.0
        %2903 = vmatpush1.msra.mxu0 0.0
        %2904 = vmatprep.subr.mxu0 0.0
        %2905 = vmatpush1.msra.mxu0 0.0
        %2906 = vmatprep.subr.mxu0 0.0
        %2907 = vmatpush1.msra.mxu0 0.0
        %2908 = vmatprep.subr.mxu0 0.0
        %2909 = vmatpush1.msra.mxu0 0.0
        %2910 = vmatprep.subr.mxu0 0.0
        %2911 = vmatpush1.msra.mxu0 0.0
        %2912 = vmatprep.subr.mxu0 0.0
        %2913 = vmatpush1.msra.mxu0 0.0
        %2914 = vmatprep.subr.mxu0 0.0
        %2915 = vmatpush1.msra.mxu0 0.0
        %2916 = vmatprep.subr.mxu0 0.0
        %2917 = vmatpush1.msra.mxu0 0.0
        %2918 = vmatprep.subr.mxu0 0.0
        %2919 = vmatpush1.msra.mxu0 0.0
        %2920 = vmatprep.subr.mxu0 0.0
        %2921 = vmatpush1.msra.mxu0 0.0
        %2922 = vmatprep.subr.mxu0 0.0
        %2923 = vmatpush1.msra.mxu0 0.0
        %2924 = vmatprep.subr.mxu0 0.0
        %2925 = vmatpush1.msra.mxu0 0.0
        %2926 = vmatprep.subr.mxu0 0.0
        %2927 = vmatpush1.msra.mxu0 0.0
        %2928 = vmatprep.subr.mxu0 0.0
        %2929 = vmatpush1.msra.mxu0 0.0
        %2930 = vmatprep.subr.mxu0 0.0
        %2931 = vmatpush1.msra.mxu0 0.0
        %2932 = vmatprep.subr.mxu0 0.0
        %2933 = vmatpush1.msra.mxu0 0.0
        %2934 = vmatprep.subr.mxu0 0.0
        %2935 = vmatpush1.msra.mxu0 0.0
        %2936 = vmatprep.subr.mxu0 0.0
        %2937 = vmatpush1.msra.mxu0 0.0
        %2938 = vmatprep.subr.mxu0 0.0
        %2939 = vmatpush1.msra.mxu0 0.0
        %2940 = vmatprep.subr.mxu0 0.0
        %2941 = vmatpush1.msra.mxu0 0.0
        %2942 = vmatprep.subr.mxu0 0.0
        %2943 = vmatpush1.msra.mxu0 0.0
        %2944 = vmatprep.subr.mxu0 0.0
        %2945 = vmatpush1.msra.mxu0 0.0
        %2946 = vmatprep.subr.mxu0 0.0
        %2947 = vmatpush1.msra.mxu0 0.0
        %2948 = vmatprep.subr.mxu0 0.0
        %2949 = vmatpush1.msra.mxu0 0.0
        %2950 = vmatprep.subr.mxu0 0.0
        %2951 = vmatpush1.msra.mxu0 0.0
        %2952 = vmatprep.subr.mxu0 0.0
        %2953 = vmatpush1.msra.mxu0 0.0
        %2954 = vmatprep.subr.mxu0 0.0
        %2955 = vmatpush1.msra.mxu0 0.0
        %2956 = vmatprep.subr.mxu0 0.0
        %2957 = vmatpush1.msra.mxu0 0.0
        %2958 = vmatprep.mubr.f32.mxu0 0.0
        %2959 = vmatmul.mubr.f32.gmra.mrb[0].mxu0 %v2890
        %v2960 = vpop.f32.mrb[0].mxu0
        %v2961 = vadd.f32 %v2878, %v2960
        %v2962 = vpop.f32.mrb[0].mxu0
        %2963 = vmatprep.mubr.f32.mxu0 0.0
        %2964 = vmatmul.mubr.f32.gmra.mrb[0].mxu0 %v2892
        %v2965 = vpop.f32.mrb[0].mxu0
        %v2966 = vadd.f32 %v2883, %v2965
        %v2967 = vpop.f32.mrb[0].mxu0
        %2968 = vdwg.mxu0
        %2969 = vst.msk [vmem:[%s215 + $0x38] sm:$0xff] %vm533, %v2961
        %2971 = vrot.lane.b32.xlu0 %v2966, 32
        %v2972 = vpop.permute.xlu0 %2971
        %2974 = vst.msk [vmem:[%s215 + $0x38] sm:$0xff] %vm539, %v2972
        %2975 = vrot.lane.b32.xlu0 %v357, 16
        %v2976 = vpop.permute.xlu0 %2975
        %2977 = vrot.lane.b32.xlu0 %v363, 16
        %v2978 = vpop.permute.xlu0 %2977
        %v2979 = vsel %vm370, %v2976, 0
        %v2981 = vsel %vm370, %v2978, 0
        %2983 = vmatprep.subr.mxu0 0.0
        %2984 = vmatpush1.msra.mxu0 %v368
        %2985 = vmatprep.subr.mxu0 0.0
        %2986 = vmatpush1.msra.mxu0 %v369
        %2987 = vmatprep.subr.mxu0 0.0
        %2988 = vmatpush1.msra.mxu0 0.0
        %2989 = vmatprep.subr.mxu0 0.0
        %2990 = vmatpush1.msra.mxu0 0.0
        %2991 = vmatprep.subr.mxu0 0.0
        %2992 = vmatpush1.msra.mxu0 0.0
        %2993 = vmatprep.subr.mxu0 0.0
        %2994 = vmatpush1.msra.mxu0 0.0
        %2995 = vmatprep.subr.mxu0 0.0
        %2996 = vmatpush1.msra.mxu0 0.0
        %2997 = vmatprep.subr.mxu0 0.0
        %2998 = vmatpush1.msra.mxu0 0.0
        %2999 = vmatprep.subr.mxu0 0.0
        %3000 = vmatpush1.msra.mxu0 0.0
        %3001 = vmatprep.subr.mxu0 0.0
        %3002 = vmatpush1.msra.mxu0 0.0
        %3003 = vmatprep.subr.mxu0 0.0
        %3004 = vmatpush1.msra.mxu0 0.0
        %3005 = vmatprep.subr.mxu0 0.0
        %3006 = vmatpush1.msra.mxu0 0.0
        %3007 = vmatprep.subr.mxu0 0.0
        %3008 = vmatpush1.msra.mxu0 0.0
        %3009 = vmatprep.subr.mxu0 0.0
        %3010 = vmatpush1.msra.mxu0 0.0
        %3011 = vmatprep.subr.mxu0 0.0
        %3012 = vmatpush1.msra.mxu0 0.0
        %3013 = vmatprep.subr.mxu0 0.0
        %3014 = vmatpush1.msra.mxu0 0.0
        %3015 = vmatprep.subr.mxu0 0.0
        %3016 = vmatpush1.msra.mxu0 0.0
        %3017 = vmatprep.subr.mxu0 0.0
        %3018 = vmatpush1.msra.mxu0 0.0
        %3019 = vmatprep.subr.mxu0 0.0
        %3020 = vmatpush1.msra.mxu0 0.0
        %3021 = vmatprep.subr.mxu0 0.0
        %3022 = vmatpush1.msra.mxu0 0.0
        %3023 = vmatprep.subr.mxu0 0.0
        %3024 = vmatpush1.msra.mxu0 0.0
        %3025 = vmatprep.subr.mxu0 0.0
        %3026 = vmatpush1.msra.mxu0 0.0
        %3027 = vmatprep.subr.mxu0 0.0
        %3028 = vmatpush1.msra.mxu0 0.0
        %3029 = vmatprep.subr.mxu0 0.0
        %3030 = vmatpush1.msra.mxu0 0.0
        %3031 = vmatprep.subr.mxu0 0.0
        %3032 = vmatpush1.msra.mxu0 0.0
        %3033 = vmatprep.subr.mxu0 0.0
        %3034 = vmatpush1.msra.mxu0 0.0
        %3035 = vmatprep.subr.mxu0 0.0
        %3036 = vmatpush1.msra.mxu0 0.0
        %3037 = vmatprep.subr.mxu0 0.0
        %3038 = vmatpush1.msra.mxu0 0.0
        %3039 = vmatprep.subr.mxu0 0.0
        %3040 = vmatpush1.msra.mxu0 0.0
        %3041 = vmatprep.subr.mxu0 0.0
        %3042 = vmatpush1.msra.mxu0 0.0
        %3043 = vmatprep.subr.mxu0 0.0
        %3044 = vmatpush1.msra.mxu0 0.0
        %3045 = vmatprep.subr.mxu0 0.0
        %3046 = vmatpush1.msra.mxu0 0.0
        %3047 = vmatprep.mubr.f32.mxu0 0.0
        %3048 = vmatmul.mubr.f32.gmra.mrb[0].mxu0 %v2979
        %v3049 = vpop.f32.mrb[0].mxu0
        %v3050 = vadd.f32 0.0, %v3049
        %v3051 = vpop.f32.mrb[0].mxu0
        %3052 = vmatprep.mubr.f32.mxu0 0.0
        %3053 = vmatmul.mubr.f32.gmra.mrb[0].mxu0 %v2981
        %v3054 = vpop.f32.mrb[0].mxu0
        %v3055 = vadd.f32 0.0, %v3054
        %v3056 = vpop.f32.mrb[0].mxu0
        %3057 = vdwg.mxu0
        %3058 = vrot.lane.b32.xlu0 %v345, 16
        %v3059 = vpop.permute.xlu0 %3058
        %3060 = vrot.lane.b32.xlu0 %v351, 16
        %v3061 = vpop.permute.xlu0 %3060
        %v3062 = vsel %vm370, %v3059, 0
        %v3064 = vsel %vm370, %v3061, 0
        %3066 = vmatprep.subr.mxu0 0.0
        %3067 = vmatpush1.msra.mxu0 %v365
        %3068 = vmatprep.subr.mxu0 0.0
        %3069 = vmatpush1.msra.mxu0 %v366
        %3070 = vmatprep.subr.mxu0 0.0
        %3071 = vmatpush1.msra.mxu0 0.0
        %3072 = vmatprep.subr.mxu0 0.0
        %3073 = vmatpush1.msra.mxu0 0.0
        %3074 = vmatprep.subr.mxu0 0.0
        %3075 = vmatpush1.msra.mxu0 0.0
        %3076 = vmatprep.subr.mxu0 0.0
        %3077 = vmatpush1.msra.mxu0 0.0
        %3078 = vmatprep.subr.mxu0 0.0
        %3079 = vmatpush1.msra.mxu0 0.0
        %3080 = vmatprep.subr.mxu0 0.0
        %3081 = vmatpush1.msra.mxu0 0.0
        %3082 = vmatprep.subr.mxu0 0.0
        %3083 = vmatpush1.msra.mxu0 0.0
        %3084 = vmatprep.subr.mxu0 0.0
        %3085 = vmatpush1.msra.mxu0 0.0
        %3086 = vmatprep.subr.mxu0 0.0
        %3087 = vmatpush1.msra.mxu0 0.0
        %3088 = vmatprep.subr.mxu0 0.0
        %3089 = vmatpush1.msra.mxu0 0.0
        %3090 = vmatprep.subr.mxu0 0.0
        %3091 = vmatpush1.msra.mxu0 0.0
        %3092 = vmatprep.subr.mxu0 0.0
        %3093 = vmatpush1.msra.mxu0 0.0
        %3094 = vmatprep.subr.mxu0 0.0
        %3095 = vmatpush1.msra.mxu0 0.0
        %3096 = vmatprep.subr.mxu0 0.0
        %3097 = vmatpush1.msra.mxu0 0.0
        %3098 = vmatprep.subr.mxu0 0.0
        %3099 = vmatpush1.msra.mxu0 0.0
        %3100 = vmatprep.subr.mxu0 0.0
        %3101 = vmatpush1.msra.mxu0 0.0
        %3102 = vmatprep.subr.mxu0 0.0
        %3103 = vmatpush1.msra.mxu0 0.0
        %3104 = vmatprep.subr.mxu0 0.0
        %3105 = vmatpush1.msra.mxu0 0.0
        %3106 = vmatprep.subr.mxu0 0.0
        %3107 = vmatpush1.msra.mxu0 0.0
        %3108 = vmatprep.subr.mxu0 0.0
        %3109 = vmatpush1.msra.mxu0 0.0
        %3110 = vmatprep.subr.mxu0 0.0
        %3111 = vmatpush1.msra.mxu0 0.0
        %3112 = vmatprep.subr.mxu0 0.0
        %3113 = vmatpush1.msra.mxu0 0.0
        %3114 = vmatprep.subr.mxu0 0.0
        %3115 = vmatpush1.msra.mxu0 0.0
        %3116 = vmatprep.subr.mxu0 0.0
        %3117 = vmatpush1.msra.mxu0 0.0
        %3118 = vmatprep.subr.mxu0 0.0
        %3119 = vmatpush1.msra.mxu0 0.0
        %3120 = vmatprep.subr.mxu0 0.0
        %3121 = vmatpush1.msra.mxu0 0.0
        %3122 = vmatprep.subr.mxu0 0.0
        %3123 = vmatpush1.msra.mxu0 0.0
        %3124 = vmatprep.subr.mxu0 0.0
        %3125 = vmatpush1.msra.mxu0 0.0
        %3126 = vmatprep.subr.mxu0 0.0
        %3127 = vmatpush1.msra.mxu0 0.0
        %3128 = vmatprep.subr.mxu0 0.0
        %3129 = vmatpush1.msra.mxu0 0.0
        %3130 = vmatprep.mubr.f32.mxu0 0.0
        %3131 = vmatmul.mubr.f32.gmra.mrb[0].mxu0 %v3062
        %v3132 = vpop.f32.mrb[0].mxu0
        %v3133 = vadd.f32 %v3050, %v3132
        %v3134 = vpop.f32.mrb[0].mxu0
        %3135 = vmatprep.mubr.f32.mxu0 0.0
        %3136 = vmatmul.mubr.f32.gmra.mrb[0].mxu0 %v3064
        %v3137 = vpop.f32.mrb[0].mxu0
        %v3138 = vadd.f32 %v3055, %v3137
        %v3139 = vpop.f32.mrb[0].mxu0
        %3140 = vdwg.mxu0
        %3142 = vrot.lane.b32.xlu0 %v3133, 64
        %v3143 = vpop.permute.xlu0 %3142
        %3145 = vst.msk [vmem:[%s215 + $0x38] sm:$0xff] %vm711, %v3143
        %3147 = vrot.lane.b32.xlu0 %v3138, 96
        %v3148 = vpop.permute.xlu0 %3147
        %3150 = vst.msk [vmem:[%s215 + $0x38] sm:$0xff] %vm717, %v3148
        %s3151 = sand.u32 %s131, 1
        %s3152 = scalar_lea.sflag [#allocation3], %s3151
        %s3153 = sand.u32 %s131, 1
        %s3154 = smul.addr %s3153, 64
        %s3155 = scalar_lea.vmem [#allocation2], %s3154
        // Predicated region
        $region37: #{tpu_custom_call.1} parent=35 // pred_check
          %p3156 = pneg %p141
        $region38: #{tpu_custom_call.1} parent=35 // pred_check_branch
          %3158 = sbr.rel (%p3156) target = $region40
        $region39: #{tpu_custom_call.1} parent=35 // pred_region
          %s3159 = smul.u32 8, %s23
          %s3161 = ssub.s32 1024, 1024
          %3162 = vsyncadd %s3152, %s3161
          %s3163 = smul.addr %s22, 8
          %s3164 = sadd.s32 %s3159, %s3163
          %s3165 = smul.addr %s3164, 128
          %s3166 = scalar_lea.hbm %s4, %s3165
          %s3168 = sshll.u32 %s3155, 4
          %s3169 = int_to_ptr.vmem [resolvable:$true] %s3168
          %3171 = dma.vmem_to_hbm [thread:$0]  %s3169, 1024, %s3166, %s3152
        $region40: #{tpu_custom_call.1} parent=35 // pred_fallthru
          _
      $region36: #{tpu_custom_call.1} parent=5 // pred_fallthru
        _
      %p3172 = scmp.le.s32.totalorder 2, %s13
      // Predicated region
      $region41: #{tpu_custom_call.1} parent=5 // pred_check
        %p3173 = pneg %p3172
      $region42: #{tpu_custom_call.1} parent=5 // pred_check_branch
        %3175 = sbr.rel (%p3173) target = $region44
      $region43: #{tpu_custom_call.1} parent=5 // pred_region
        %s3176 = ssub.s32 %s13, 2
        // Predicated region
        $region45: #{tpu_custom_call.1} parent=43 // pred_check
          %p3177 = pneg %p147
        $region46: #{tpu_custom_call.1} parent=43 // pred_check_branch
          %3179 = sbr.rel (%p3177) target = $region48
        $region47: #{tpu_custom_call.1} parent=43 // pred_region
          %s3180 = sand.u32 %s132, 1
          %s3181 = scalar_lea.sflag [#allocation3], %s3180
          %s3182 = sand.u32 %s132, 1
          %s3183 = smul.addr %s3182, 64
          %s3184 = scalar_lea.vmem [#allocation2], %s3183
          %3185 = dma.done %s3181, 1024
        $region48: #{tpu_custom_call.1} parent=43 // pred_fallthru
          _
      $region44: #{tpu_custom_call.1} parent=5 // pred_fallthru
        _
    $region6: #{tpu_custom_call.1} parent=1 // loop_footer
      %s17 = sadd.s32 1, %s13
    $region7: #{tpu_custom_call.1} parent=1 // loop_footer_branch
      %12 = sbr.rel target = $region3
    $region8: #{tpu_custom_call.1} parent=1 // loop_exit
      _
    %3186 = vsyncpa [#allocation3], 1
    %s3187 = scalar_lea.sflag [#allocation3], 1
    %3188 = vsyncpa %s3187, 1

</llo_original>
